<compile_context>
chip_gen: v6e
topology: v6e:2x2x1
jax: 0.10.0
libtpu: 0.0.40
codegen_flags: <defaults>
</compile_context>

<pallas_src>
import functools
import math

import jax
import jax.numpy as jnp
from jax.experimental import pallas as pl
from jax.experimental.pallas import tpu as pltpu

NORM_EPS = 1e-5
LANE = 128


def _round_up(x, m):
    return ((x + m - 1) // m) * m


def _silu(x):
    return x * jax.nn.sigmoid(x)


def _layernorm(x, w, b, eps=NORM_EPS):
    mean = jnp.mean(x, axis=-1, keepdims=True)
    var = jnp.mean(jnp.square(x - mean), axis=-1, keepdims=True)
    return (x - mean) * jax.lax.rsqrt(var + eps) * w + b


def _layernorm_padded(x, w, b, d_real, eps=NORM_EPS):
    """LayerNorm over the last dim where lanes >= d_real are zero padding."""
    mean = jnp.sum(x, axis=-1, keepdims=True) / d_real
    var = jnp.maximum(jnp.sum(x * x, axis=-1, keepdims=True) / d_real - mean * mean,
                      0.0)
    return (x - mean) * jax.lax.rsqrt(var + eps) * w + b


def _pick_cl(L):
    cl = 8
    while cl > 1 and L % cl:
        cl //= 2
    return cl


def _pick_dc(Dip, Bb):
    # Cap the Di chunk so the hoisted (Bb, CL, N, DC) temps stay near the 64-vreg
    # register file instead of spilling (perf-review item).
    dc = min(Dip, 128)
    while dc > 32 and Bb * dc > 256:
        dc //= 2
    while Dip % dc:
        dc //= 2
    return max(dc, 1)


# ----------------------------------------------------------------------------
# Fused backbone kernel: grid = (batch_blocks, n_layers)
# ----------------------------------------------------------------------------
def fused_backbone_kernel(hid_ref, ln_w_ref, ln_b_ref, in_w_ref, conv_w_ref,
                          conv_b_ref, xp_w_ref, dt_w_ref, dt_b_ref, A_ref,
                          Dsk_ref, out_w_ref, fn_w_ref, fn_b_ref, out_ref,
                          hid_sc, res_sc, xpad_sc, xp_sc, y_sc, *, d_real):
    layer = pl.program_id(1)
    n_layers = pl.num_programs(1)
    Bb, L, Dp = hid_ref.shape
    d_conv, Dip = conv_w_ref.shape
    N = A_ref.shape[0]
    dt_rank = dt_w_ref.shape[0]
    P = xp_sc.shape[-1]
    CL = _pick_cl(L)
    DC = _pick_dc(Dip, Bb)
    bf16 = jnp.bfloat16

    # ---- residual carry + pre-LayerNorm (layer 0 initializes VMEM carries) --------
    @pl.when(layer == 0)
    def _init():
        hid_sc[...] = hid_ref[...]
        res_sc[...] = jnp.zeros(res_sc.shape, jnp.float32)
        if d_conv > 1:  # conv-pad head zeros written once; never overwritten later
            xpad_sc[:, :d_conv - 1, :] = jnp.zeros((Bb, d_conv - 1, Dip), jnp.float32)

    res_new = hid_sc[...] + res_sc[...]                       # (Bb, L, Dp)
    res_sc[...] = res_new
    normed = _layernorm_padded(res_new, ln_w_ref[...], ln_b_ref[...], d_real)

    # ---- in_proj -> (x, z): bf16 MXU matmul ----------------------------------------
    xz = jnp.dot(normed.reshape(Bb * L, Dp).astype(bf16), in_w_ref[...],
                 preferred_element_type=jnp.float32).reshape(Bb, L, 2 * Dip)
    x = xz[:, :, :Dip]
    z = xz[:, :, Dip:]

    # ---- depthwise causal conv1d ----------------------------------------------------
    # TODO(synk): replace the sublane-unaligned tap reads with pltpu.roll + head mask
    #             (XLU slot) once roll direction is validated on-device.
    xpad_sc[:, d_conv - 1:, :] = x
    cw = conv_w_ref[...]                                      # (d_conv, Dip), f32
    xc = cw[d_conv - 1:d_conv, :] * x                         # last tap == x itself
    for k in range(d_conv - 1):
        xc = xc + cw[k:k + 1, :] * xpad_sc[:, k:k + L, :]
    xc = _silu(xc + conv_b_ref[...])                          # (Bb, L, Dip)

    # ---- low-rank x_proj -> lane-padded slab [dt_low | B | C | 0...] ----------------
    xp_sc[...] = jnp.dot(xc.reshape(Bb * L, Dip).astype(bf16), xp_w_ref[...],
                         preferred_element_type=jnp.float32).reshape(Bb, L, P)

    # y_sc holds xc; each scan chunk reads it and overwrites with the scan output.
    y_sc[...] = xc

    # ---- selective scan: Bb chains interleaved, C-reduction off the serial path -----
    A = A_ref[...]                                            # (N, Dip)
    dt_w = dt_w_ref[...]                                      # (dt_rank, Dip) bf16
    dt_b = dt_b_ref[...]                                      # (1, Dip)
    Dsk = Dsk_ref[...]                                        # (1, Dip)
    n_lchunks = L // CL

    for d0 in range(0, Dip, DC):                              # static Di chunking
        dsl = slice(d0, d0 + DC)
        A_c = A[:, dsl]                                       # (N, DC)
        dtw_c = dt_w[:, dsl]                                  # (dt_rank, DC)
        dtb_c = dt_b[:, dsl]                                  # (1, DC)
        dsk_c = Dsk[:, dsl]                                   # (1, DC)

        def chunk_body(c, h, dsl=dsl, A_c=A_c, dtw_c=dtw_c, dtb_c=dtb_c, dsk_c=dsk_c):
            r0 = pl.multiple_of(c * CL, CL)
            xp_blk = xp_sc[:, pl.ds(r0, CL), :]               # (Bb, CL, P)
            dt_low = xp_blk[:, :, :dt_rank]                   # (Bb, CL, R)
            b_blk = xp_blk[:, :, dt_rank:dt_rank + N]         # (Bb, CL, N)
            c_blk = xp_blk[:, :, dt_rank + N:dt_rank + 2 * N] # (Bb, CL, N)
            xc_blk = y_sc[:, pl.ds(r0, CL), dsl]              # (Bb, CL, DC)

            # dt_proj (un-folded, low rank) computed per chunk -- no dt/dtx scratch.
            if dt_rank >= 16:
                dt_raw = jnp.dot(dt_low.reshape(Bb * CL, dt_rank).astype(bf16),
                                 dtw_c, preferred_element_type=jnp.float32
                                 ).reshape(Bb, CL, DC)
            else:  # degenerate K: VPU broadcast-MAC avoids a tiny-K MXU matmul
                dtw32 = dtw_c.astype(jnp.float32)
                dt_raw = jnp.zeros((Bb, CL, DC), jnp.float32)
                for r in range(dt_rank):
                    dt_raw = dt_raw + dt_low[:, :, r:r + 1] * dtw32[r:r + 1, :]
            dt_blk = jax.nn.softplus(dt_raw + dtb_c)          # (Bb, CL, DC)

            # Bulk per-chunk work (off the serial path): exp + broadcasts.
            dA = jnp.exp(dt_blk[:, :, None, :] * A_c[None, None, :, :])    # (Bb,CL,N,DC)
            dBx = b_blk[:, :, :, None] * (dt_blk * xc_blk)[:, :, None, :]  # (Bb,CL,N,DC)

            hs = []
            for i in range(CL):            # serial path: mul + add only, Bb chains wide
                h = dA[:, i] * h + dBx[:, i]                  # (Bb, N, DC)
                hs.append(h)
            hstk = jnp.stack(hs, axis=1)                      # (Bb, CL, N, DC)
            y_blk = jnp.sum(hstk * c_blk[:, :, :, None], axis=2)  # (Bb, CL, DC)
            y_sc[:, pl.ds(r0, CL), dsl] = y_blk + dsk_c * xc_blk   # D-skip folded here
            return h

        jax.lax.fori_loop(0, n_lchunks, chunk_body,
                          jnp.zeros((Bb, N, DC), jnp.float32))

    # ---- SiLU gate + out_proj --------------------------------------------------------
    y = y_sc[...] * _silu(z)                                  # (Bb, L, Dip)
    hid_new = jnp.dot(y.reshape(Bb * L, Dip).astype(bf16), out_w_ref[...],
                      preferred_element_type=jnp.float32).reshape(Bb, L, Dp)
    hid_sc[...] = hid_new

    # ---- final add + LayerNorm folded into the last layer step ------------------------
    @pl.when(layer == n_layers - 1)
    def _final():
        out_ref[...] = _layernorm_padded(hid_new + res_new, fn_w_ref[...],
                                         fn_b_ref[...], d_real)


# ----------------------------------------------------------------------------
# Weight prep: stack over layers, pad to 128-lane multiples, bf16 MXU weights
# ----------------------------------------------------------------------------
_W_ORDER = ("ln_w", "ln_b", "in_w", "conv_w", "conv_b", "x_w", "dt_w", "dt_b",
            "A_t", "D", "out_w")


def _pad_last(a, n):
    pad = n - a.shape[-1]
    if pad == 0:
        return a
    return jnp.pad(a, [(0, 0)] * (a.ndim - 1) + [(0, pad)])


def _pad_dim(a, axis, n):
    pad = n - a.shape[axis]
    if pad == 0:
        return a
    cfg = [(0, 0)] * a.ndim
    cfg[axis] = (0, pad)
    return jnp.pad(a, cfg)


def prep_params(params):
    layers = params["layers"]
    p0 = layers[0]
    D = params["emb"].shape[1]
    d_conv, Di = p0["conv_w"].shape
    N = p0["A"].shape[1]
    dt_rank = p0["dt_w"].shape[0]
    Dp = _round_up(D, LANE)
    Dip = _round_up(Di, LANE)
    P = _round_up(dt_rank + 2 * N, LANE)
    bf16 = jnp.bfloat16

    def stack(f):
        return jnp.stack([f(lp) for lp in layers], axis=0)

    def pad_in_w(p):   # (D, 2Di) -> (Dp, 2Dip): keep the x|z column split lane-aligned
        wx = _pad_last(p["in_w"][:, :Di], Dip)
        wz = _pad_last(p["in_w"][:, Di:], Dip)
        return _pad_dim(jnp.concatenate([wx, wz], axis=1), 0, Dp).astype(bf16)

    def pad_x_w(p):    # (Di, dt_rank+2N) -> (Dip, P)
        return _pad_last(_pad_dim(p["x_proj_w"], 0, Dip), P).astype(bf16)

    def pad_out_w(p):  # (Di, D) -> (Dip, Dp)
        return _pad_last(_pad_dim(p["out_w"], 0, Dip), Dp).astype(bf16)

    return {
        "ln_w": stack(lambda p: _pad_last(p["ln_w"], Dp)),
        "ln_b": stack(lambda p: _pad_last(p["ln_b"], Dp)),
        "in_w": stack(pad_in_w),
        "conv_w": stack(lambda p: _pad_last(p["conv_w"], Dip)),
        "conv_b": stack(lambda p: _pad_last(p["conv_b"], Dip)),
        "x_w": stack(pad_x_w),
        "dt_w": stack(lambda p: _pad_last(p["dt_w"], Dip).astype(bf16)),
        "dt_b": stack(lambda p: _pad_last(p["dt_b"], Dip)),
        "A_t": stack(lambda p: _pad_last(p["A"].T, Dip)),      # (nl, N, Dip)
        "D": stack(lambda p: _pad_last(p["D"], Dip)),
        "out_w": stack(pad_out_w),
        "fn_w": _pad_last(params["norm_w"], Dp),
        "fn_b": _pad_last(params["norm_b"], Dp),
        "emb": _pad_last(params["emb"], Dp).astype(jnp.float32),
    }


# ----------------------------------------------------------------------------
# Wrapper: block-size / VMEM-budget selection + pallas_call
# ----------------------------------------------------------------------------
def _scratch_bytes_per_batch(L, Dp, Dip, P, d_conv):
    return 4 * (2 * L * Dp + (L + d_conv - 1) * Dip + L * P + L * Dip)


def _pick_block_b(B, L, Dp, Dip, P, d_conv, budget_bytes=40 << 20):
    # Largest batch block whose carries/scratch fit the VMEM budget: stacked weights
    # then stream from HBM only ceil(B/Bb) times (dominant HBM cost on v5e/v6e).
    # TODO(synk): on v7x prefer exactly two batch blocks (one per TensorCore).
    per_b = 3 * _scratch_bytes_per_batch(L, Dp, Dip, P, d_conv)   # x3: live temps
    bb = max(1, min(B, budget_bytes // max(per_b, 1)))
    while B % bb:
        bb -= 1
    return bb


def _vmem_limit_bytes(block_b, L, Dp, Dip, P, d_conv, w_list):
    scratch = block_b * _scratch_bytes_per_batch(L, Dp, Dip, P, d_conv)
    weights = sum((w.size // w.shape[0]) * w.dtype.itemsize for w in w_list)
    io = 4 * block_b * L * Dp
    est = scratch + 2 * weights + 4 * io
    return int(min(max(2 * est, 32 << 20), 128 << 20))


def run_backbone(hidden, stacked, d_real, *, block_b=None):
    B, L, Dp = hidden.shape
    n_layers, d_conv, Dip = stacked["conv_w"].shape
    P = stacked["x_w"].shape[-1]
    if block_b is None:
        block_b = _pick_block_b(B, L, Dp, Dip, P, d_conv)
    assert B % block_b == 0
    n_bblocks = B // block_b

    hid_spec = pl.BlockSpec((block_b, L, Dp), lambda bb, l: (bb, 0, 0))

    def w_spec(arr):
        nz = arr.ndim - 1
        return pl.BlockSpec((None,) + arr.shape[1:],
                            lambda bb, l, nz=nz: (l,) + (0,) * nz)

    def const_spec(arr):
        nd = arr.ndim
        return pl.BlockSpec(arr.shape, lambda bb, l, nd=nd: (0,) * nd)

    w_list = [stacked[k] for k in _W_ORDER]

    grid_spec = pltpu.PrefetchScalarGridSpec(
        num_scalar_prefetch=0,
        grid=(n_bblocks, n_layers),
        in_specs=[hid_spec] + [w_spec(w) for w in w_list]
                 + [const_spec(stacked["fn_w"]), const_spec(stacked["fn_b"])],
        out_specs=hid_spec,
        scratch_shapes=[
            pltpu.VMEM((block_b, L, Dp), jnp.float32),                # hidden carry
            pltpu.VMEM((block_b, L, Dp), jnp.float32),                # residual carry
            pltpu.VMEM((block_b, L + d_conv - 1, Dip), jnp.float32),  # padded conv in
            pltpu.VMEM((block_b, L, P), jnp.float32),                 # x_proj slab
            pltpu.VMEM((block_b, L, Dip), jnp.float32),               # xc -> y
        ],
    )
    kernel = functools.partial(fused_backbone_kernel, d_real=d_real)
    return pl.pallas_call(
        kernel,
        out_shape=jax.ShapeDtypeStruct((B, L, Dp), jnp.float32),
        grid_spec=grid_spec,
        compiler_params=pltpu.CompilerParams(
            dimension_semantics=("parallel", "arbitrary"),
            vmem_limit_bytes=_vmem_limit_bytes(block_b, L, Dp, Dip, P, d_conv,
                                               w_list)),
    )(hidden, *w_list, stacked["fn_w"], stacked["fn_b"])


def mamba_backbone(input_ids, params, *, block_b=None):
    # TODO(synk): embedding gather kept as jnp.take glue (no clean Pallas win here);
    #             everything after it runs in one fused Pallas kernel.
    D = params["emb"].shape[1]
    stacked = prep_params(params)
    hidden = jnp.take(stacked["emb"], input_ids, axis=0)
    out = run_backbone(hidden, stacked, D, block_b=block_b)
    return out[..., :D]


# ----------------------------------------------------------------------------
# Pure-JAX reference (f32, unpadded, unfused) for verification
# ----------------------------------------------------------------------------
def _ref_block(hs, res, p):
    d_conv, Di = p["conv_w"].shape
    N = p["A"].shape[1]
    dt_rank = p["dt_w"].shape[0]
    L = hs.shape[0]

    res_new = hs + res
    normed = _layernorm(res_new, p["ln_w"], p["ln_b"])
    xz = normed @ p["in_w"]
    x, z = xz[:, :Di], xz[:, Di:]

    xpad = jnp.concatenate([jnp.zeros((d_conv - 1, Di), x.dtype), x], axis=0)
    xc = sum(p["conv_w"][k:k + 1, :] * xpad[k:k + L, :] for k in range(d_conv)) + p["conv_b"]
    xc = _silu(xc)

    x_dbl = xc @ p["x_proj_w"]
    dt = jax.nn.softplus(x_dbl[:, :dt_rank] @ p["dt_w"] + p["dt_b"])
    Bm = x_dbl[:, dt_rank:dt_rank + N]
    Cm = x_dbl[:, dt_rank + N:]
    A, Dp_ = p["A"], p["D"][0]

    h = jnp.zeros((Di, N), jnp.float32)
    ys = []
    for l in range(L):
        dA = jnp.exp(dt[l][:, None] * A)
        h = dA * h + dt[l][:, None] * xc[l][:, None] * Bm[l][None, :]
        ys.append(jnp.sum(h * Cm[l][None, :], axis=1) + Dp_ * xc[l])
    y = jnp.stack(ys, axis=0) * _silu(z)
    return y @ p["out_w"], res_new


def ref_backbone(input_ids, params):
    hidden = jnp.take(params["emb"], input_ids, axis=0)
    residual = jnp.zeros_like(hidden)
    for lp in params["layers"]:
        hidden, residual = jax.vmap(lambda h, r, lp=lp: _ref_block(h, r, lp))(hidden, residual)
    x = hidden + residual
    return jax.vmap(lambda xx: _layernorm(xx, params["norm_w"], params["norm_b"]))(x)


# ----------------------------------------------------------------------------
# Deterministic parameter init
# ----------------------------------------------------------------------------
def init_params(key, dim, n_layers, vocab_size, d_state=16, d_conv=4, expand=2):
    d_inner = expand * dim
    dt_rank = math.ceil(dim / 16)
    f32 = jnp.float32

    def normal(k, shape, scale):
        return scale * jax.random.normal(k, shape, dtype=f32)

    keys = jax.random.split(key, 1 + 6 * n_layers)
    params = {
        "emb": normal(keys[0], (vocab_size, dim), 0.02),
        "norm_w": jnp.ones((1, dim), f32),
        "norm_b": jnp.zeros((1, dim), f32),
        "layers": [],
    }
    A_neg = -jnp.broadcast_to(jnp.arange(1, d_state + 1, dtype=f32), (d_inner, d_state))
    for i in range(n_layers):
        k = keys[1 + 6 * i: 1 + 6 * (i + 1)]
        params["layers"].append({
            "ln_w": jnp.ones((1, dim), f32),
            "ln_b": jnp.zeros((1, dim), f32),
            "in_w": normal(k[0], (dim, 2 * d_inner), 0.02),
            "conv_w": normal(k[1], (d_conv, d_inner), 0.1),
            "conv_b": normal(k[2], (1, d_inner), 0.02),
            "x_proj_w": normal(k[3], (d_inner, dt_rank + 2 * d_state), 0.02),
            "dt_w": normal(k[4], (dt_rank, d_inner), 0.1),
            "dt_b": jnp.full((1, d_inner), 0.1, f32),
            "A": A_neg,
            "D": jnp.ones((1, d_inner), f32),
            "out_w": normal(k[5], (d_inner, dim), 0.02),
        })
    return params


# ----------------------------------------------------------------------------
if __name__ == "__main__":
    B, L, DIM, VOCAB, N_LAYERS = 2, 8, 32, 64, 2

    root = jax.random.PRNGKey(0)
    k_ids, k_params = jax.random.split(root)
    input_ids = jax.random.randint(k_ids, (B, L), 0, VOCAB, dtype=jnp.int32)
    params = init_params(k_params, DIM, N_LAYERS, VOCAB)

    out = jax.block_until_ready(mamba_backbone(input_ids, params))
    ref = jax.block_until_ready(ref_backbone(input_ids, params))

    assert out.shape == (B, L, DIM), out.shape
    assert bool(jnp.all(jnp.isfinite(out)))
    max_err = float(jnp.max(jnp.abs(out - ref)))
    assert max_err < 2e-2, f"mismatch vs JAX reference: {max_err}"

    print("KERNEL_OK")
</pallas_src>

<mosaic_0001>
module attributes {stable_mosaic.version = 11 : i64} {
  func.func @fused_backbone_kernel(%arg0: i32, %arg1: i32, %arg2: memref<2x8x128xf32, #tpu.memory_space<vmem>>, %arg3: memref<1x1x128xf32, #tpu.memory_space<vmem>>, %arg4: memref<1x1x128xf32, #tpu.memory_space<vmem>>, %arg5: memref<1x128x256xbf16, #tpu.memory_space<vmem>>, %arg6: memref<1x4x128xf32, #tpu.memory_space<vmem>>, %arg7: memref<1x1x128xf32, #tpu.memory_space<vmem>>, %arg8: memref<1x128x128xbf16, #tpu.memory_space<vmem>>, %arg9: memref<1x2x128xbf16, #tpu.memory_space<vmem>>, %arg10: memref<1x1x128xf32, #tpu.memory_space<vmem>>, %arg11: memref<1x16x128xf32, #tpu.memory_space<vmem>>, %arg12: memref<1x1x128xf32, #tpu.memory_space<vmem>>, %arg13: memref<1x128x128xbf16, #tpu.memory_space<vmem>>, %arg14: memref<1x128xf32, #tpu.memory_space<vmem>>, %arg15: memref<1x128xf32, #tpu.memory_space<vmem>>, %arg16: memref<2x8x128xf32, #tpu.memory_space<vmem>>, %arg17: memref<2x8x128xf32, #tpu.memory_space<vmem>>, %arg18: memref<2x8x128xf32, #tpu.memory_space<vmem>>, %arg19: memref<2x11x128xf32, #tpu.memory_space<vmem>>, %arg20: memref<2x8x128xf32, #tpu.memory_space<vmem>>, %arg21: memref<2x8x128xf32, #tpu.memory_space<vmem>>) attributes {dimension_semantics = [#tpu.dimension_semantics<parallel>, #tpu.dimension_semantics<arbitrary>], iteration_bounds = array<i64: 1, 2>, scalar_prefetch = 0 : i64, scratch_operands = 5 : i64, tpu.core_type = #tpu.core_type<tc>, window_params = [{transform_indices = @transform_0, window_bounds = array<i64: 2, 8, 128>}, {transform_indices = @transform_1, window_bounds = array<i64: 1, 1, 128>}, {transform_indices = @transform_2, window_bounds = array<i64: 1, 1, 128>}, {transform_indices = @transform_3, window_bounds = array<i64: 1, 128, 256>}, {transform_indices = @transform_4, window_bounds = array<i64: 1, 4, 128>}, {transform_indices = @transform_5, window_bounds = array<i64: 1, 1, 128>}, {transform_indices = @transform_6, window_bounds = array<i64: 1, 128, 128>}, {transform_indices = @transform_7, window_bounds = array<i64: 1, 2, 128>}, {transform_indices = @transform_8, window_bounds = array<i64: 1, 1, 128>}, {transform_indices = @transform_9, window_bounds = array<i64: 1, 16, 128>}, {transform_indices = @transform_10, window_bounds = array<i64: 1, 1, 128>}, {transform_indices = @transform_11, window_bounds = array<i64: 1, 128, 128>}, {pipeline_mode = #tpu.pipeline_mode<synchronous>, transform_indices = @transform_12, window_bounds = array<i64: 1, 128>}, {pipeline_mode = #tpu.pipeline_mode<synchronous>, transform_indices = @transform_13, window_bounds = array<i64: 1, 128>}, {transform_indices = @transform_14, window_bounds = array<i64: 2, 8, 128>}]} {
    %c0_i32 = arith.constant 0 : i32
    %0 = arith.cmpi eq, %arg1, %c0_i32 : i32
    %1 = arith.extui %0 : i1 to i32
    %c0_i32_0 = arith.constant 0 : i32
    %2 = arith.cmpi ne, %1, %c0_i32_0 : i32
    scf.if %2 {
      %c0_87 = arith.constant 0 : index
      %c0_88 = arith.constant 0 : index
      %c0_89 = arith.constant 0 : index
      %237 = vector.load %arg2[%c0_87, %c0_88, %c0_89] : memref<2x8x128xf32, #tpu.memory_space<vmem>>, vector<2x8x128xf32>
      %c0_90 = arith.constant 0 : index
      %c0_91 = arith.constant 0 : index
      %c0_92 = arith.constant 0 : index
      %238 = vector.load %arg17[%c0_90, %c0_91, %c0_92] : memref<2x8x128xf32, #tpu.memory_space<vmem>>, vector<2x8x128xf32>
      tpu.vector_store %arg17[%c0_90, %c0_91, %c0_92], %237 {strides = array<i32>} : memref<2x8x128xf32, #tpu.memory_space<vmem>>, vector<2x8x128xf32>,
      %cst_93 = arith.constant 0.000000e+00 : f32
      %239 = vector.broadcast %cst_93 : f32 to vector<2x8x128xf32>
      %c0_94 = arith.constant 0 : index
      %c0_95 = arith.constant 0 : index
      %c0_96 = arith.constant 0 : index
      %240 = vector.load %arg18[%c0_94, %c0_95, %c0_96] : memref<2x8x128xf32, #tpu.memory_space<vmem>>, vector<2x8x128xf32>
      tpu.vector_store %arg18[%c0_94, %c0_95, %c0_96], %239 {strides = array<i32>} : memref<2x8x128xf32, #tpu.memory_space<vmem>>, vector<2x8x128xf32>,
      %cst_97 = arith.constant 0.000000e+00 : f32
      %241 = vector.broadcast %cst_97 : f32 to vector<2x3x128xf32>
      %c0_98 = arith.constant 0 : index
      %c0_99 = arith.constant 0 : index
      %c0_100 = arith.constant 0 : index
      %242 = vector.load %arg19[%c0_98, %c0_99, %c0_100] : memref<2x11x128xf32, #tpu.memory_space<vmem>>, vector<2x3x128xf32>
      tpu.vector_store %arg19[%c0_98, %c0_99, %c0_100], %241 {strides = array<i32>} : memref<2x11x128xf32, #tpu.memory_space<vmem>>, vector<2x3x128xf32>,
    } else {
    }
    %c0 = arith.constant 0 : index
    %c0_1 = arith.constant 0 : index
    %c0_2 = arith.constant 0 : index
    %3 = vector.load %arg17[%c0, %c0_1, %c0_2] : memref<2x8x128xf32, #tpu.memory_space<vmem>>, vector<2x8x128xf32>
    %c0_3 = arith.constant 0 : index
    %c0_4 = arith.constant 0 : index
    %c0_5 = arith.constant 0 : index
    %4 = vector.load %arg18[%c0_3, %c0_4, %c0_5] : memref<2x8x128xf32, #tpu.memory_space<vmem>>, vector<2x8x128xf32>
    %5 = arith.addf %3, %4 : vector<2x8x128xf32>
    %c0_6 = arith.constant 0 : index
    %c0_7 = arith.constant 0 : index
    %c0_8 = arith.constant 0 : index
    %6 = vector.load %arg18[%c0_6, %c0_7, %c0_8] : memref<2x8x128xf32, #tpu.memory_space<vmem>>, vector<2x8x128xf32>
    tpu.vector_store %arg18[%c0_6, %c0_7, %c0_8], %5 {strides = array<i32>} : memref<2x8x128xf32, #tpu.memory_space<vmem>>, vector<2x8x128xf32>,
    %c0_9 = arith.constant 0 : index
    %c0_10 = arith.constant 0 : index
    %c0_11 = arith.constant 0 : index
    %7 = vector.load %arg3[%c0_9, %c0_10, %c0_11] : memref<1x1x128xf32, #tpu.memory_space<vmem>>, vector<1x1x128xf32>
    %8 = vector.shape_cast %7 : vector<1x1x128xf32> to vector<1x128xf32>
    %c0_12 = arith.constant 0 : index
    %c0_13 = arith.constant 0 : index
    %c0_14 = arith.constant 0 : index
    %9 = vector.load %arg4[%c0_12, %c0_13, %c0_14] : memref<1x1x128xf32, #tpu.memory_space<vmem>>, vector<1x1x128xf32>
    %10 = vector.shape_cast %9 : vector<1x1x128xf32> to vector<1x128xf32>
    %cst = arith.constant dense<0.000000e+00> : vector<2x8xf32>
    %11 = vector.multi_reduction <add>, %5, %cst [2] : vector<2x8x128xf32> to vector<2x8xf32>
    %12 = vector.shape_cast %11 : vector<2x8xf32> to vector<2x8x1xf32>
    %cst_15 = arith.constant 3.200000e+01 : f32
    %13 = vector.broadcast %cst_15 : f32 to vector<2x8x1xf32>
    %14 = arith.divf %12, %13 : vector<2x8x1xf32>
    %15 = arith.mulf %5, %5 : vector<2x8x128xf32>
    %cst_16 = arith.constant dense<0.000000e+00> : vector<2x8xf32>
    %16 = vector.multi_reduction <add>, %15, %cst_16 [2] : vector<2x8x128xf32> to vector<2x8xf32>
    %17 = vector.shape_cast %16 : vector<2x8xf32> to vector<2x8x1xf32>
    %cst_17 = arith.constant 3.200000e+01 : f32
    %18 = vector.broadcast %cst_17 : f32 to vector<2x8x1xf32>
    %19 = arith.divf %17, %18 : vector<2x8x1xf32>
    %20 = arith.mulf %14, %14 : vector<2x8x1xf32>
    %21 = arith.subf %19, %20 : vector<2x8x1xf32>
    %cst_18 = arith.constant 0.000000e+00 : f32
    %22 = vector.broadcast %cst_18 : f32 to vector<2x8x1xf32>
    %23 = arith.maximumf %21, %22 : vector<2x8x1xf32>
    %24 = vector.broadcast %14 : vector<2x8x1xf32> to vector<2x8x128xf32>
    %25 = arith.subf %5, %24 : vector<2x8x128xf32>
    %cst_19 = arith.constant 9.99999974E-6 : f32
    %26 = vector.broadcast %cst_19 : f32 to vector<2x8x1xf32>
    %27 = arith.addf %23, %26 : vector<2x8x1xf32>
    %28 = math.rsqrt %27 : vector<2x8x1xf32>
    %29 = vector.broadcast %28 : vector<2x8x1xf32> to vector<2x8x128xf32>
    %30 = arith.mulf %25, %29 : vector<2x8x128xf32>
    %31 = vector.shape_cast %8 : vector<1x128xf32> to vector<1x1x128xf32>
    %32 = vector.broadcast %31 : vector<1x1x128xf32> to vector<2x8x128xf32>
    %33 = arith.mulf %30, %32 : vector<2x8x128xf32>
    %34 = vector.shape_cast %10 : vector<1x128xf32> to vector<1x1x128xf32>
    %35 = vector.broadcast %34 : vector<1x1x128xf32> to vector<2x8x128xf32>
    %36 = arith.addf %33, %35 : vector<2x8x128xf32>
    %37 = vector.shape_cast %36 : vector<2x8x128xf32> to vector<16x128xf32>
    %38 = arith.truncf %37 : vector<16x128xf32> to vector<16x128xbf16>
    %c0_20 = arith.constant 0 : index
    %c0_21 = arith.constant 0 : index
    %c0_22 = arith.constant 0 : index
    %39 = vector.load %arg5[%c0_20, %c0_21, %c0_22] : memref<1x128x256xbf16, #tpu.memory_space<vmem>>, vector<1x128x256xbf16>
    %40 = vector.shape_cast %39 : vector<1x128x256xbf16> to vector<128x256xbf16>
    %cst_23 = arith.constant dense<0.000000e+00> : vector<16x256xf32>
    %41 = tpu.matmul %38, %40, %cst_23 {dimension_numbers = #tpu.dot_dimension_numbers<[1], [0], [0], [1], [0, 0, 1, 1], [], []>} : vector<16x128xbf16>, vector<128x256xbf16>, vector<16x256xf32> -> vector<16x256xf32>
    %42 = vector.shape_cast %41 : vector<16x256xf32> to vector<2x8x256xf32>
    %43 = vector.extract_strided_slice %42 {offsets = [0, 0, 0], sizes = [2, 8, 128], strides = [1, 1, 1]} : vector<2x8x256xf32> to vector<2x8x128xf32>
    %44 = vector.extract_strided_slice %42 {offsets = [0, 0, 128], sizes = [2, 8, 128], strides = [1, 1, 1]} : vector<2x8x256xf32> to vector<2x8x128xf32>
    %c0_24 = arith.constant 0 : index
    %c3 = arith.constant 3 : index
    %c0_25 = arith.constant 0 : index
    %45 = vector.load %arg19[%c0_24, %c3, %c0_25] : memref<2x11x128xf32, #tpu.memory_space<vmem>>, vector<2x8x128xf32>
    tpu.vector_store %arg19[%c0_24, %c3, %c0_25], %43 {strides = array<i32>} : memref<2x11x128xf32, #tpu.memory_space<vmem>>, vector<2x8x128xf32>,
    %c0_26 = arith.constant 0 : index
    %c0_27 = arith.constant 0 : index
    %c0_28 = arith.constant 0 : index
    %46 = vector.load %arg6[%c0_26, %c0_27, %c0_28] : memref<1x4x128xf32, #tpu.memory_space<vmem>>, vector<1x4x128xf32>
    %47 = vector.shape_cast %46 : vector<1x4x128xf32> to vector<4x128xf32>
    %48 = vector.extract_strided_slice %47 {offsets = [3, 0], sizes = [1, 128], strides = [1, 1]} : vector<4x128xf32> to vector<1x128xf32>
    %49 = vector.shape_cast %48 : vector<1x128xf32> to vector<1x1x128xf32>
    %50 = vector.broadcast %49 : vector<1x1x128xf32> to vector<2x8x128xf32>
    %51 = arith.mulf %50, %43 : vector<2x8x128xf32>
    %52 = vector.extract_strided_slice %47 {offsets = [0, 0], sizes = [1, 128], strides = [1, 1]} : vector<4x128xf32> to vector<1x128xf32>
    %c0_29 = arith.constant 0 : index
    %c0_30 = arith.constant 0 : index
    %c0_31 = arith.constant 0 : index
    %53 = vector.load %arg19[%c0_29, %c0_30, %c0_31] : memref<2x11x128xf32, #tpu.memory_space<vmem>>, vector<2x8x128xf32>
    %54 = vector.shape_cast %52 : vector<1x128xf32> to vector<1x1x128xf32>
    %55 = vector.broadcast %54 : vector<1x1x128xf32> to vector<2x8x128xf32>
    %56 = arith.mulf %55, %53 : vector<2x8x128xf32>
    %57 = arith.addf %51, %56 : vector<2x8x128xf32>
    %58 = vector.extract_strided_slice %47 {offsets = [1, 0], sizes = [1, 128], strides = [1, 1]} : vector<4x128xf32> to vector<1x128xf32>
    %c0_32 = arith.constant 0 : index
    %c1 = arith.constant 1 : index
    %c0_33 = arith.constant 0 : index
    %59 = vector.load %arg19[%c0_32, %c1, %c0_33] : memref<2x11x128xf32, #tpu.memory_space<vmem>>, vector<2x8x128xf32>
    %60 = vector.shape_cast %58 : vector<1x128xf32> to vector<1x1x128xf32>
    %61 = vector.broadcast %60 : vector<1x1x128xf32> to vector<2x8x128xf32>
    %62 = arith.mulf %61, %59 : vector<2x8x128xf32>
    %63 = arith.addf %57, %62 : vector<2x8x128xf32>
    %64 = vector.extract_strided_slice %47 {offsets = [2, 0], sizes = [1, 128], strides = [1, 1]} : vector<4x128xf32> to vector<1x128xf32>
    %c0_34 = arith.constant 0 : index
    %c2 = arith.constant 2 : index
    %c0_35 = arith.constant 0 : index
    %65 = vector.load %arg19[%c0_34, %c2, %c0_35] : memref<2x11x128xf32, #tpu.memory_space<vmem>>, vector<2x8x128xf32>
    %66 = vector.shape_cast %64 : vector<1x128xf32> to vector<1x1x128xf32>
    %67 = vector.broadcast %66 : vector<1x1x128xf32> to vector<2x8x128xf32>
    %68 = arith.mulf %67, %65 : vector<2x8x128xf32>
    %69 = arith.addf %63, %68 : vector<2x8x128xf32>
    %c0_36 = arith.constant 0 : index
    %c0_37 = arith.constant 0 : index
    %c0_38 = arith.constant 0 : index
    %70 = vector.load %arg7[%c0_36, %c0_37, %c0_38] : memref<1x1x128xf32, #tpu.memory_space<vmem>>, vector<1x1x128xf32>
    %71 = vector.shape_cast %70 : vector<1x1x128xf32> to vector<1x128xf32>
    %72 = vector.shape_cast %71 : vector<1x128xf32> to vector<1x1x128xf32>
    %73 = vector.broadcast %72 : vector<1x1x128xf32> to vector<2x8x128xf32>
    %74 = arith.addf %69, %73 : vector<2x8x128xf32>
    %75 = arith.negf %74 : vector<2x8x128xf32>
    %76 = math.exp %75 : vector<2x8x128xf32>
    %cst_39 = arith.constant 1.000000e+00 : f32
    %77 = vector.broadcast %cst_39 : f32 to vector<2x8x128xf32>
    %78 = arith.addf %77, %76 : vector<2x8x128xf32>
    %79 = arith.divf %77, %78 : vector<2x8x128xf32>
    %80 = arith.mulf %74, %79 : vector<2x8x128xf32>
    %81 = vector.shape_cast %80 : vector<2x8x128xf32> to vector<16x128xf32>
    %82 = arith.truncf %81 : vector<16x128xf32> to vector<16x128xbf16>
    %c0_40 = arith.constant 0 : index
    %c0_41 = arith.constant 0 : index
    %c0_42 = arith.constant 0 : index
    %83 = vector.load %arg8[%c0_40, %c0_41, %c0_42] : memref<1x128x128xbf16, #tpu.memory_space<vmem>>, vector<1x128x128xbf16>
    %84 = vector.shape_cast %83 : vector<1x128x128xbf16> to vector<128x128xbf16>
    %cst_43 = arith.constant dense<0.000000e+00> : vector<16x128xf32>
    %85 = tpu.matmul %82, %84, %cst_43 {dimension_numbers = #tpu.dot_dimension_numbers<[1], [0], [0], [1], [0, 0, 1, 1], [], []>} : vector<16x128xbf16>, vector<128x128xbf16>, vector<16x128xf32> -> vector<16x128xf32>
    %86 = vector.shape_cast %85 : vector<16x128xf32> to vector<2x8x128xf32>
    %c0_44 = arith.constant 0 : index
    %c0_45 = arith.constant 0 : index
    %c0_46 = arith.constant 0 : index
    %87 = vector.load %arg20[%c0_44, %c0_45, %c0_46] : memref<2x8x128xf32, #tpu.memory_space<vmem>>, vector<2x8x128xf32>
    tpu.vector_store %arg20[%c0_44, %c0_45, %c0_46], %86 {strides = array<i32>} : memref<2x8x128xf32, #tpu.memory_space<vmem>>, vector<2x8x128xf32>,
    %c0_47 = arith.constant 0 : index
    %c0_48 = arith.constant 0 : index
    %c0_49 = arith.constant 0 : index
    %88 = vector.load %arg21[%c0_47, %c0_48, %c0_49] : memref<2x8x128xf32, #tpu.memory_space<vmem>>, vector<2x8x128xf32>
    tpu.vector_store %arg21[%c0_47, %c0_48, %c0_49], %80 {strides = array<i32>} : memref<2x8x128xf32, #tpu.memory_space<vmem>>, vector<2x8x128xf32>,
    %c0_50 = arith.constant 0 : index
    %c0_51 = arith.constant 0 : index
    %c0_52 = arith.constant 0 : index
    %89 = vector.load %arg11[%c0_50, %c0_51, %c0_52] : memref<1x16x128xf32, #tpu.memory_space<vmem>>, vector<1x16x128xf32>
    %90 = vector.shape_cast %89 : vector<1x16x128xf32> to vector<16x128xf32>
    %c0_53 = arith.constant 0 : index
    %c0_54 = arith.constant 0 : index
    %c0_55 = arith.constant 0 : index
    %91 = vector.load %arg9[%c0_53, %c0_54, %c0_55] : memref<1x2x128xbf16, #tpu.memory_space<vmem>>, vector<1x2x128xbf16>
    %92 = vector.shape_cast %91 : vector<1x2x128xbf16> to vector<2x128xbf16>
    %c0_56 = arith.constant 0 : index
    %c0_57 = arith.constant 0 : index
    %c0_58 = arith.constant 0 : index
    %93 = vector.load %arg10[%c0_56, %c0_57, %c0_58] : memref<1x1x128xf32, #tpu.memory_space<vmem>>, vector<1x1x128xf32>
    %94 = vector.shape_cast %93 : vector<1x1x128xf32> to vector<1x128xf32>
    %c0_59 = arith.constant 0 : index
    %c0_60 = arith.constant 0 : index
    %c0_61 = arith.constant 0 : index
    %95 = vector.load %arg12[%c0_59, %c0_60, %c0_61] : memref<1x1x128xf32, #tpu.memory_space<vmem>>, vector<1x1x128xf32>
    %96 = vector.shape_cast %95 : vector<1x1x128xf32> to vector<1x128xf32>
    %cst_62 = arith.constant 0.000000e+00 : f32
    %97 = vector.broadcast %cst_62 : f32 to vector<2x16x128xf32>
    %c0_i32_63 = arith.constant 0 : i32
    %c8_i32 = arith.constant 8 : i32
    %98 = arith.muli %c0_i32_63, %c8_i32 : i32
    %99 = tpu.assume_multiple %98, 8 : i32
    %c0_64 = arith.constant 0 : index
    %100 = arith.index_cast %99 : i32 to index
    %c0_65 = arith.constant 0 : index
    %101 = vector.load %arg20[%c0_64, %100, %c0_65] : memref<2x8x128xf32, #tpu.memory_space<vmem>>, vector<2x8x128xf32>
    %102 = vector.extract_strided_slice %101 {offsets = [0, 0, 0], sizes = [2, 8, 2], strides = [1, 1, 1]} : vector<2x8x128xf32> to vector<2x8x2xf32>
    %103 = vector.extract_strided_slice %101 {offsets = [0, 0, 2], sizes = [2, 8, 16], strides = [1, 1, 1]} : vector<2x8x128xf32> to vector<2x8x16xf32>
    %104 = vector.extract_strided_slice %101 {offsets = [0, 0, 18], sizes = [2, 8, 16], strides = [1, 1, 1]} : vector<2x8x128xf32> to vector<2x8x16xf32>
    %c0_66 = arith.constant 0 : index
    %105 = arith.index_cast %99 : i32 to index
    %c0_67 = arith.constant 0 : index
    %106 = vector.load %arg21[%c0_66, %105, %c0_67] : memref<2x8x128xf32, #tpu.memory_space<vmem>>, vector<2x8x128xf32>
    %107 = arith.extf %92 : vector<2x128xbf16> to vector<2x128xf32>
    %cst_68 = arith.constant 0.000000e+00 : f32
    %108 = vector.broadcast %cst_68 : f32 to vector<2x8x128xf32>
    %109 = vector.extract_strided_slice %102 {offsets = [0, 0, 0], sizes = [2, 8, 1], strides = [1, 1, 1]} : vector<2x8x2xf32> to vector<2x8x1xf32>
    %110 = vector.extract_strided_slice %107 {offsets = [0, 0], sizes = [1, 128], strides = [1, 1]} : vector<2x128xf32> to vector<1x128xf32>
    %111 = vector.shape_cast %110 : vector<1x128xf32> to vector<1x1x128xf32>
    %112 = vector.broadcast %109 : vector<2x8x1xf32> to vector<2x8x128xf32>
    %113 = vector.broadcast %111 : vector<1x1x128xf32> to vector<2x8x128xf32>
    %114 = arith.mulf %112, %113 : vector<2x8x128xf32>
    %115 = arith.addf %108, %114 : vector<2x8x128xf32>
    %116 = vector.extract_strided_slice %102 {offsets = [0, 0, 1], sizes = [2, 8, 1], strides = [1, 1, 1]} : vector<2x8x2xf32> to vector<2x8x1xf32>
    %117 = vector.extract_strided_slice %107 {offsets = [1, 0], sizes = [1, 128], strides = [1, 1]} : vector<2x128xf32> to vector<1x128xf32>
    %118 = vector.shape_cast %117 : vector<1x128xf32> to vector<1x1x128xf32>
    %119 = vector.broadcast %116 : vector<2x8x1xf32> to vector<2x8x128xf32>
    %120 = vector.broadcast %118 : vector<1x1x128xf32> to vector<2x8x128xf32>
    %121 = arith.mulf %119, %120 : vector<2x8x128xf32>
    %122 = arith.addf %115, %121 : vector<2x8x128xf32>
    %123 = vector.shape_cast %94 : vector<1x128xf32> to vector<1x1x128xf32>
    %124 = vector.broadcast %123 : vector<1x1x128xf32> to vector<2x8x128xf32>
    %125 = arith.addf %122, %124 : vector<2x8x128xf32>
    %cst_69 = arith.constant 0.000000e+00 : f32
    %126 = vector.broadcast %cst_69 : f32 to vector<2x8x128xf32>
    %127 = arith.maximumf %125, %126 : vector<2x8x128xf32>
    %128 = vector.broadcast %cst_69 : f32 to vector<2x8x128xf32>
    %129 = arith.subf %125, %128 : vector<2x8x128xf32>
    %130 = arith.cmpf one, %129, %129 : vector<2x8x128xf32>
    %131 = vector.broadcast %cst_69 : f32 to vector<2x8x128xf32>
    %132 = arith.addf %125, %131 : vector<2x8x128xf32>
    %133 = math.absf %129 : vector<2x8x128xf32>
    %cst_70 = arith.constant 0.000000e+00 : f32
    %134 = vector.broadcast %cst_70 : f32 to vector<2x8x128xf32>
    %135 = arith.subf %134, %133 : vector<2x8x128xf32>
    %136 = math.exp %135 : vector<2x8x128xf32>
    %137 = math.log1p %136 : vector<2x8x128xf32>
    %138 = arith.addf %127, %137 : vector<2x8x128xf32>
    %139 = arith.select %130, %132, %138 : vector<2x8x128xi1>, vector<2x8x128xf32>
    %140 = vector.shape_cast %139 : vector<2x8x128xf32> to vector<2x8x1x128xf32>
    %141 = vector.shape_cast %90 : vector<16x128xf32> to vector<1x1x16x128xf32>
    %142 = vector.broadcast %140 : vector<2x8x1x128xf32> to vector<2x8x16x128xf32>
    %143 = vector.broadcast %141 : vector<1x1x16x128xf32> to vector<2x8x16x128xf32>
    %144 = arith.mulf %142, %143 : vector<2x8x16x128xf32>
    %145 = math.exp %144 : vector<2x8x16x128xf32>
    %146 = vector.shape_cast %103 : vector<2x8x16xf32> to vector<2x8x16x1xf32>
    %147 = arith.mulf %139, %106 : vector<2x8x128xf32>
    %148 = vector.shape_cast %147 : vector<2x8x128xf32> to vector<2x8x1x128xf32>
    %149 = vector.broadcast %146 : vector<2x8x16x1xf32> to vector<2x8x16x128xf32>
    %150 = vector.broadcast %148 : vector<2x8x1x128xf32> to vector<2x8x16x128xf32>
    %151 = arith.mulf %149, %150 : vector<2x8x16x128xf32>
    %152 = vector.extract_strided_slice %145 {offsets = [0, 0, 0, 0], sizes = [2, 1, 16, 128], strides = [1, 1, 1, 1]} : vector<2x8x16x128xf32> to vector<2x1x16x128xf32>
    %153 = vector.shape_cast %152 : vector<2x1x16x128xf32> to vector<2x16x128xf32>
    %154 = arith.mulf %153, %97 : vector<2x16x128xf32>
    %155 = vector.extract_strided_slice %151 {offsets = [0, 0, 0, 0], sizes = [2, 1, 16, 128], strides = [1, 1, 1, 1]} : vector<2x8x16x128xf32> to vector<2x1x16x128xf32>
    %156 = vector.shape_cast %155 : vector<2x1x16x128xf32> to vector<2x16x128xf32>
    %157 = arith.addf %154, %156 : vector<2x16x128xf32>
    %158 = vector.extract_strided_slice %145 {offsets = [0, 1, 0, 0], sizes = [2, 1, 16, 128], strides = [1, 1, 1, 1]} : vector<2x8x16x128xf32> to vector<2x1x16x128xf32>
    %159 = vector.shape_cast %158 : vector<2x1x16x128xf32> to vector<2x16x128xf32>
    %160 = arith.mulf %159, %157 : vector<2x16x128xf32>
    %161 = vector.extract_strided_slice %151 {offsets = [0, 1, 0, 0], sizes = [2, 1, 16, 128], strides = [1, 1, 1, 1]} : vector<2x8x16x128xf32> to vector<2x1x16x128xf32>
    %162 = vector.shape_cast %161 : vector<2x1x16x128xf32> to vector<2x16x128xf32>
    %163 = arith.addf %160, %162 : vector<2x16x128xf32>
    %164 = vector.extract_strided_slice %145 {offsets = [0, 2, 0, 0], sizes = [2, 1, 16, 128], strides = [1, 1, 1, 1]} : vector<2x8x16x128xf32> to vector<2x1x16x128xf32>
    %165 = vector.shape_cast %164 : vector<2x1x16x128xf32> to vector<2x16x128xf32>
    %166 = arith.mulf %165, %163 : vector<2x16x128xf32>
    %167 = vector.extract_strided_slice %151 {offsets = [0, 2, 0, 0], sizes = [2, 1, 16, 128], strides = [1, 1, 1, 1]} : vector<2x8x16x128xf32> to vector<2x1x16x128xf32>
    %168 = vector.shape_cast %167 : vector<2x1x16x128xf32> to vector<2x16x128xf32>
    %169 = arith.addf %166, %168 : vector<2x16x128xf32>
    %170 = vector.extract_strided_slice %145 {offsets = [0, 3, 0, 0], sizes = [2, 1, 16, 128], strides = [1, 1, 1, 1]} : vector<2x8x16x128xf32> to vector<2x1x16x128xf32>
    %171 = vector.shape_cast %170 : vector<2x1x16x128xf32> to vector<2x16x128xf32>
    %172 = arith.mulf %171, %169 : vector<2x16x128xf32>
    %173 = vector.extract_strided_slice %151 {offsets = [0, 3, 0, 0], sizes = [2, 1, 16, 128], strides = [1, 1, 1, 1]} : vector<2x8x16x128xf32> to vector<2x1x16x128xf32>
    %174 = vector.shape_cast %173 : vector<2x1x16x128xf32> to vector<2x16x128xf32>
    %175 = arith.addf %172, %174 : vector<2x16x128xf32>
    %176 = vector.extract_strided_slice %145 {offsets = [0, 4, 0, 0], sizes = [2, 1, 16, 128], strides = [1, 1, 1, 1]} : vector<2x8x16x128xf32> to vector<2x1x16x128xf32>
    %177 = vector.shape_cast %176 : vector<2x1x16x128xf32> to vector<2x16x128xf32>
    %178 = arith.mulf %177, %175 : vector<2x16x128xf32>
    %179 = vector.extract_strided_slice %151 {offsets = [0, 4, 0, 0], sizes = [2, 1, 16, 128], strides = [1, 1, 1, 1]} : vector<2x8x16x128xf32> to vector<2x1x16x128xf32>
    %180 = vector.shape_cast %179 : vector<2x1x16x128xf32> to vector<2x16x128xf32>
    %181 = arith.addf %178, %180 : vector<2x16x128xf32>
    %182 = vector.extract_strided_slice %145 {offsets = [0, 5, 0, 0], sizes = [2, 1, 16, 128], strides = [1, 1, 1, 1]} : vector<2x8x16x128xf32> to vector<2x1x16x128xf32>
    %183 = vector.shape_cast %182 : vector<2x1x16x128xf32> to vector<2x16x128xf32>
    %184 = arith.mulf %183, %181 : vector<2x16x128xf32>
    %185 = vector.extract_strided_slice %151 {offsets = [0, 5, 0, 0], sizes = [2, 1, 16, 128], strides = [1, 1, 1, 1]} : vector<2x8x16x128xf32> to vector<2x1x16x128xf32>
    %186 = vector.shape_cast %185 : vector<2x1x16x128xf32> to vector<2x16x128xf32>
    %187 = arith.addf %184, %186 : vector<2x16x128xf32>
    %188 = vector.extract_strided_slice %145 {offsets = [0, 6, 0, 0], sizes = [2, 1, 16, 128], strides = [1, 1, 1, 1]} : vector<2x8x16x128xf32> to vector<2x1x16x128xf32>
    %189 = vector.shape_cast %188 : vector<2x1x16x128xf32> to vector<2x16x128xf32>
    %190 = arith.mulf %189, %187 : vector<2x16x128xf32>
    %191 = vector.extract_strided_slice %151 {offsets = [0, 6, 0, 0], sizes = [2, 1, 16, 128], strides = [1, 1, 1, 1]} : vector<2x8x16x128xf32> to vector<2x1x16x128xf32>
    %192 = vector.shape_cast %191 : vector<2x1x16x128xf32> to vector<2x16x128xf32>
    %193 = arith.addf %190, %192 : vector<2x16x128xf32>
    %194 = vector.extract_strided_slice %145 {offsets = [0, 7, 0, 0], sizes = [2, 1, 16, 128], strides = [1, 1, 1, 1]} : vector<2x8x16x128xf32> to vector<2x1x16x128xf32>
    %195 = vector.shape_cast %194 : vector<2x1x16x128xf32> to vector<2x16x128xf32>
    %196 = arith.mulf %195, %193 : vector<2x16x128xf32>
    %197 = vector.extract_strided_slice %151 {offsets = [0, 7, 0, 0], sizes = [2, 1, 16, 128], strides = [1, 1, 1, 1]} : vector<2x8x16x128xf32> to vector<2x1x16x128xf32>
    %198 = vector.shape_cast %197 : vector<2x1x16x128xf32> to vector<2x16x128xf32>
    %199 = arith.addf %196, %198 : vector<2x16x128xf32>
    %200 = vector.shape_cast %157 : vector<2x16x128xf32> to vector<2x1x16x128xf32>
    %201 = vector.shape_cast %163 : vector<2x16x128xf32> to vector<2x1x16x128xf32>
    %202 = vector.shape_cast %169 : vector<2x16x128xf32> to vector<2x1x16x128xf32>
    %203 = vector.shape_cast %175 : vector<2x16x128xf32> to vector<2x1x16x128xf32>
    %204 = vector.shape_cast %181 : vector<2x16x128xf32> to vector<2x1x16x128xf32>
    %205 = vector.shape_cast %187 : vector<2x16x128xf32> to vector<2x1x16x128xf32>
    %206 = vector.shape_cast %193 : vector<2x16x128xf32> to vector<2x1x16x128xf32>
    %207 = vector.shape_cast %199 : vector<2x16x128xf32> to vector<2x1x16x128xf32>
    %208 = tpu.concatenate %200, %201, %202, %203, %204, %205, %206, %207 in 1 : vector<2x1x16x128xf32>, vector<2x1x16x128xf32>, vector<2x1x16x128xf32>, vector<2x1x16x128xf32>, vector<2x1x16x128xf32>, vector<2x1x16x128xf32>, vector<2x1x16x128xf32>, vector<2x1x16x128xf32> -> vector<2x8x16x128xf32>
    %209 = vector.shape_cast %104 : vector<2x8x16xf32> to vector<2x8x16x1xf32>
    %210 = vector.broadcast %209 : vector<2x8x16x1xf32> to vector<2x8x16x128xf32>
    %211 = arith.mulf %208, %210 : vector<2x8x16x128xf32>
    %cst_71 = arith.constant dense<0.000000e+00> : vector<2x8x128xf32>
    %212 = vector.multi_reduction <add>, %211, %cst_71 [2] : vector<2x8x16x128xf32> to vector<2x8x128xf32>
    %213 = vector.shape_cast %96 : vector<1x128xf32> to vector<1x1x128xf32>
    %214 = vector.broadcast %213 : vector<1x1x128xf32> to vector<2x8x128xf32>
    %215 = arith.mulf %214, %106 : vector<2x8x128xf32>
    %216 = arith.addf %212, %215 : vector<2x8x128xf32>
    %c0_72 = arith.constant 0 : index
    %217 = arith.index_cast %99 : i32 to index
    %c0_73 = arith.constant 0 : index
    %218 = vector.load %arg21[%c0_72, %217, %c0_73] : memref<2x8x128xf32, #tpu.memory_space<vmem>>, vector<2x8x128xf32>
    tpu.vector_store %arg21[%c0_72, %217, %c0_73], %216 {strides = array<i32>} : memref<2x8x128xf32, #tpu.memory_space<vmem>>, vector<2x8x128xf32>,
    %c1_i32 = arith.constant 1 : i32
    %c0_74 = arith.constant 0 : index
    %c0_75 = arith.constant 0 : index
    %c0_76 = arith.constant 0 : index
    %219 = vector.load %arg21[%c0_74, %c0_75, %c0_76] : memref<2x8x128xf32, #tpu.memory_space<vmem>>, vector<2x8x128xf32>
    %220 = arith.negf %44 : vector<2x8x128xf32>
    %221 = math.exp %220 : vector<2x8x128xf32>
    %cst_77 = arith.constant 1.000000e+00 : f32
    %222 = vector.broadcast %cst_77 : f32 to vector<2x8x128xf32>
    %223 = arith.addf %222, %221 : vector<2x8x128xf32>
    %224 = arith.divf %222, %223 : vector<2x8x128xf32>
    %225 = arith.mulf %44, %224 : vector<2x8x128xf32>
    %226 = arith.mulf %219, %225 : vector<2x8x128xf32>
    %227 = vector.shape_cast %226 : vector<2x8x128xf32> to vector<16x128xf32>
    %228 = arith.truncf %227 : vector<16x128xf32> to vector<16x128xbf16>
    %c0_78 = arith.constant 0 : index
    %c0_79 = arith.constant 0 : index
    %c0_80 = arith.constant 0 : index
    %229 = vector.load %arg13[%c0_78, %c0_79, %c0_80] : memref<1x128x128xbf16, #tpu.memory_space<vmem>>, vector<1x128x128xbf16>
    %230 = vector.shape_cast %229 : vector<1x128x128xbf16> to vector<128x128xbf16>
    %cst_81 = arith.constant dense<0.000000e+00> : vector<16x128xf32>
    %231 = tpu.matmul %228, %230, %cst_81 {dimension_numbers = #tpu.dot_dimension_numbers<[1], [0], [0], [1], [0, 0, 1, 1], [], []>} : vector<16x128xbf16>, vector<128x128xbf16>, vector<16x128xf32> -> vector<16x128xf32>
    %232 = vector.shape_cast %231 : vector<16x128xf32> to vector<2x8x128xf32>
    %c0_82 = arith.constant 0 : index
    %c0_83 = arith.constant 0 : index
    %c0_84 = arith.constant 0 : index
    %233 = vector.load %arg17[%c0_82, %c0_83, %c0_84] : memref<2x8x128xf32, #tpu.memory_space<vmem>>, vector<2x8x128xf32>
    tpu.vector_store %arg17[%c0_82, %c0_83, %c0_84], %232 {strides = array<i32>} : memref<2x8x128xf32, #tpu.memory_space<vmem>>, vector<2x8x128xf32>,
    %c1_i32_85 = arith.constant 1 : i32
    %234 = arith.cmpi eq, %arg1, %c1_i32_85 : i32
    %235 = arith.extui %234 : i1 to i32
    %c0_i32_86 = arith.constant 0 : i32
    %236 = arith.cmpi ne, %235, %c0_i32_86 : i32
    scf.if %236 {
      %237 = arith.addf %232, %5 : vector<2x8x128xf32>
      %c0_87 = arith.constant 0 : index
      %c0_88 = arith.constant 0 : index
      %238 = vector.load %arg14[%c0_87, %c0_88] : memref<1x128xf32, #tpu.memory_space<vmem>>, vector<1x128xf32>
      %c0_89 = arith.constant 0 : index
      %c0_90 = arith.constant 0 : index
      %239 = vector.load %arg15[%c0_89, %c0_90] : memref<1x128xf32, #tpu.memory_space<vmem>>, vector<1x128xf32>
      %cst_91 = arith.constant dense<0.000000e+00> : vector<2x8xf32>
      %240 = vector.multi_reduction <add>, %237, %cst_91 [2] : vector<2x8x128xf32> to vector<2x8xf32>
      %241 = vector.shape_cast %240 : vector<2x8xf32> to vector<2x8x1xf32>
      %cst_92 = arith.constant 3.200000e+01 : f32
      %242 = vector.broadcast %cst_92 : f32 to vector<2x8x1xf32>
      %243 = arith.divf %241, %242 : vector<2x8x1xf32>
      %244 = arith.mulf %237, %237 : vector<2x8x128xf32>
      %cst_93 = arith.constant dense<0.000000e+00> : vector<2x8xf32>
      %245 = vector.multi_reduction <add>, %244, %cst_93 [2] : vector<2x8x128xf32> to vector<2x8xf32>
      %246 = vector.shape_cast %245 : vector<2x8xf32> to vector<2x8x1xf32>
      %cst_94 = arith.constant 3.200000e+01 : f32
      %247 = vector.broadcast %cst_94 : f32 to vector<2x8x1xf32>
      %248 = arith.divf %246, %247 : vector<2x8x1xf32>
      %249 = arith.mulf %243, %243 : vector<2x8x1xf32>
      %250 = arith.subf %248, %249 : vector<2x8x1xf32>
      %cst_95 = arith.constant 0.000000e+00 : f32
      %251 = vector.broadcast %cst_95 : f32 to vector<2x8x1xf32>
      %252 = arith.maximumf %250, %251 : vector<2x8x1xf32>
      %253 = vector.broadcast %243 : vector<2x8x1xf32> to vector<2x8x128xf32>
      %254 = arith.subf %237, %253 : vector<2x8x128xf32>
      %cst_96 = arith.constant 9.99999974E-6 : f32
      %255 = vector.broadcast %cst_96 : f32 to vector<2x8x1xf32>
      %256 = arith.addf %252, %255 : vector<2x8x1xf32>
      %257 = math.rsqrt %256 : vector<2x8x1xf32>
      %258 = vector.broadcast %257 : vector<2x8x1xf32> to vector<2x8x128xf32>
      %259 = arith.mulf %254, %258 : vector<2x8x128xf32>
      %260 = vector.shape_cast %238 : vector<1x128xf32> to vector<1x1x128xf32>
      %261 = vector.broadcast %260 : vector<1x1x128xf32> to vector<2x8x128xf32>
      %262 = arith.mulf %259, %261 : vector<2x8x128xf32>
      %263 = vector.shape_cast %239 : vector<1x128xf32> to vector<1x1x128xf32>
      %264 = vector.broadcast %263 : vector<1x1x128xf32> to vector<2x8x128xf32>
      %265 = arith.addf %262, %264 : vector<2x8x128xf32>
      %c0_97 = arith.constant 0 : index
      %c0_98 = arith.constant 0 : index
      %c0_99 = arith.constant 0 : index
      %266 = vector.load %arg16[%c0_97, %c0_98, %c0_99] : memref<2x8x128xf32, #tpu.memory_space<vmem>>, vector<2x8x128xf32>
      tpu.vector_store %arg16[%c0_97, %c0_98, %c0_99], %265 {strides = array<i32>} : memref<2x8x128xf32, #tpu.memory_space<vmem>>, vector<2x8x128xf32>,
    } else {
    }
    return
  }
  func.func @transform_0(%arg0: i32, %arg1: i32) -> (i32, i32, i32) {
    %c0_i32 = arith.constant 0 : i32
    %c0_i32_0 = arith.constant 0 : i32
    %c0_i32_1 = arith.constant 0 : i32
    return %arg0, %c0_i32, %c0_i32_0 : i32, i32, i32
  }
  func.func @transform_1(%arg0: i32, %arg1: i32) -> (i32, i32, i32) {
    %c0_i32 = arith.constant 0 : i32
    %c0_i32_0 = arith.constant 0 : i32
    %c0_i32_1 = arith.constant 0 : i32
    return %arg1, %c0_i32, %c0_i32_0 : i32, i32, i32
  }
  func.func @transform_2(%arg0: i32, %arg1: i32) -> (i32, i32, i32) {
    %c0_i32 = arith.constant 0 : i32
    %c0_i32_0 = arith.constant 0 : i32
    %c0_i32_1 = arith.constant 0 : i32
    return %arg1, %c0_i32, %c0_i32_0 : i32, i32, i32
  }
  func.func @transform_3(%arg0: i32, %arg1: i32) -> (i32, i32, i32) {
    %c0_i32 = arith.constant 0 : i32
    %c0_i32_0 = arith.constant 0 : i32
    %c0_i32_1 = arith.constant 0 : i32
    return %arg1, %c0_i32, %c0_i32_0 : i32, i32, i32
  }
  func.func @transform_4(%arg0: i32, %arg1: i32) -> (i32, i32, i32) {
    %c0_i32 = arith.constant 0 : i32
    %c0_i32_0 = arith.constant 0 : i32
    %c0_i32_1 = arith.constant 0 : i32
    return %arg1, %c0_i32, %c0_i32_0 : i32, i32, i32
  }
  func.func @transform_5(%arg0: i32, %arg1: i32) -> (i32, i32, i32) {
    %c0_i32 = arith.constant 0 : i32
    %c0_i32_0 = arith.constant 0 : i32
    %c0_i32_1 = arith.constant 0 : i32
    return %arg1, %c0_i32, %c0_i32_0 : i32, i32, i32
  }
  func.func @transform_6(%arg0: i32, %arg1: i32) -> (i32, i32, i32) {
    %c0_i32 = arith.constant 0 : i32
    %c0_i32_0 = arith.constant 0 : i32
    %c0_i32_1 = arith.constant 0 : i32
    return %arg1, %c0_i32, %c0_i32_0 : i32, i32, i32
  }
  func.func @transform_7(%arg0: i32, %arg1: i32) -> (i32, i32, i32) {
    %c0_i32 = arith.constant 0 : i32
    %c0_i32_0 = arith.constant 0 : i32
    %c0_i32_1 = arith.constant 0 : i32
    return %arg1, %c0_i32, %c0_i32_0 : i32, i32, i32
  }
  func.func @transform_8(%arg0: i32, %arg1: i32) -> (i32, i32, i32) {
    %c0_i32 = arith.constant 0 : i32
    %c0_i32_0 = arith.constant 0 : i32
    %c0_i32_1 = arith.constant 0 : i32
    return %arg1, %c0_i32, %c0_i32_0 : i32, i32, i32
  }
  func.func @transform_9(%arg0: i32, %arg1: i32) -> (i32, i32, i32) {
    %c0_i32 = arith.constant 0 : i32
    %c0_i32_0 = arith.constant 0 : i32
    %c0_i32_1 = arith.constant 0 : i32
    return %arg1, %c0_i32, %c0_i32_0 : i32, i32, i32
  }
  func.func @transform_10(%arg0: i32, %arg1: i32) -> (i32, i32, i32) {
    %c0_i32 = arith.constant 0 : i32
    %c0_i32_0 = arith.constant 0 : i32
    %c0_i32_1 = arith.constant 0 : i32
    return %arg1, %c0_i32, %c0_i32_0 : i32, i32, i32
  }
  func.func @transform_11(%arg0: i32, %arg1: i32) -> (i32, i32, i32) {
    %c0_i32 = arith.constant 0 : i32
    %c0_i32_0 = arith.constant 0 : i32
    %c0_i32_1 = arith.constant 0 : i32
    return %arg1, %c0_i32, %c0_i32_0 : i32, i32, i32
  }
  func.func @transform_12(%arg0: i32, %arg1: i32) -> (i32, i32) {
    %c0_i32 = arith.constant 0 : i32
    %c0_i32_0 = arith.constant 0 : i32
    %c0_i32_1 = arith.constant 0 : i32
    return %c0_i32, %c0_i32_0 : i32, i32
  }
  func.func @transform_13(%arg0: i32, %arg1: i32) -> (i32, i32) {
    %c0_i32 = arith.constant 0 : i32
    %c0_i32_0 = arith.constant 0 : i32
    %c0_i32_1 = arith.constant 0 : i32
    return %c0_i32, %c0_i32_0 : i32, i32
  }
  func.func @transform_14(%arg0: i32, %arg1: i32) -> (i32, i32, i32) {
    %c0_i32 = arith.constant 0 : i32
    %c0_i32_0 = arith.constant 0 : i32
    %c0_i32_1 = arith.constant 0 : i32
    return %arg0, %c0_i32, %c0_i32_0 : i32, i32, i32
  }
}

</mosaic_0001>

<llo_original>
// kernel: tpu_custom_call.1
$region0: #{tpu_custom_call.1}
  #allocation0 [shape = 'u32[]', space=smem, size = 0x4, offset = 0x4, fixed_abs, tag = 'smem constant byte address 0x4 - core index']
  #allocation1 [shape = 'u32[144,128]{1,0:T(1,128)}', space=vmem, size = 0x12000, scoped, tag = 'internal scratch']
  #allocation2 [shape = 'f32[2,8,128]{2,1,0:T(8,128)}', space=vmem, size = 0x2000, scoped, tag = 'scratch operand']
  #allocation3 [shape = 'f32[2,8,128]{2,1,0:T(8,128)}', space=vmem, size = 0x2000, scoped, tag = 'scratch operand']
  #allocation4 [shape = 'f32[2,11,128]{2,1,0:T(8,128)}', space=vmem, size = 0x4000, scoped, tag = 'scratch operand']
  #allocation5 [shape = 'f32[2,8,128]{2,1,0:T(8,128)}', space=vmem, size = 0x2000, scoped, tag = 'scratch operand']
  #allocation6 [shape = 'f32[2,8,128]{2,1,0:T(8,128)}', space=vmem, size = 0x2000, scoped, tag = 'scratch operand']
  %s0 = inlined_call_operand.hbm [shape: f32[2,8,128], index: 0, kind: input, shape index: {}]
  %s1 = inlined_call_operand.hbm [shape: f32[2,1,128], index: 1, kind: input, shape index: {}]
  %s2 = inlined_call_operand.vmem [shape: f32[2,1,128], index: 2, kind: input, shape index: {}]
  %s3 = inlined_call_operand.hbm [shape: bf16[2,128,256], index: 3, kind: input, shape index: {}]
  %s4 = inlined_call_operand.hbm [shape: f32[2,4,128], index: 4, kind: input, shape index: {}]
  %s5 = inlined_call_operand.vmem [shape: f32[2,1,128], index: 5, kind: input, shape index: {}]
  %s6 = inlined_call_operand.hbm [shape: bf16[2,128,128], index: 6, kind: input, shape index: {}]
  %s7 = inlined_call_operand.vmem [shape: bf16[2,2,128], index: 7, kind: input, shape index: {}]
  %s8 = inlined_call_operand.vmem [shape: f32[2,1,128], index: 8, kind: input, shape index: {}]
  %s9 = inlined_call_operand.hbm [shape: f32[2,16,128], index: 9, kind: input, shape index: {}]
  %s10 = inlined_call_operand.vmem [shape: f32[2,1,128], index: 10, kind: input, shape index: {}]
  %s11 = inlined_call_operand.hbm [shape: bf16[2,128,128], index: 11, kind: input, shape index: {}]
  %s12 = inlined_call_operand.vmem [shape: f32[1,128], index: 12, kind: input, shape index: {}]
  %s13 = inlined_call_operand.vmem [shape: f32[1,128], index: 13, kind: input, shape index: {}]
  %s14 = inlined_call_operand.hbm [shape: f32[2,8,128], index: 14, kind: output, shape index: {}]
  %s15 = sld [smem:[#allocation0]]
  $region125: #{tpu_custom_call.1} parent=0
    _
  %s17 = ssub.s32 1, %s15
  %s18 = scalar_select 0, %s17, %s15
  $region1: #{tpu_custom_call.1} parent=0
    #allocation7 [shape = 'u8[8192]{0}', space=vmem, size = 0x2000, scoped, tag = 'input window, operand 0, single buffered']
    #allocation8 [shape = 's32[2]{0}', space=sflag, size = 0x8, scoped, tag = 'scoped memory for tpu_custom_call.1']
    #allocation9 [shape = 's32[2]{0}', space=sflag, size = 0x8, scoped, tag = 'scoped memory for tpu_custom_call.1']
    #allocation10 [shape = 'u8[1024]{0}', space=vmem, size = 0x400, scoped, tag = 'input window, operand 1']
    #allocation11 [shape = 's32[2]{0}', space=sflag, size = 0x8, scoped, tag = 'scoped memory for tpu_custom_call.1']
    #allocation12 [shape = 'u8[131072]{0}', space=vmem, size = 0x20000, scoped, tag = 'input window, operand 3']
    #allocation13 [shape = 'u8[4096]{0}', space=vmem, size = 0x1000, scoped, tag = 'input window, operand 4']
    #allocation14 [shape = 's32[2]{0}', space=sflag, size = 0x8, scoped, tag = 'scoped memory for tpu_custom_call.1']
    #allocation15 [shape = 'u8[65536]{0}', space=vmem, size = 0x10000, scoped, tag = 'input window, operand 6']
    #allocation16 [shape = 'u8[16384]{0}', space=vmem, size = 0x4000, scoped, tag = 'input window, operand 9']
    #allocation17 [shape = 's32[2]{0}', space=sflag, size = 0x8, scoped, tag = 'scoped memory for tpu_custom_call.1']
    #allocation18 [shape = 'u8[65536]{0}', space=vmem, size = 0x10000, scoped, tag = 'input window, operand 11']
    #allocation19 [shape = 'u8[8192]{0}', space=vmem, size = 0x2000, scoped, tag = 'output window, operand 0, single buffered']
    %19 = vsyncpa [#allocation8], 0
    %20 = vsyncpa [#allocation11], 0
    %s21 = scalar_lea.sflag [#allocation11], 1
    %22 = vsyncpa %s21, 0
    %23 = vsyncpa [#allocation14], 0
    %s24 = scalar_lea.sflag [#allocation14], 1
    %25 = vsyncpa %s24, 0
    %26 = vsyncpa [#allocation17], 0
    %s27 = scalar_lea.sflag [#allocation17], 1
    %28 = vsyncpa %s27, 0
    %29 = vsyncpa [#allocation9], 0
    loop: start=0, step=1, limit=4
    $region2: #{tpu_custom_call.1} parent=1 // loop_pre_header
      _
    $region3: #{tpu_custom_call.1} parent=1 // loop_header
      %s31 = sphi 0, %s35
      %p32 = scmp.ge.s32.totalorder %s31, 4
      %s38 = sphi 0, %s50
      %s39 = sphi 0, %s46
      %s40 = sphi 0, %s38
      %s41 = sphi 0, %s39
      %s42 = sphi 0, %s40
      %s43 = sphi 0, %s41
      %s53 = sphi 0, %s55
      %s56 = sphi 0, %s53
      %s57 = sphi 0, %s56
      %s73 = sphi 0, %s57
      %s79 = sphi 0, %s81
      %s82 = sphi 0, %s79
      %s83 = sphi 0, %s82
      %s99 = sphi 0, %s83
      %s105 = sphi 0, %s107
      %s108 = sphi 0, %s105
      %s109 = sphi 0, %s108
      %s125 = sphi 0, %s109
      %s131 = sphi 0, %s133
      %s134 = sphi 0, %s131
      %s135 = sphi 0, %s134
      %s151 = sphi 0, %s135
      %s157 = sphi 0, %s159
      %s160 = sphi 0, %s157
      %s161 = sphi 0, %s160
      %s177 = sphi 0, %s161
      %s183 = sphi 0, %s185
      %s186 = sphi 0, %s183
      %s187 = sphi 0, %s186
      %s203 = sphi 0, %s187
      %s209 = sphi 0, %s211
      %s212 = sphi 0, %s209
      %s213 = sphi 0, %s212
      %s229 = sphi 0, %s213
      %s235 = sphi 0, %s237
      %s238 = sphi 0, %s235
      %s239 = sphi 0, %s238
      %s255 = sphi 0, %s239
      %s261 = sphi 0, %s263
      %s264 = sphi 0, %s261
      %s265 = sphi 0, %s264
      %s281 = sphi 0, %s265
      %s287 = sphi 0, %s289
      %s290 = sphi 0, %s287
      %s291 = sphi 0, %s290
      %s307 = sphi 0, %s291
      %s313 = sphi 0, %s315
      %s316 = sphi 0, %s313
      %s317 = sphi 0, %s316
      %s333 = sphi 0, %s317
      %s339 = sphi 0, %s341
      %s342 = sphi 0, %s339
      %s343 = sphi 0, %s342
      %s359 = sphi 0, %s343
      %s363 = sphi 0, %s363
      %s365 = sphi 0, %s363
      %s366 = sphi 0, %s365
      %s380 = sphi 0, %s366
      %s384 = sphi 0, %s384
      %s386 = sphi 0, %s384
      %s387 = sphi 0, %s386
      %s401 = sphi 0, %s387
      %s407 = sphi 0, %s409
      %s410 = sphi 0, %s407
      %s411 = sphi 0, %s410
      %s427 = sphi 0, %s411
    $region4: #{tpu_custom_call.1} parent=1 // loop_header_branch
      %34 = sbr.rel (%p32) target = $region8
    $region5: #{tpu_custom_call.1} parent=1 // loop_body
      %s36 = ssub.s32 %s31, 1
      %s37 = ssub.s32 %s31, 2
      %s44 = sadd.s32 1, %s39
      %p45 = scmp.ge.s32.totalorder %s44, 2
      %s46 = scalar_select %p45, 0, %s44
      %s47 = sadd.s32 1, %s38
      %s48 = scalar_select %p45, %s47, %s38
      %p49 = scmp.ge.s32.totalorder %s48, 1
      %s50 = scalar_select %p49, 0, %s48
      %s51 = ssub.s32 %s38, %s50
      %p52 = scmp.eq.s32.totalorder %s51, 0
      %s54 = sadd.s32 %s53, 1
      %s55 = scalar_select %p52, %s53, %s54
      %p58 = pneg %p52
      %p59 = scmp.eq.s32.totalorder %s31, 1
      %p60 = por %p58, %p59
      %p61 = scmp.ne.s32.totalorder %s53, %s56
      %p62 = scmp.eq.s32.totalorder %s31, 0
      %p63 = por %p61, %p62
      %p64 = scmp.ne.s32.totalorder %s53, %s56
      %p65 = scmp.eq.s32.totalorder %s36, 1
      %p66 = por %p64, %p65
      %p67 = scmp.ne.s32.totalorder %s56, %s57
      %p68 = scmp.eq.s32.totalorder %s36, 0
      %p69 = por %p67, %p68
      %p70 = scmp.ne.s32.totalorder %s56, %s57
      %p71 = scmp.eq.s32.totalorder %s37, 1
      %p72 = por %p70, %p71
      %p74 = scmp.ne.s32.totalorder %s57, %s73
      %p75 = scmp.eq.s32.totalorder %s37, 0
      %p76 = por %p74, %p75
      %s77 = ssub.s32 %s39, %s46
      %p78 = scmp.eq.s32.totalorder %s77, 0
      %s80 = sadd.s32 %s79, 1
      %s81 = scalar_select %p78, %s79, %s80
      %p84 = pneg %p78
      %p85 = scmp.eq.s32.totalorder %s31, 1
      %p86 = por %p84, %p85
      %p87 = scmp.ne.s32.totalorder %s79, %s82
      %p88 = scmp.eq.s32.totalorder %s31, 0
      %p89 = por %p87, %p88
      %p90 = scmp.ne.s32.totalorder %s79, %s82
      %p91 = scmp.eq.s32.totalorder %s36, 1
      %p92 = por %p90, %p91
      %p93 = scmp.ne.s32.totalorder %s82, %s83
      %p94 = scmp.eq.s32.totalorder %s36, 0
      %p95 = por %p93, %p94
      %p96 = scmp.ne.s32.totalorder %s82, %s83
      %p97 = scmp.eq.s32.totalorder %s37, 1
      %p98 = por %p96, %p97
      %p100 = scmp.ne.s32.totalorder %s83, %s99
      %p101 = scmp.eq.s32.totalorder %s37, 0
      %p102 = por %p100, %p101
      %s103 = ssub.s32 %s39, %s46
      %p104 = scmp.eq.s32.totalorder %s103, 0
      %s106 = sadd.s32 %s105, 1
      %s107 = scalar_select %p104, %s105, %s106
      %p110 = pneg %p104
      %p111 = scmp.eq.s32.totalorder %s31, 1
      %p112 = por %p110, %p111
      %p113 = scmp.ne.s32.totalorder %s105, %s108
      %p114 = scmp.eq.s32.totalorder %s31, 0
      %p115 = por %p113, %p114
      %p116 = scmp.ne.s32.totalorder %s105, %s108
      %p117 = scmp.eq.s32.totalorder %s36, 1
      %p118 = por %p116, %p117
      %p119 = scmp.ne.s32.totalorder %s108, %s109
      %p120 = scmp.eq.s32.totalorder %s36, 0
      %p121 = por %p119, %p120
      %p122 = scmp.ne.s32.totalorder %s108, %s109
      %p123 = scmp.eq.s32.totalorder %s37, 1
      %p124 = por %p122, %p123
      %p126 = scmp.ne.s32.totalorder %s109, %s125
      %p127 = scmp.eq.s32.totalorder %s37, 0
      %p128 = por %p126, %p127
      %s129 = ssub.s32 %s39, %s46
      %p130 = scmp.eq.s32.totalorder %s129, 0
      %s132 = sadd.s32 %s131, 1
      %s133 = scalar_select %p130, %s131, %s132
      %p136 = pneg %p130
      %p137 = scmp.eq.s32.totalorder %s31, 1
      %p138 = por %p136, %p137
      %p139 = scmp.ne.s32.totalorder %s131, %s134
      %p140 = scmp.eq.s32.totalorder %s31, 0
      %p141 = por %p139, %p140
      %p142 = scmp.ne.s32.totalorder %s131, %s134
      %p143 = scmp.eq.s32.totalorder %s36, 1
      %p144 = por %p142, %p143
      %p145 = scmp.ne.s32.totalorder %s134, %s135
      %p146 = scmp.eq.s32.totalorder %s36, 0
      %p147 = por %p145, %p146
      %p148 = scmp.ne.s32.totalorder %s134, %s135
      %p149 = scmp.eq.s32.totalorder %s37, 1
      %p150 = por %p148, %p149
      %p152 = scmp.ne.s32.totalorder %s135, %s151
      %p153 = scmp.eq.s32.totalorder %s37, 0
      %p154 = por %p152, %p153
      %s155 = ssub.s32 %s39, %s46
      %p156 = scmp.eq.s32.totalorder %s155, 0
      %s158 = sadd.s32 %s157, 1
      %s159 = scalar_select %p156, %s157, %s158
      %p162 = pneg %p156
      %p163 = scmp.eq.s32.totalorder %s31, 1
      %p164 = por %p162, %p163
      %p165 = scmp.ne.s32.totalorder %s157, %s160
      %p166 = scmp.eq.s32.totalorder %s31, 0
      %p167 = por %p165, %p166
      %p168 = scmp.ne.s32.totalorder %s157, %s160
      %p169 = scmp.eq.s32.totalorder %s36, 1
      %p170 = por %p168, %p169
      %p171 = scmp.ne.s32.totalorder %s160, %s161
      %p172 = scmp.eq.s32.totalorder %s36, 0
      %p173 = por %p171, %p172
      %p174 = scmp.ne.s32.totalorder %s160, %s161
      %p175 = scmp.eq.s32.totalorder %s37, 1
      %p176 = por %p174, %p175
      %p178 = scmp.ne.s32.totalorder %s161, %s177
      %p179 = scmp.eq.s32.totalorder %s37, 0
      %p180 = por %p178, %p179
      %s181 = ssub.s32 %s39, %s46
      %p182 = scmp.eq.s32.totalorder %s181, 0
      %s184 = sadd.s32 %s183, 1
      %s185 = scalar_select %p182, %s183, %s184
      %p188 = pneg %p182
      %p189 = scmp.eq.s32.totalorder %s31, 1
      %p190 = por %p188, %p189
      %p191 = scmp.ne.s32.totalorder %s183, %s186
      %p192 = scmp.eq.s32.totalorder %s31, 0
      %p193 = por %p191, %p192
      %p194 = scmp.ne.s32.totalorder %s183, %s186
      %p195 = scmp.eq.s32.totalorder %s36, 1
      %p196 = por %p194, %p195
      %p197 = scmp.ne.s32.totalorder %s186, %s187
      %p198 = scmp.eq.s32.totalorder %s36, 0
      %p199 = por %p197, %p198
      %p200 = scmp.ne.s32.totalorder %s186, %s187
      %p201 = scmp.eq.s32.totalorder %s37, 1
      %p202 = por %p200, %p201
      %p204 = scmp.ne.s32.totalorder %s187, %s203
      %p205 = scmp.eq.s32.totalorder %s37, 0
      %p206 = por %p204, %p205
      %s207 = ssub.s32 %s39, %s46
      %p208 = scmp.eq.s32.totalorder %s207, 0
      %s210 = sadd.s32 %s209, 1
      %s211 = scalar_select %p208, %s209, %s210
      %p214 = pneg %p208
      %p215 = scmp.eq.s32.totalorder %s31, 1
      %p216 = por %p214, %p215
      %p217 = scmp.ne.s32.totalorder %s209, %s212
      %p218 = scmp.eq.s32.totalorder %s31, 0
      %p219 = por %p217, %p218
      %p220 = scmp.ne.s32.totalorder %s209, %s212
      %p221 = scmp.eq.s32.totalorder %s36, 1
      %p222 = por %p220, %p221
      %p223 = scmp.ne.s32.totalorder %s212, %s213
      %p224 = scmp.eq.s32.totalorder %s36, 0
      %p225 = por %p223, %p224
      %p226 = scmp.ne.s32.totalorder %s212, %s213
      %p227 = scmp.eq.s32.totalorder %s37, 1
      %p228 = por %p226, %p227
      %p230 = scmp.ne.s32.totalorder %s213, %s229
      %p231 = scmp.eq.s32.totalorder %s37, 0
      %p232 = por %p230, %p231
      %s233 = ssub.s32 %s39, %s46
      %p234 = scmp.eq.s32.totalorder %s233, 0
      %s236 = sadd.s32 %s235, 1
      %s237 = scalar_select %p234, %s235, %s236
      %p240 = pneg %p234
      %p241 = scmp.eq.s32.totalorder %s31, 1
      %p242 = por %p240, %p241
      %p243 = scmp.ne.s32.totalorder %s235, %s238
      %p244 = scmp.eq.s32.totalorder %s31, 0
      %p245 = por %p243, %p244
      %p246 = scmp.ne.s32.totalorder %s235, %s238
      %p247 = scmp.eq.s32.totalorder %s36, 1
      %p248 = por %p246, %p247
      %p249 = scmp.ne.s32.totalorder %s238, %s239
      %p250 = scmp.eq.s32.totalorder %s36, 0
      %p251 = por %p249, %p250
      %p252 = scmp.ne.s32.totalorder %s238, %s239
      %p253 = scmp.eq.s32.totalorder %s37, 1
      %p254 = por %p252, %p253
      %p256 = scmp.ne.s32.totalorder %s239, %s255
      %p257 = scmp.eq.s32.totalorder %s37, 0
      %p258 = por %p256, %p257
      %s259 = ssub.s32 %s39, %s46
      %p260 = scmp.eq.s32.totalorder %s259, 0
      %s262 = sadd.s32 %s261, 1
      %s263 = scalar_select %p260, %s261, %s262
      %p266 = pneg %p260
      %p267 = scmp.eq.s32.totalorder %s31, 1
      %p268 = por %p266, %p267
      %p269 = scmp.ne.s32.totalorder %s261, %s264
      %p270 = scmp.eq.s32.totalorder %s31, 0
      %p271 = por %p269, %p270
      %p272 = scmp.ne.s32.totalorder %s261, %s264
      %p273 = scmp.eq.s32.totalorder %s36, 1
      %p274 = por %p272, %p273
      %p275 = scmp.ne.s32.totalorder %s264, %s265
      %p276 = scmp.eq.s32.totalorder %s36, 0
      %p277 = por %p275, %p276
      %p278 = scmp.ne.s32.totalorder %s264, %s265
      %p279 = scmp.eq.s32.totalorder %s37, 1
      %p280 = por %p278, %p279
      %p282 = scmp.ne.s32.totalorder %s265, %s281
      %p283 = scmp.eq.s32.totalorder %s37, 0
      %p284 = por %p282, %p283
      %s285 = ssub.s32 %s39, %s46
      %p286 = scmp.eq.s32.totalorder %s285, 0
      %s288 = sadd.s32 %s287, 1
      %s289 = scalar_select %p286, %s287, %s288
      %p292 = pneg %p286
      %p293 = scmp.eq.s32.totalorder %s31, 1
      %p294 = por %p292, %p293
      %p295 = scmp.ne.s32.totalorder %s287, %s290
      %p296 = scmp.eq.s32.totalorder %s31, 0
      %p297 = por %p295, %p296
      %p298 = scmp.ne.s32.totalorder %s287, %s290
      %p299 = scmp.eq.s32.totalorder %s36, 1
      %p300 = por %p298, %p299
      %p301 = scmp.ne.s32.totalorder %s290, %s291
      %p302 = scmp.eq.s32.totalorder %s36, 0
      %p303 = por %p301, %p302
      %p304 = scmp.ne.s32.totalorder %s290, %s291
      %p305 = scmp.eq.s32.totalorder %s37, 1
      %p306 = por %p304, %p305
      %p308 = scmp.ne.s32.totalorder %s291, %s307
      %p309 = scmp.eq.s32.totalorder %s37, 0
      %p310 = por %p308, %p309
      %s311 = ssub.s32 %s39, %s46
      %p312 = scmp.eq.s32.totalorder %s311, 0
      %s314 = sadd.s32 %s313, 1
      %s315 = scalar_select %p312, %s313, %s314
      %p318 = pneg %p312
      %p319 = scmp.eq.s32.totalorder %s31, 1
      %p320 = por %p318, %p319
      %p321 = scmp.ne.s32.totalorder %s313, %s316
      %p322 = scmp.eq.s32.totalorder %s31, 0
      %p323 = por %p321, %p322
      %p324 = scmp.ne.s32.totalorder %s313, %s316
      %p325 = scmp.eq.s32.totalorder %s36, 1
      %p326 = por %p324, %p325
      %p327 = scmp.ne.s32.totalorder %s316, %s317
      %p328 = scmp.eq.s32.totalorder %s36, 0
      %p329 = por %p327, %p328
      %p330 = scmp.ne.s32.totalorder %s316, %s317
      %p331 = scmp.eq.s32.totalorder %s37, 1
      %p332 = por %p330, %p331
      %p334 = scmp.ne.s32.totalorder %s317, %s333
      %p335 = scmp.eq.s32.totalorder %s37, 0
      %p336 = por %p334, %p335
      %s337 = ssub.s32 %s39, %s46
      %p338 = scmp.eq.s32.totalorder %s337, 0
      %s340 = sadd.s32 %s339, 1
      %s341 = scalar_select %p338, %s339, %s340
      %p344 = pneg %p338
      %p345 = scmp.eq.s32.totalorder %s31, 1
      %p346 = por %p344, %p345
      %p347 = scmp.ne.s32.totalorder %s339, %s342
      %p348 = scmp.eq.s32.totalorder %s31, 0
      %p349 = por %p347, %p348
      %p350 = scmp.ne.s32.totalorder %s339, %s342
      %p351 = scmp.eq.s32.totalorder %s36, 1
      %p352 = por %p350, %p351
      %p353 = scmp.ne.s32.totalorder %s342, %s343
      %p354 = scmp.eq.s32.totalorder %s36, 0
      %p355 = por %p353, %p354
      %p356 = scmp.ne.s32.totalorder %s342, %s343
      %p357 = scmp.eq.s32.totalorder %s37, 1
      %p358 = por %p356, %p357
      %p360 = scmp.ne.s32.totalorder %s343, %s359
      %p361 = scmp.eq.s32.totalorder %s37, 0
      %p362 = por %p360, %p361
      %s364 = sadd.s32 %s363, 1
      %p367 = scmp.eq.s32.totalorder %s31, 1
      %p368 = scmp.ne.s32.totalorder %s363, %s365
      %p369 = scmp.eq.s32.totalorder %s31, 0
      %p370 = por %p368, %p369
      %p371 = scmp.ne.s32.totalorder %s363, %s365
      %p372 = scmp.eq.s32.totalorder %s36, 1
      %p373 = por %p371, %p372
      %p374 = scmp.ne.s32.totalorder %s365, %s366
      %p375 = scmp.eq.s32.totalorder %s36, 0
      %p376 = por %p374, %p375
      %p377 = scmp.ne.s32.totalorder %s365, %s366
      %p378 = scmp.eq.s32.totalorder %s37, 1
      %p379 = por %p377, %p378
      %p381 = scmp.ne.s32.totalorder %s366, %s380
      %p382 = scmp.eq.s32.totalorder %s37, 0
      %p383 = por %p381, %p382
      %s385 = sadd.s32 %s384, 1
      %p388 = scmp.eq.s32.totalorder %s31, 1
      %p389 = scmp.ne.s32.totalorder %s384, %s386
      %p390 = scmp.eq.s32.totalorder %s31, 0
      %p391 = por %p389, %p390
      %p392 = scmp.ne.s32.totalorder %s384, %s386
      %p393 = scmp.eq.s32.totalorder %s36, 1
      %p394 = por %p392, %p393
      %p395 = scmp.ne.s32.totalorder %s386, %s387
      %p396 = scmp.eq.s32.totalorder %s36, 0
      %p397 = por %p395, %p396
      %p398 = scmp.ne.s32.totalorder %s386, %s387
      %p399 = scmp.eq.s32.totalorder %s37, 1
      %p400 = por %p398, %p399
      %p402 = scmp.ne.s32.totalorder %s387, %s401
      %p403 = scmp.eq.s32.totalorder %s37, 0
      %p404 = por %p402, %p403
      %s405 = ssub.s32 %s38, %s50
      %p406 = scmp.eq.s32.totalorder %s405, 0
      %s408 = sadd.s32 %s407, 1
      %s409 = scalar_select %p406, %s407, %s408
      %p412 = pneg %p406
      %p413 = scmp.eq.s32.totalorder %s31, 1
      %p414 = por %p412, %p413
      %p415 = scmp.ne.s32.totalorder %s407, %s410
      %p416 = scmp.eq.s32.totalorder %s31, 0
      %p417 = por %p415, %p416
      %p418 = scmp.ne.s32.totalorder %s407, %s410
      %p419 = scmp.eq.s32.totalorder %s36, 1
      %p420 = por %p418, %p419
      %p421 = scmp.ne.s32.totalorder %s410, %s411
      %p422 = scmp.eq.s32.totalorder %s36, 0
      %p423 = por %p421, %p422
      %p424 = scmp.ne.s32.totalorder %s410, %s411
      %p425 = scmp.eq.s32.totalorder %s37, 1
      %p426 = por %p424, %p425
      %p428 = scmp.ne.s32.totalorder %s411, %s427
      %p429 = scmp.eq.s32.totalorder %s37, 0
      %p430 = por %p428, %p429
      %p431 = scmp.le.s32.totalorder 1, %s31
      %p432 = scmp.lt.s32.totalorder %s31, 3
      %p433 = pnand %p431, %p432
      %p434 = pneg %p433
      // Predicated region
      $region9: #{tpu_custom_call.1} parent=5 // pred_check
        _
      $region10: #{tpu_custom_call.1} parent=5 // pred_check_branch
        %436 = sbr.rel (%p433) target = $region12
      $region11: #{tpu_custom_call.1} parent=5 // pred_region
        %s437 = ssub.s32 %s31, 1
        // Predicated region
        $region13: #{tpu_custom_call.1} parent=11 // pred_check
          %p438 = pneg %p69
        $region14: #{tpu_custom_call.1} parent=11 // pred_check_branch
          %440 = sbr.rel (%p438) target = $region16
        $region15: #{tpu_custom_call.1} parent=11 // pred_region
          %s441 = smul.u32 2, %s40
          %s443 = ssub.s32 256, 256
          %444 = vsyncadd [#allocation8], %s443
          %s445 = smul.addr %s441, 128
          %s446 = scalar_lea.hbm %s0, %s445
          %s447 = sshll.u32 [#allocation7], 4
          %s448 = int_to_ptr.vmem [resolvable:$true] %s447
          %453 = dma.hbm_to_vmem [thread:$0]  %s446, 256, %s448, [#allocation8], 128, 128, 8
        $region16: #{tpu_custom_call.1} parent=11 // pred_fallthru
          _
        // Predicated region
        $region17: #{tpu_custom_call.1} parent=11 // pred_check
          %p454 = pneg %p376
        $region18: #{tpu_custom_call.1} parent=11 // pred_check_branch
          %456 = sbr.rel (%p454) target = $region20
        $region19: #{tpu_custom_call.1} parent=11 // pred_region
          _
        $region20: #{tpu_custom_call.1} parent=11 // pred_fallthru
          _
        // Predicated region
        $region21: #{tpu_custom_call.1} parent=11 // pred_check
          %p457 = pneg %p397
        $region22: #{tpu_custom_call.1} parent=11 // pred_check_branch
          %459 = sbr.rel (%p457) target = $region24
        $region23: #{tpu_custom_call.1} parent=11 // pred_region
          _
        $region24: #{tpu_custom_call.1} parent=11 // pred_fallthru
          _
      $region12: #{tpu_custom_call.1} parent=5 // pred_fallthru
        _
      %p460 = scmp.lt.s32.totalorder %s31, 2
      // Predicated region
      $region25: #{tpu_custom_call.1} parent=5 // pred_check
        %p461 = pneg %p460
      $region26: #{tpu_custom_call.1} parent=5 // pred_check_branch
        %463 = sbr.rel (%p461) target = $region28
      $region27: #{tpu_custom_call.1} parent=5 // pred_region
        // Predicated region
        $region29: #{tpu_custom_call.1} parent=27 // pred_check
          %p464 = pneg %p89
        $region30: #{tpu_custom_call.1} parent=27 // pred_check_branch
          %466 = sbr.rel (%p464) target = $region32
        $region31: #{tpu_custom_call.1} parent=27 // pred_region
          %s467 = sand.u32 %s31, 1
          %s468 = scalar_lea.sflag [#allocation11], %s467
          %s469 = sand.u32 %s79, 1
          %s470 = scalar_lea.vmem [#allocation10], %s469
          %s472 = ssub.s32 16, 16
          %473 = vsyncadd %s468, %s472
          %s474 = smul.addr %s39, 16
          %s475 = scalar_lea.hbm %s1, %s474
          %s477 = sshll.u32 %s470, 4
          %s478 = int_to_ptr.vmem [resolvable:$true] %s477
          %480 = dma.hbm_to_vmem [thread:$0]  %s475, 16, %s478, %s468
        $region32: #{tpu_custom_call.1} parent=27 // pred_fallthru
          _
        // Predicated region
        $region33: #{tpu_custom_call.1} parent=27 // pred_check
          %p481 = pneg %p115
        $region34: #{tpu_custom_call.1} parent=27 // pred_check_branch
          %483 = sbr.rel (%p481) target = $region36
        $region35: #{tpu_custom_call.1} parent=27 // pred_region
          %p484 = scmp.lt.s32.totalorder %s39, 1
          %s485 = scalar_select %p484, %s39, 1
          %s486 = scalar_lea.vmem %s2, %s485
        $region36: #{tpu_custom_call.1} parent=27 // pred_fallthru
          _
        // Predicated region
        $region37: #{tpu_custom_call.1} parent=27 // pred_check
          %p487 = pneg %p141
        $region38: #{tpu_custom_call.1} parent=27 // pred_check_branch
          %489 = sbr.rel (%p487) target = $region40
        $region39: #{tpu_custom_call.1} parent=27 // pred_region
          %s490 = sand.u32 %s31, 1
          %s491 = scalar_lea.sflag [#allocation11], %s490
          %s492 = sand.u32 %s131, 1
          %s493 = smul.addr %s492, 128
          %s494 = scalar_lea.vmem [#allocation12], %s493
          %s496 = ssub.s32 2048, 2048
          %497 = vsyncadd %s491, %s496
          %s498 = smul.addr %s39, 32
          %s499 = smul.addr %s498, 64
          %s500 = scalar_lea.hbm %s3, %s499
          %s501 = sshll.u32 %s494, 4
          %s502 = int_to_ptr.vmem [resolvable:$true] %s501
          %507 = dma.hbm_to_vmem [thread:$0]  %s500, 2048, %s502, %s491, 128, 128, 8
        $region40: #{tpu_custom_call.1} parent=27 // pred_fallthru
          _
        // Predicated region
        $region41: #{tpu_custom_call.1} parent=27 // pred_check
          %p508 = pneg %p167
        $region42: #{tpu_custom_call.1} parent=27 // pred_check_branch
          %510 = sbr.rel (%p508) target = $region44
        $region43: #{tpu_custom_call.1} parent=27 // pred_region
          %s511 = sand.u32 %s31, 1
          %s512 = scalar_lea.sflag [#allocation14], %s511
          %s513 = sand.u32 %s157, 1
          %s514 = smul.addr %s513, 4
          %s515 = scalar_lea.vmem [#allocation13], %s514
          %s517 = ssub.s32 64, 64
          %518 = vsyncadd %s512, %s517
          %s519 = smul.addr %s39, 64
          %s520 = scalar_lea.hbm %s4, %s519
          %s522 = sshll.u32 %s515, 4
          %s523 = int_to_ptr.vmem [resolvable:$true] %s522
          %525 = dma.hbm_to_vmem [thread:$0]  %s520, 64, %s523, %s512
        $region44: #{tpu_custom_call.1} parent=27 // pred_fallthru
          _
        // Predicated region
        $region45: #{tpu_custom_call.1} parent=27 // pred_check
          %p526 = pneg %p193
        $region46: #{tpu_custom_call.1} parent=27 // pred_check_branch
          %528 = sbr.rel (%p526) target = $region48
        $region47: #{tpu_custom_call.1} parent=27 // pred_region
          %p529 = scmp.lt.s32.totalorder %s39, 1
          %s530 = scalar_select %p529, %s39, 1
          %s531 = scalar_lea.vmem %s5, %s530
        $region48: #{tpu_custom_call.1} parent=27 // pred_fallthru
          _
        // Predicated region
        $region49: #{tpu_custom_call.1} parent=27 // pred_check
          %p532 = pneg %p219
        $region50: #{tpu_custom_call.1} parent=27 // pred_check_branch
          %534 = sbr.rel (%p532) target = $region52
        $region51: #{tpu_custom_call.1} parent=27 // pred_region
          %s535 = sand.u32 %s31, 1
          %s536 = scalar_lea.sflag [#allocation14], %s535
          %s537 = sand.u32 %s209, 1
          %s538 = smul.addr %s537, 64
          %s539 = scalar_lea.vmem [#allocation15], %s538
          %s541 = ssub.s32 1024, 1024
          %542 = vsyncadd %s536, %s541
          %s543 = smul.addr %s39, 16
          %s544 = smul.addr %s543, 64
          %s545 = scalar_lea.hbm %s6, %s544
          %s546 = sshll.u32 %s539, 4
          %s547 = int_to_ptr.vmem [resolvable:$true] %s546
          %552 = dma.hbm_to_vmem [thread:$0]  %s545, 1024, %s547, %s536, 64, 64, 4
        $region52: #{tpu_custom_call.1} parent=27 // pred_fallthru
          _
        // Predicated region
        $region53: #{tpu_custom_call.1} parent=27 // pred_check
          %p553 = pneg %p245
        $region54: #{tpu_custom_call.1} parent=27 // pred_check_branch
          %555 = sbr.rel (%p553) target = $region56
        $region55: #{tpu_custom_call.1} parent=27 // pred_region
          %p556 = scmp.lt.s32.totalorder %s39, 1
          %s557 = scalar_select %p556, %s39, 1
          %s558 = scalar_lea.vmem %s7, %s557
        $region56: #{tpu_custom_call.1} parent=27 // pred_fallthru
          _
        // Predicated region
        $region57: #{tpu_custom_call.1} parent=27 // pred_check
          %p559 = pneg %p271
        $region58: #{tpu_custom_call.1} parent=27 // pred_check_branch
          %561 = sbr.rel (%p559) target = $region60
        $region59: #{tpu_custom_call.1} parent=27 // pred_region
          %p562 = scmp.lt.s32.totalorder %s39, 1
          %s563 = scalar_select %p562, %s39, 1
          %s564 = scalar_lea.vmem %s8, %s563
        $region60: #{tpu_custom_call.1} parent=27 // pred_fallthru
          _
        // Predicated region
        $region61: #{tpu_custom_call.1} parent=27 // pred_check
          %p565 = pneg %p297
        $region62: #{tpu_custom_call.1} parent=27 // pred_check_branch
          %567 = sbr.rel (%p565) target = $region64
        $region63: #{tpu_custom_call.1} parent=27 // pred_region
          %s568 = sand.u32 %s31, 1
          %s569 = scalar_lea.sflag [#allocation17], %s568
          %s570 = sand.u32 %s287, 1
          %s571 = smul.addr %s570, 16
          %s572 = scalar_lea.vmem [#allocation16], %s571
          %s574 = ssub.s32 256, 256
          %575 = vsyncadd %s569, %s574
          %s576 = smul.addr %s39, 2
          %s577 = smul.addr %s576, 128
          %s578 = scalar_lea.hbm %s9, %s577
          %s579 = sshll.u32 %s572, 4
          %s580 = int_to_ptr.vmem [resolvable:$true] %s579
          %585 = dma.hbm_to_vmem [thread:$0]  %s578, 256, %s580, %s569, 128, 128, 8
        $region64: #{tpu_custom_call.1} parent=27 // pred_fallthru
          _
        // Predicated region
        $region65: #{tpu_custom_call.1} parent=27 // pred_check
          %p586 = pneg %p323
        $region66: #{tpu_custom_call.1} parent=27 // pred_check_branch
          %588 = sbr.rel (%p586) target = $region68
        $region67: #{tpu_custom_call.1} parent=27 // pred_region
          %p589 = scmp.lt.s32.totalorder %s39, 1
          %s590 = scalar_select %p589, %s39, 1
          %s591 = scalar_lea.vmem %s10, %s590
        $region68: #{tpu_custom_call.1} parent=27 // pred_fallthru
          _
        // Predicated region
        $region69: #{tpu_custom_call.1} parent=27 // pred_check
          %p592 = pneg %p349
        $region70: #{tpu_custom_call.1} parent=27 // pred_check_branch
          %594 = sbr.rel (%p592) target = $region72
        $region71: #{tpu_custom_call.1} parent=27 // pred_region
          %s595 = sand.u32 %s31, 1
          %s596 = scalar_lea.sflag [#allocation17], %s595
          %s597 = sand.u32 %s339, 1
          %s598 = smul.addr %s597, 64
          %s599 = scalar_lea.vmem [#allocation18], %s598
          %s601 = ssub.s32 1024, 1024
          %602 = vsyncadd %s596, %s601
          %s603 = smul.addr %s39, 16
          %s604 = smul.addr %s603, 64
          %s605 = scalar_lea.hbm %s11, %s604
          %s606 = sshll.u32 %s599, 4
          %s607 = int_to_ptr.vmem [resolvable:$true] %s606
          %612 = dma.hbm_to_vmem [thread:$0]  %s605, 1024, %s607, %s596, 64, 64, 4
        $region72: #{tpu_custom_call.1} parent=27 // pred_fallthru
          _
      $region28: #{tpu_custom_call.1} parent=5 // pred_fallthru
        _
      %p613 = scmp.le.s32.totalorder 1, %s31
      %p614 = scmp.lt.s32.totalorder %s31, 3
      %p615 = pnand %p613, %p614
      %p616 = pneg %p615
      // Predicated region
      $region73: #{tpu_custom_call.1} parent=5 // pred_check
        _
      $region74: #{tpu_custom_call.1} parent=5 // pred_check_branch
        %618 = sbr.rel (%p615) target = $region76
      $region75: #{tpu_custom_call.1} parent=5 // pred_region
        %s619 = ssub.s32 %s31, 1
        // Predicated region
        $region77: #{tpu_custom_call.1} parent=75 // pred_check
          %p620 = pneg %p69
        $region78: #{tpu_custom_call.1} parent=75 // pred_check_branch
          %622 = sbr.rel (%p620) target = $region80
        $region79: #{tpu_custom_call.1} parent=75 // pred_region
          %623 = dma.done [#allocation8], 256
        $region80: #{tpu_custom_call.1} parent=75 // pred_fallthru
          _
        %s624 = sand.u32 %s36, 1
        %s625 = scalar_lea.sflag [#allocation11], %s624
        %s626 = sand.u32 %s82, 1
        %s627 = scalar_lea.vmem [#allocation10], %s626
        // Predicated region
        $region81: #{tpu_custom_call.1} parent=75 // pred_check
          %p628 = pneg %p95
        $region82: #{tpu_custom_call.1} parent=75 // pred_check_branch
          %630 = sbr.rel (%p628) target = $region84
        $region83: #{tpu_custom_call.1} parent=75 // pred_region
          %631 = dma.done %s625, 16
        $region84: #{tpu_custom_call.1} parent=75 // pred_fallthru
          _
        %s632 = sand.u32 %s36, 1
        %s633 = scalar_lea.sflag [#allocation11], %s632
        %s634 = sand.u32 %s134, 1
        %s635 = smul.addr %s634, 128
        %s636 = scalar_lea.vmem [#allocation12], %s635
        // Predicated region
        $region85: #{tpu_custom_call.1} parent=75 // pred_check
          %p637 = pneg %p147
        $region86: #{tpu_custom_call.1} parent=75 // pred_check_branch
          %639 = sbr.rel (%p637) target = $region88
        $region87: #{tpu_custom_call.1} parent=75 // pred_region
          %640 = dma.done %s633, 2048
        $region88: #{tpu_custom_call.1} parent=75 // pred_fallthru
          _
        %s641 = sand.u32 %s36, 1
        %s642 = scalar_lea.sflag [#allocation14], %s641
        %s643 = sand.u32 %s160, 1
        %s644 = smul.addr %s643, 4
        %s645 = scalar_lea.vmem [#allocation13], %s644
        // Predicated region
        $region89: #{tpu_custom_call.1} parent=75 // pred_check
          %p646 = pneg %p173
        $region90: #{tpu_custom_call.1} parent=75 // pred_check_branch
          %648 = sbr.rel (%p646) target = $region92
        $region91: #{tpu_custom_call.1} parent=75 // pred_region
          %649 = dma.done %s642, 64
        $region92: #{tpu_custom_call.1} parent=75 // pred_fallthru
          _
        %s650 = sand.u32 %s36, 1
        %s651 = scalar_lea.sflag [#allocation14], %s650
        %s652 = sand.u32 %s212, 1
        %s653 = smul.addr %s652, 64
        %s654 = scalar_lea.vmem [#allocation15], %s653
        // Predicated region
        $region93: #{tpu_custom_call.1} parent=75 // pred_check
          %p655 = pneg %p225
        $region94: #{tpu_custom_call.1} parent=75 // pred_check_branch
          %657 = sbr.rel (%p655) target = $region96
        $region95: #{tpu_custom_call.1} parent=75 // pred_region
          %658 = dma.done %s651, 1024
        $region96: #{tpu_custom_call.1} parent=75 // pred_fallthru
          _
        %s659 = sand.u32 %s36, 1
        %s660 = scalar_lea.sflag [#allocation17], %s659
        %s661 = sand.u32 %s290, 1
        %s662 = smul.addr %s661, 16
        %s663 = scalar_lea.vmem [#allocation16], %s662
        // Predicated region
        $region97: #{tpu_custom_call.1} parent=75 // pred_check
          %p664 = pneg %p303
        $region98: #{tpu_custom_call.1} parent=75 // pred_check_branch
          %666 = sbr.rel (%p664) target = $region100
        $region99: #{tpu_custom_call.1} parent=75 // pred_region
          %667 = dma.done %s660, 256
        $region100: #{tpu_custom_call.1} parent=75 // pred_fallthru
          _
        %s668 = sand.u32 %s36, 1
        %s669 = scalar_lea.sflag [#allocation17], %s668
        %s670 = sand.u32 %s342, 1
        %s671 = smul.addr %s670, 64
        %s672 = scalar_lea.vmem [#allocation18], %s671
        // Predicated region
        $region101: #{tpu_custom_call.1} parent=75 // pred_check
          %p673 = pneg %p355
        $region102: #{tpu_custom_call.1} parent=75 // pred_check_branch
          %675 = sbr.rel (%p673) target = $region104
        $region103: #{tpu_custom_call.1} parent=75 // pred_region
          %676 = dma.done %s669, 1024
        $region104: #{tpu_custom_call.1} parent=75 // pred_fallthru
          _
        %p677 = pneg %p69
        %p678 = pneg %p66
        %s679 = sand.u32 %s36, 1
        %s680 = scalar_lea.sflag [#allocation11], %s679
        %s681 = sand.u32 %s82, 1
        %s682 = scalar_lea.vmem [#allocation10], %s681
        %p683 = pneg %p95
        %p684 = pneg %p92
        %p685 = scmp.lt.s32.totalorder %s41, 1
        %s686 = scalar_select %p685, %s41, 1
        %s687 = scalar_lea.vmem %s2, %s686
        %p688 = pneg %p121
        %p689 = pneg %p118
        %s690 = sand.u32 %s36, 1
        %s691 = scalar_lea.sflag [#allocation11], %s690
        %s692 = sand.u32 %s134, 1
        %s693 = smul.addr %s692, 128
        %s694 = scalar_lea.vmem [#allocation12], %s693
        %p695 = pneg %p147
        %p696 = pneg %p144
        %s697 = sand.u32 %s36, 1
        %s698 = scalar_lea.sflag [#allocation14], %s697
        %s699 = sand.u32 %s160, 1
        %s700 = smul.addr %s699, 4
        %s701 = scalar_lea.vmem [#allocation13], %s700
        %p702 = pneg %p173
        %p703 = pneg %p170
        %p704 = scmp.lt.s32.totalorder %s41, 1
        %s705 = scalar_select %p704, %s41, 1
        %s706 = scalar_lea.vmem %s5, %s705
        %p707 = pneg %p199
        %p708 = pneg %p196
        %s709 = sand.u32 %s36, 1
        %s710 = scalar_lea.sflag [#allocation14], %s709
        %s711 = sand.u32 %s212, 1
        %s712 = smul.addr %s711, 64
        %s713 = scalar_lea.vmem [#allocation15], %s712
        %p714 = pneg %p225
        %p715 = pneg %p222
        %p716 = scmp.lt.s32.totalorder %s41, 1
        %s717 = scalar_select %p716, %s41, 1
        %s718 = scalar_lea.vmem %s7, %s717
        %p719 = pneg %p251
        %p720 = pneg %p248
        %p721 = scmp.lt.s32.totalorder %s41, 1
        %s722 = scalar_select %p721, %s41, 1
        %s723 = scalar_lea.vmem %s8, %s722
        %p724 = pneg %p277
        %p725 = pneg %p274
        %s726 = sand.u32 %s36, 1
        %s727 = scalar_lea.sflag [#allocation17], %s726
        %s728 = sand.u32 %s290, 1
        %s729 = smul.addr %s728, 16
        %s730 = scalar_lea.vmem [#allocation16], %s729
        %p731 = pneg %p303
        %p732 = pneg %p300
        %p733 = scmp.lt.s32.totalorder %s41, 1
        %s734 = scalar_select %p733, %s41, 1
        %s735 = scalar_lea.vmem %s10, %s734
        %p736 = pneg %p329
        %p737 = pneg %p326
        %s738 = sand.u32 %s36, 1
        %s739 = scalar_lea.sflag [#allocation17], %s738
        %s740 = sand.u32 %s342, 1
        %s741 = smul.addr %s740, 64
        %s742 = scalar_lea.vmem [#allocation18], %s741
        %p743 = pneg %p355
        %p744 = pneg %p352
        %p745 = pneg %p376
        %p746 = pneg %p373
        %p747 = pneg %p397
        %p748 = pneg %p394
        %p749 = pneg %p423
        %p750 = pneg %p420
        %s751 = smul.u32 2, %s40
        %p752 = scmp.lt.s32.totalorder %s41, 1
        %s753 = scalar_select %p752, %s41, 1
        %s754 = scalar_lea.vmem %s2, %s753
        %p755 = scmp.lt.s32.totalorder %s41, 1
        %s756 = scalar_select %p755, %s41, 1
        %s757 = scalar_lea.vmem %s5, %s756
        %p758 = scmp.lt.s32.totalorder %s41, 1
        %s759 = scalar_select %p758, %s41, 1
        %s760 = scalar_lea.vmem %s7, %s759
        %p761 = scmp.lt.s32.totalorder %s41, 1
        %s762 = scalar_select %p761, %s41, 1
        %s763 = scalar_lea.vmem %s8, %s762
        %p764 = scmp.lt.s32.totalorder %s41, 1
        %s765 = scalar_select %p764, %s41, 1
        %s766 = scalar_lea.vmem %s10, %s765
        %s767 = smul.u32 2, %s40
        %p769 = scmp.eq.s32.totalorder %s41, 0
        // Predicated region
        $region105: #{tpu_custom_call.1} parent=75 // pred_check
          %p770 = pneg %p769
        $region106: #{tpu_custom_call.1} parent=75 // pred_check_branch
          %772 = sbr.rel (%p770) target = $region108
        $region107: #{tpu_custom_call.1} parent=75 // pred_region
          %v773 = vld [vmem:[#allocation7] sm:$0xff]
          %v774 = vld [vmem:[#allocation7 + $0x8] sm:$0xff]
          %775 = vst [vmem:[#allocation2] sm:$0xff] %v773
          %776 = vst [vmem:[#allocation2 + $0x8] sm:$0xff] %v774
          %777 = vst [vmem:[#allocation3] sm:$0xff] 0.0
          %778 = vst [vmem:[#allocation3 + $0x8] sm:$0xff] 0.0
          %779 = vst [vmem:[#allocation4] sm:$0x7] 0.0
          %780 = vst [vmem:[#allocation4 + $0x10] sm:$0x7] 0.0
        $region108: #{tpu_custom_call.1} parent=75 // pred_fallthru
          _
        %v781 = vld [vmem:[#allocation2] sm:$0xff]
        %v782 = vld [vmem:[#allocation2 + $0x8] sm:$0xff]
        %v783 = vld [vmem:[#allocation3] sm:$0xff]
        %v784 = vld [vmem:[#allocation3 + $0x8] sm:$0xff]
        %v785 = vadd.f32 %v781, %v783
        %v786 = vadd.f32 %v782, %v784
        %787 = vst [vmem:[#allocation3] sm:$0xff] %v785
        %788 = vst [vmem:[#allocation3 + $0x8] sm:$0xff] %v786
        %v789 = vld [vmem:[%s627] sm:$0x1]
        %v790 = vld [vmem:[%s754] sm:$0x1]
        %791 = vadd.xlane.f32.xlu0 %v785
        %v792 = vpop.xlane.xlu0 %791
        %793 = vadd.xlane.f32.xlu0 %v786
        %v794 = vpop.xlane.xlu0 %793
        %v795 = vrcp.pop 32.0
        %v796 = vmul.f32 %v792, %v795
        %v797 = vmul.f32 %v794, %v795
        %v798 = vmul.f32 %v785, %v785
        %v799 = vmul.f32 %v786, %v786
        %800 = vadd.xlane.f32.xlu0 %v798
        %v801 = vpop.xlane.xlu0 %800
        %802 = vadd.xlane.f32.xlu0 %v799
        %v803 = vpop.xlane.xlu0 %802
        %v804 = vmul.f32 %v801, %v795
        %v805 = vmul.f32 %v803, %v795
        %v806 = vmul.f32 %v796, %v796
        %v807 = vmul.f32 %v797, %v797
        %v808 = vsub.f32 %v804, %v806
        %v809 = vsub.f32 %v805, %v807
        %v810 = vmax.f32 %v808, 0.0
        %v811 = vmax.f32 %v809, 0.0
        %v812 = vsub.f32 %v785, %v796
        %v813 = vsub.f32 %v786, %v797
        %v814 = vadd.f32 %v810, 1e-05
        %v815 = vadd.f32 %v811, 1e-05
        %v816 = vrsqrt.pop %v814
        %v817 = vrsqrt.pop %v815
        %v818 = vmul.f32 %v812, %v816
        %v819 = vmul.f32 %v813, %v817
        %v821 = vlaneseq
        %v822 = vshrl.u32 %v821, 7
        %v823 = vsub.s32 0, %v822
        %v824 = vrot.slane %v789, %v823
        %v826 = vmul.f32 %v818, %v824
        %v827 = vmul.f32 %v819, %v824
        %v829 = vlaneseq
        %v830 = vshrl.u32 %v829, 7
        %v831 = vsub.s32 0, %v830
        %v832 = vrot.slane %v790, %v831
        %v834 = vadd.f32 %v826, %v832
        %v835 = vadd.f32 %v827, %v832
        %v836 = vpack.c.bf16 %v835, %v834
        %v837 = vld [vmem:[%s636] sm:$0xff]
        %v838 = vld [vmem:[%s636 + $0x8] sm:$0xff]
        %v839 = vld [vmem:[%s636 + $0x10] sm:$0xff]
        %v840 = vld [vmem:[%s636 + $0x18] sm:$0xff]
        %v841 = vld [vmem:[%s636 + $0x20] sm:$0xff]
        %v842 = vld [vmem:[%s636 + $0x28] sm:$0xff]
        %v843 = vld [vmem:[%s636 + $0x30] sm:$0xff]
        %v844 = vld [vmem:[%s636 + $0x38] sm:$0xff]
        %v845 = vld [vmem:[%s636 + $0x40] sm:$0xff]
        %v846 = vld [vmem:[%s636 + $0x48] sm:$0xff]
        %v847 = vld [vmem:[%s636 + $0x50] sm:$0xff]
        %v848 = vld [vmem:[%s636 + $0x58] sm:$0xff]
        %v849 = vld [vmem:[%s636 + $0x60] sm:$0xff]
        %v850 = vld [vmem:[%s636 + $0x68] sm:$0xff]
        %v851 = vld [vmem:[%s636 + $0x70] sm:$0xff]
        %v852 = vld [vmem:[%s636 + $0x78] sm:$0xff]
        %v869 = vunpack.c.l.b16 %v837
        %v870 = vunpack.c.h.b16 %v837
        %v871 = vunpack.c.l.b16 %v838
        %v872 = vunpack.c.h.b16 %v838
        %v873 = vunpack.c.l.b16 %v839
        %v874 = vunpack.c.h.b16 %v839
        %v875 = vunpack.c.l.b16 %v840
        %v876 = vunpack.c.h.b16 %v840
        %v877 = vunpack.c.l.b16 %v841
        %v878 = vunpack.c.h.b16 %v841
        %v879 = vunpack.c.l.b16 %v842
        %v880 = vunpack.c.h.b16 %v842
        %v881 = vunpack.c.l.b16 %v843
        %v882 = vunpack.c.h.b16 %v843
        %v883 = vunpack.c.l.b16 %v844
        %v884 = vunpack.c.h.b16 %v844
        %v885 = vunpack.c.l.b16 %v845
        %v886 = vunpack.c.h.b16 %v845
        %v887 = vunpack.c.l.b16 %v846
        %v888 = vunpack.c.h.b16 %v846
        %v889 = vunpack.c.l.b16 %v847
        %v890 = vunpack.c.h.b16 %v847
        %v891 = vunpack.c.l.b16 %v848
        %v892 = vunpack.c.h.b16 %v848
        %v893 = vunpack.c.l.b16 %v849
        %v894 = vunpack.c.h.b16 %v849
        %v895 = vunpack.c.l.b16 %v850
        %v896 = vunpack.c.h.b16 %v850
        %v897 = vunpack.c.l.b16 %v851
        %v898 = vunpack.c.h.b16 %v851
        %v899 = vunpack.c.l.b16 %v852
        %v900 = vunpack.c.h.b16 %v852
        %v901 = vpack.c.b16 %v871, %v869
        %v902 = vpack.c.b16 %v872, %v870
        %v903 = vpack.c.b16 %v875, %v873
        %v904 = vpack.c.b16 %v876, %v874
        %v905 = vpack.c.b16 %v879, %v877
        %v906 = vpack.c.b16 %v880, %v878
        %v907 = vpack.c.b16 %v883, %v881
        %v908 = vpack.c.b16 %v884, %v882
        %v909 = vpack.c.b16 %v887, %v885
        %v910 = vpack.c.b16 %v888, %v886
        %v911 = vpack.c.b16 %v891, %v889
        %v912 = vpack.c.b16 %v892, %v890
        %v913 = vpack.c.b16 %v895, %v893
        %v914 = vpack.c.b16 %v896, %v894
        %v915 = vpack.c.b16 %v899, %v897
        %v916 = vpack.c.b16 %v900, %v898
        %933 = vmatprep.subr.bf16.mxu0 %v916
        %934 = vmatpush1.bf16.msra.mxu0 %v915
        %935 = vmatprep.subr.bf16.mxu0 %v914
        %936 = vmatpush1.bf16.msra.mxu0 %v913
        %937 = vmatprep.subr.bf16.mxu0 %v912
        %938 = vmatpush1.bf16.msra.mxu0 %v911
        %939 = vmatprep.subr.bf16.mxu0 %v910
        %940 = vmatpush1.bf16.msra.mxu0 %v909
        %941 = vmatprep.subr.bf16.mxu0 %v908
        %942 = vmatpush1.bf16.msra.mxu0 %v907
        %943 = vmatprep.subr.bf16.mxu0 %v906
        %944 = vmatpush1.bf16.msra.mxu0 %v905
        %945 = vmatprep.subr.bf16.mxu0 %v904
        %946 = vmatpush1.bf16.msra.mxu0 %v903
        %947 = vmatprep.subr.bf16.mxu0 %v902
        %948 = vmatpush1.bf16.msra.mxu0 %v901
        %949 = vmatprep.subr.bf16.mxu0 0
        %950 = vmatpush2.bf16.msra.mxu0 0
        %951 = vmatprep.subr.bf16.mxu0 0
        %952 = vmatpush2.bf16.msra.mxu0 0
        %953 = vmatprep.subr.bf16.mxu0 0
        %954 = vmatpush2.bf16.msra.mxu0 0
        %955 = vmatprep.subr.bf16.mxu0 0
        %956 = vmatpush2.bf16.msra.mxu0 0
        %957 = vmatprep.subr.bf16.mxu0 0
        %958 = vmatpush2.bf16.msra.mxu0 0
        %959 = vmatprep.subr.bf16.mxu0 0
        %960 = vmatpush2.bf16.msra.mxu0 0
        %961 = vmatprep.subr.bf16.mxu0 0
        %962 = vmatpush2.bf16.msra.mxu0 0
        %963 = vmatprep.subr.bf16.mxu0 0
        %964 = vmatpush2.bf16.msra.mxu0 0
        %965 = vmatprep.mubr.bf16.mxu0 0
        %966 = vmatmul.mubr.bf16.gmra.mxu0 %v836
        %v967 = vpop.f32.mrf.mxu0
        %v968 = vadd.f32 0.0, %v967
        %v969 = vpop.f32.mrf.mxu0
        %v970 = vadd.f32 0.0, %v969
        %v971 = vpop.f32.mrf.mxu0
        %v972 = vadd.f32 0.0, %v971
        %v973 = vpop.f32.mrf.mxu0
        %v974 = vadd.f32 0.0, %v973
        %975 = vdwg.mxu0
        %976 = vst [vmem:[#allocation4 + $0x3] sm:$0xff] %v968
        %977 = vst [vmem:[#allocation4 + $0x13] sm:$0xff] %v972
        %v978 = vld [vmem:[%s645] sm:$0xf]
        %v979 = vlaneseq
        %v980 = vshrl.u32 %v979, 7
        %v981 = vsub.s32 3, %v980
        %v982 = vrot.slane %v978, %v981
        %v983 = vmul.f32 %v982, %v968
        %v984 = vmul.f32 %v982, %v972
        %v985 = vld [vmem:[#allocation4] sm:$0xff]
        %v986 = vld [vmem:[#allocation4 + $0x10] sm:$0xff]
        %v987 = vlaneseq
        %v988 = vshrl.u32 %v987, 7
        %v989 = vsub.s32 0, %v988
        %v990 = vrot.slane %v978, %v989
        %v991 = vmul.f32 %v990, %v985
        %v992 = vmul.f32 %v990, %v986
        %v993 = vadd.f32 %v983, %v991
        %v994 = vadd.f32 %v984, %v992
        %v995 = vld [vmem:[#allocation4 + $0x1] sm:$0xff]
        %v996 = vld [vmem:[#allocation4 + $0x11] sm:$0xff]
        %v997 = vlaneseq
        %v998 = vshrl.u32 %v997, 7
        %v999 = vsub.s32 1, %v998
        %v1000 = vrot.slane %v978, %v999
        %v1001 = vmul.f32 %v1000, %v995
        %v1002 = vmul.f32 %v1000, %v996
        %v1003 = vadd.f32 %v993, %v1001
        %v1004 = vadd.f32 %v994, %v1002
        %v1005 = vld [vmem:[#allocation4 + $0x2] sm:$0xff]
        %v1006 = vld [vmem:[#allocation4 + $0x12] sm:$0xff]
        %v1007 = vlaneseq
        %v1008 = vshrl.u32 %v1007, 7
        %v1009 = vsub.s32 2, %v1008
        %v1010 = vrot.slane %v978, %v1009
        %v1011 = vmul.f32 %v1010, %v1005
        %v1012 = vmul.f32 %v1010, %v1006
        %v1013 = vadd.f32 %v1003, %v1011
        %v1014 = vadd.f32 %v1004, %v1012
        %v1015 = vld [vmem:[%s757] sm:$0x1]
        %v1017 = vlaneseq
        %v1018 = vshrl.u32 %v1017, 7
        %v1019 = vsub.s32 0, %v1018
        %v1020 = vrot.slane %v1015, %v1019
        %v1022 = vadd.f32 %v1013, %v1020
        %v1023 = vadd.f32 %v1014, %v1020
        %v1024 = vxor.u32 %v1022, 2147483648
        %v1025 = vxor.u32 %v1023, 2147483648
        %v1026 = vmul.f32 %v1024, 1.442695
        %v1027 = vpow.pop %v1026
        %v1028 = vmul.f32 %v1025, 1.442695
        %v1029 = vpow.pop %v1028
        %v1030 = vadd.f32 %v1027, 1.0
        %v1031 = vadd.f32 %v1029, 1.0
        %v1032 = vrcp.pop %v1030
        %v1033 = vmul.f32 1.0, %v1032
        %v1034 = vrcp.pop %v1031
        %v1035 = vmul.f32 1.0, %v1034
        %v1036 = vmul.f32 %v1022, %v1033
        %v1037 = vmul.f32 %v1023, %v1035
        %v1038 = vpack.c.bf16 %v1037, %v1036
        %v1039 = vld [vmem:[%s654] sm:$0xf]
        %v1040 = vld [vmem:[%s654 + $0x4] sm:$0xf]
        %v1041 = vld [vmem:[%s654 + $0x8] sm:$0xf]
        %v1042 = vld [vmem:[%s654 + $0xc] sm:$0xf]
        %v1043 = vld [vmem:[%s654 + $0x10] sm:$0xf]
        %v1044 = vld [vmem:[%s654 + $0x14] sm:$0xf]
        %v1045 = vld [vmem:[%s654 + $0x18] sm:$0xf]
        %v1046 = vld [vmem:[%s654 + $0x1c] sm:$0xf]
        %v1047 = vld [vmem:[%s654 + $0x20] sm:$0xf]
        %v1048 = vld [vmem:[%s654 + $0x24] sm:$0xf]
        %v1049 = vld [vmem:[%s654 + $0x28] sm:$0xf]
        %v1050 = vld [vmem:[%s654 + $0x2c] sm:$0xf]
        %v1051 = vld [vmem:[%s654 + $0x30] sm:$0xf]
        %v1052 = vld [vmem:[%s654 + $0x34] sm:$0xf]
        %v1053 = vld [vmem:[%s654 + $0x38] sm:$0xf]
        %v1054 = vld [vmem:[%s654 + $0x3c] sm:$0xf]
        %v1071 = vunpack.c.l.b16 %v1039
        %v1072 = vunpack.c.l.b16 %v1040
        %v1073 = vunpack.c.l.b16 %v1041
        %v1074 = vunpack.c.l.b16 %v1042
        %v1075 = vunpack.c.l.b16 %v1043
        %v1076 = vunpack.c.l.b16 %v1044
        %v1077 = vunpack.c.l.b16 %v1045
        %v1078 = vunpack.c.l.b16 %v1046
        %v1079 = vunpack.c.l.b16 %v1047
        %v1080 = vunpack.c.l.b16 %v1048
        %v1081 = vunpack.c.l.b16 %v1049
        %v1082 = vunpack.c.l.b16 %v1050
        %v1083 = vunpack.c.l.b16 %v1051
        %v1084 = vunpack.c.l.b16 %v1052
        %v1085 = vunpack.c.l.b16 %v1053
        %v1086 = vunpack.c.l.b16 %v1054
        %v1087 = vpack.c.b16 %v1072, %v1071
        %v1088 = vpack.c.b16 %v1074, %v1073
        %v1089 = vpack.c.b16 %v1076, %v1075
        %v1090 = vpack.c.b16 %v1078, %v1077
        %v1091 = vpack.c.b16 %v1080, %v1079
        %v1092 = vpack.c.b16 %v1082, %v1081
        %v1093 = vpack.c.b16 %v1084, %v1083
        %v1094 = vpack.c.b16 %v1086, %v1085
        %1103 = vmatprep.subr.bf16.mxu0 0
        %1104 = vmatpush1.bf16.msra.mxu0 %v1094
        %1105 = vmatprep.subr.bf16.mxu0 0
        %1106 = vmatpush1.bf16.msra.mxu0 %v1093
        %1107 = vmatprep.subr.bf16.mxu0 0
        %1108 = vmatpush1.bf16.msra.mxu0 %v1092
        %1109 = vmatprep.subr.bf16.mxu0 0
        %1110 = vmatpush1.bf16.msra.mxu0 %v1091
        %1111 = vmatprep.subr.bf16.mxu0 0
        %1112 = vmatpush1.bf16.msra.mxu0 %v1090
        %1113 = vmatprep.subr.bf16.mxu0 0
        %1114 = vmatpush1.bf16.msra.mxu0 %v1089
        %1115 = vmatprep.subr.bf16.mxu0 0
        %1116 = vmatpush1.bf16.msra.mxu0 %v1088
        %1117 = vmatprep.subr.bf16.mxu0 0
        %1118 = vmatpush1.bf16.msra.mxu0 %v1087
        %1119 = vmatprep.subr.bf16.mxu0 0
        %1120 = vmatpush2.bf16.msra.mxu0 0
        %1121 = vmatprep.subr.bf16.mxu0 0
        %1122 = vmatpush2.bf16.msra.mxu0 0
        %1123 = vmatprep.subr.bf16.mxu0 0
        %1124 = vmatpush2.bf16.msra.mxu0 0
        %1125 = vmatprep.subr.bf16.mxu0 0
        %1126 = vmatpush2.bf16.msra.mxu0 0
        %1127 = vmatprep.subr.bf16.mxu0 0
        %1128 = vmatpush2.bf16.msra.mxu0 0
        %1129 = vmatprep.subr.bf16.mxu0 0
        %1130 = vmatpush2.bf16.msra.mxu0 0
        %1131 = vmatprep.subr.bf16.mxu0 0
        %1132 = vmatpush2.bf16.msra.mxu0 0
        %1133 = vmatprep.subr.bf16.mxu0 0
        %1134 = vmatpush2.bf16.msra.mxu0 0
        %1135 = vmatprep.mubr.bf16.mxu0 0
        %1136 = vmatmul.mubr.bf16.gmra.mxu0 %v1038
        %v1137 = vpop.f32.mrf.mxu0
        %v1138 = vadd.f32 0.0, %v1137
        %v1139 = vpop.f32.mrf.mxu0
        %v1140 = vpop.f32.mrf.mxu0
        %v1141 = vadd.f32 0.0, %v1140
        %v1142 = vpop.f32.mrf.mxu0
        %1143 = vdwg.mxu0
        %1144 = vst [vmem:[#allocation5] sm:$0xff] %v1138
        %1145 = vst [vmem:[#allocation5 + $0x8] sm:$0xff] %v1141
        %1146 = vst [vmem:[#allocation6] sm:$0xff] %v1036
        %1147 = vst [vmem:[#allocation6 + $0x8] sm:$0xff] %v1037
        %v1148 = vld [vmem:[%s663] sm:$0xff]
        %v1149 = vld [vmem:[%s663 + $0x8] sm:$0xff]
        %v1150 = vld [vmem:[%s760] sm:$0x1]
        %v1151 = vld [vmem:[%s763] sm:$0x1]
        %v1152 = vld [vmem:[%s766] sm:$0x1]
        %v1153 = vld [vmem:[#allocation5] sm:$0xff]
        %v1154 = vld [vmem:[#allocation5 + $0x8] sm:$0xff]
        %v1155 = vld [vmem:[#allocation6] sm:$0xff]
        %v1156 = vld [vmem:[#allocation6 + $0x8] sm:$0xff]
        %v1157 = vunpack.c.l.bf16 %v1150
        %1159 = vset.pattern.permute.xlu0 0
        %1160 = vperm.xlu0 %1159, %v1153
        %v1161 = vpop.permute.xlu0 %1160
        %1164 = vset.pattern.permute.xlu0 0
        %1165 = vperm.xlu0 %1164, %v1154
        %v1166 = vpop.permute.xlu0 %1165
        %v1168 = vlaneseq
        %v1169 = vshrl.u32 %v1168, 7
        %v1170 = vsub.s32 0, %v1169
        %v1171 = vrot.slane %v1157, %v1170
        %v1172 = vmul.f32 %v1161, %v1171
        %v1173 = vmul.f32 %v1166, %v1171
        %v1174 = vadd.f32 %v1172, 0.0
        %v1175 = vadd.f32 %v1173, 0.0
        %1176 = vset.pattern.permute.xlu0 1
        %1177 = vperm.xlu0 %1176, %v1153
        %v1178 = vpop.permute.xlu0 %1177
        %1180 = vset.pattern.permute.xlu0 1
        %1181 = vperm.xlu0 %1180, %v1154
        %v1182 = vpop.permute.xlu0 %1181
        %v1184 = vlaneseq
        %v1185 = vshrl.u32 %v1184, 7
        %v1186 = vsub.s32 1, %v1185
        %v1187 = vrot.slane %v1157, %v1186
        %v1188 = vmul.f32 %v1178, %v1187
        %v1189 = vmul.f32 %v1182, %v1187
        %v1190 = vadd.f32 %v1174, %v1188
        %v1191 = vadd.f32 %v1175, %v1189
        %v1193 = vlaneseq
        %v1194 = vshrl.u32 %v1193, 7
        %v1195 = vsub.s32 0, %v1194
        %v1196 = vrot.slane %v1151, %v1195
        %v1198 = vadd.f32 %v1190, %v1196
        %v1199 = vadd.f32 %v1191, %v1196
        %v1200 = vmax.f32 %v1198, 0.0
        %v1201 = vmax.f32 %v1199, 0.0
        %vm1202 = vcmp.ne.f32.partialorder %v1198, %v1198
        %vm1203 = vcmp.ne.f32.partialorder %v1199, %v1199
        %v1204 = vadd.f32 %v1198, 0.0
        %v1205 = vadd.f32 %v1199, 0.0
        %v1206 = vand.u32 2147483647, %v1198
        %v1207 = vand.u32 2147483647, %v1199
        %v1208 = vsub.f32 0.0, %v1206
        %v1209 = vsub.f32 0.0, %v1207
        %v1210 = vmul.f32 %v1208, 1.442695
        %v1211 = vpow.pop %v1210
        %v1212 = vmul.f32 %v1209, 1.442695
        %v1213 = vpow.pop %v1212
        %v1214 = vadd.f32 %v1211, 1.0
        %v1215 = vlog2.pop %v1214
        %v1216 = vmul.f32 %v1215, 0.6931472
        %v1217 = vmul.f32 -0.5, %v1211
        %v1218 = vadd.f32 %v1217, 1.0
        %v1219 = vmul.f32 %v1218, %v1211
        %v1220 = vand.u32 2147483647, %v1211
        %vm1221 = vcmp.lt.f32.partialorder %v1220, 0.0004427343
        %v1222 = vsel %vm1221, %v1219, %v1216
        %v1223 = vadd.f32 %v1213, 1.0
        %v1224 = vlog2.pop %v1223
        %v1225 = vmul.f32 %v1224, 0.6931472
        %v1226 = vmul.f32 -0.5, %v1213
        %v1227 = vadd.f32 %v1226, 1.0
        %v1228 = vmul.f32 %v1227, %v1213
        %v1229 = vand.u32 2147483647, %v1213
        %vm1230 = vcmp.lt.f32.partialorder %v1229, 0.0004427343
        %v1231 = vsel %vm1230, %v1228, %v1225
        %v1232 = vadd.f32 %v1200, %v1222
        %v1233 = vadd.f32 %v1201, %v1231
        %v1234 = vsel %vm1202, %v1204, %v1232
        %v1235 = vsel %vm1203, %v1205, %v1233
        %v1238 = vcombine.high %v1234, %v1234
        %v1240 = vunpack.c.l.s4 1966171168
        %v1241 = vunpack.c.0.s8 %v1240
        %v1242 = vlaneseq
        %v1243 = vshrl.u32 %v1242, 7
        %v1244 = vsub.s32 %v1241, %v1243
        %v1245 = vrot.slane %v1234, %v1244
        %v1247 = vunpack.c.l.s4 1966171168
        %v1248 = vunpack.c.0.s8 %v1247
        %v1249 = vlaneseq
        %v1250 = vshrl.u32 %v1249, 7
        %v1251 = vsub.s32 %v1248, %v1250
        %v1252 = vrot.slane %v1238, %v1251
        %v1253 = vcombine.high %v1245, %v1245
        %v1254 = vcombine.high %v1252, %v1252
        %v1256 = vunpack.c.l.s4 1966171168
        %v1257 = vunpack.c.0.s8 %v1256
        %v1258 = vlaneseq
        %v1259 = vshrl.u32 %v1258, 7
        %v1260 = vsub.s32 %v1257, %v1259
        %v1261 = vrot.slane %v1245, %v1260
        %v1263 = vunpack.c.l.s4 1966171168
        %v1264 = vunpack.c.0.s8 %v1263
        %v1265 = vlaneseq
        %v1266 = vshrl.u32 %v1265, 7
        %v1267 = vsub.s32 %v1264, %v1266
        %v1268 = vrot.slane %v1252, %v1267
        %v1270 = vunpack.c.l.s4 1966171168
        %v1271 = vunpack.c.0.s8 %v1270
        %v1272 = vlaneseq
        %v1273 = vshrl.u32 %v1272, 7
        %v1274 = vsub.s32 %v1271, %v1273
        %v1275 = vrot.slane %v1253, %v1274
        %v1277 = vunpack.c.l.s4 1966171168
        %v1278 = vunpack.c.0.s8 %v1277
        %v1279 = vlaneseq
        %v1280 = vshrl.u32 %v1279, 7
        %v1281 = vsub.s32 %v1278, %v1280
        %v1282 = vrot.slane %v1254, %v1281
        %v1283 = vcombine.high %v1261, %v1261
        %v1284 = vcombine.high %v1268, %v1268
        %v1285 = vcombine.high %v1275, %v1275
        %v1286 = vcombine.high %v1282, %v1282
        %v1287 = vcombine.high %v1235, %v1235
        %v1289 = vunpack.c.l.s4 1966171168
        %v1290 = vunpack.c.0.s8 %v1289
        %v1291 = vlaneseq
        %v1292 = vshrl.u32 %v1291, 7
        %v1293 = vsub.s32 %v1290, %v1292
        %v1294 = vrot.slane %v1235, %v1293
        %v1296 = vunpack.c.l.s4 1966171168
        %v1297 = vunpack.c.0.s8 %v1296
        %v1298 = vlaneseq
        %v1299 = vshrl.u32 %v1298, 7
        %v1300 = vsub.s32 %v1297, %v1299
        %v1301 = vrot.slane %v1287, %v1300
        %v1302 = vcombine.high %v1294, %v1294
        %v1303 = vcombine.high %v1301, %v1301
        %v1305 = vunpack.c.l.s4 1966171168
        %v1306 = vunpack.c.0.s8 %v1305
        %v1307 = vlaneseq
        %v1308 = vshrl.u32 %v1307, 7
        %v1309 = vsub.s32 %v1306, %v1308
        %v1310 = vrot.slane %v1294, %v1309
        %v1312 = vunpack.c.l.s4 1966171168
        %v1313 = vunpack.c.0.s8 %v1312
        %v1314 = vlaneseq
        %v1315 = vshrl.u32 %v1314, 7
        %v1316 = vsub.s32 %v1313, %v1315
        %v1317 = vrot.slane %v1301, %v1316
        %v1319 = vunpack.c.l.s4 1966171168
        %v1320 = vunpack.c.0.s8 %v1319
        %v1321 = vlaneseq
        %v1322 = vshrl.u32 %v1321, 7
        %v1323 = vsub.s32 %v1320, %v1322
        %v1324 = vrot.slane %v1302, %v1323
        %v1326 = vunpack.c.l.s4 1966171168
        %v1327 = vunpack.c.0.s8 %v1326
        %v1328 = vlaneseq
        %v1329 = vshrl.u32 %v1328, 7
        %v1330 = vsub.s32 %v1327, %v1329
        %v1331 = vrot.slane %v1303, %v1330
        %v1332 = vcombine.high %v1310, %v1310
        %v1333 = vcombine.high %v1317, %v1317
        %v1334 = vcombine.high %v1324, %v1324
        %v1335 = vcombine.high %v1331, %v1331
        %v1336 = vlaneseq
        %v1337 = vshrl.u32 %v1336, 7
        %v1338 = vsub.s32 0, %v1337
        %v1339 = vrot.slane %v1261, %v1338
        %v1340 = vlaneseq
        %v1341 = vshrl.u32 %v1340, 7
        %v1342 = vsub.s32 0, %v1341
        %v1343 = vrot.slane %v1275, %v1342
        %v1344 = vlaneseq
        %v1345 = vshrl.u32 %v1344, 7
        %v1346 = vsub.s32 0, %v1345
        %v1347 = vrot.slane %v1283, %v1346
        %v1348 = vlaneseq
        %v1349 = vshrl.u32 %v1348, 7
        %v1350 = vsub.s32 0, %v1349
        %v1351 = vrot.slane %v1285, %v1350
        %v1352 = vlaneseq
        %v1353 = vshrl.u32 %v1352, 7
        %v1354 = vsub.s32 0, %v1353
        %v1355 = vrot.slane %v1268, %v1354
        %v1356 = vlaneseq
        %v1357 = vshrl.u32 %v1356, 7
        %v1358 = vsub.s32 0, %v1357
        %v1359 = vrot.slane %v1282, %v1358
        %v1360 = vlaneseq
        %v1361 = vshrl.u32 %v1360, 7
        %v1362 = vsub.s32 0, %v1361
        %v1363 = vrot.slane %v1284, %v1362
        %v1364 = vlaneseq
        %v1365 = vshrl.u32 %v1364, 7
        %v1366 = vsub.s32 0, %v1365
        %v1367 = vrot.slane %v1286, %v1366
        %v1368 = vlaneseq
        %v1369 = vshrl.u32 %v1368, 7
        %v1370 = vsub.s32 0, %v1369
        %v1371 = vrot.slane %v1310, %v1370
        %v1372 = vlaneseq
        %v1373 = vshrl.u32 %v1372, 7
        %v1374 = vsub.s32 0, %v1373
        %v1375 = vrot.slane %v1324, %v1374
        %v1376 = vlaneseq
        %v1377 = vshrl.u32 %v1376, 7
        %v1378 = vsub.s32 0, %v1377
        %v1379 = vrot.slane %v1332, %v1378
        %v1380 = vlaneseq
        %v1381 = vshrl.u32 %v1380, 7
        %v1382 = vsub.s32 0, %v1381
        %v1383 = vrot.slane %v1334, %v1382
        %v1384 = vlaneseq
        %v1385 = vshrl.u32 %v1384, 7
        %v1386 = vsub.s32 0, %v1385
        %v1387 = vrot.slane %v1317, %v1386
        %v1388 = vlaneseq
        %v1389 = vshrl.u32 %v1388, 7
        %v1390 = vsub.s32 0, %v1389
        %v1391 = vrot.slane %v1331, %v1390
        %v1392 = vlaneseq
        %v1393 = vshrl.u32 %v1392, 7
        %v1394 = vsub.s32 0, %v1393
        %v1395 = vrot.slane %v1333, %v1394
        %v1396 = vlaneseq
        %v1397 = vshrl.u32 %v1396, 7
        %v1398 = vsub.s32 0, %v1397
        %v1399 = vrot.slane %v1335, %v1398
        %v1416 = vmul.f32 %v1339, %v1148
        %v1417 = vmul.f32 %v1339, %v1149
        %v1418 = vmul.f32 %v1343, %v1148
        %v1419 = vmul.f32 %v1343, %v1149
        %v1420 = vmul.f32 %v1347, %v1148
        %v1421 = vmul.f32 %v1347, %v1149
        %v1422 = vmul.f32 %v1351, %v1148
        %v1423 = vmul.f32 %v1351, %v1149
        %v1424 = vmul.f32 %v1355, %v1148
        %v1425 = vmul.f32 %v1355, %v1149
        %v1426 = vmul.f32 %v1359, %v1148
        %v1427 = vmul.f32 %v1359, %v1149
        %v1428 = vmul.f32 %v1363, %v1148
        %v1429 = vmul.f32 %v1363, %v1149
        %v1430 = vmul.f32 %v1367, %v1148
        %v1431 = vmul.f32 %v1367, %v1149
        %v1432 = vmul.f32 %v1371, %v1148
        %v1433 = vmul.f32 %v1371, %v1149
        %v1434 = vmul.f32 %v1375, %v1148
        %v1435 = vmul.f32 %v1375, %v1149
        %v1436 = vmul.f32 %v1379, %v1148
        %v1437 = vmul.f32 %v1379, %v1149
        %v1438 = vmul.f32 %v1383, %v1148
        %v1439 = vmul.f32 %v1383, %v1149
        %v1440 = vmul.f32 %v1387, %v1148
        %v1441 = vmul.f32 %v1387, %v1149
        %v1442 = vmul.f32 %v1391, %v1148
        %v1443 = vmul.f32 %v1391, %v1149
        %v1444 = vmul.f32 %v1395, %v1148
        %v1445 = vmul.f32 %v1395, %v1149
        %v1446 = vmul.f32 %v1399, %v1148
        %v1447 = vmul.f32 %v1399, %v1149
        %v1448 = vmul.f32 %v1416, 1.442695
        %v1449 = vpow.pop %v1448
        %v1450 = vmul.f32 %v1417, 1.442695
        %v1451 = vpow.pop %v1450
        %v1452 = vmul.f32 %v1418, 1.442695
        %v1453 = vpow.pop %v1452
        %v1454 = vmul.f32 %v1419, 1.442695
        %v1455 = vpow.pop %v1454
        %v1456 = vmul.f32 %v1420, 1.442695
        %v1457 = vpow.pop %v1456
        %v1458 = vmul.f32 %v1421, 1.442695
        %v1459 = vpow.pop %v1458
        %v1460 = vmul.f32 %v1422, 1.442695
        %v1461 = vpow.pop %v1460
        %v1462 = vmul.f32 %v1423, 1.442695
        %v1463 = vpow.pop %v1462
        %v1464 = vmul.f32 %v1424, 1.442695
        %v1465 = vpow.pop %v1464
        %v1466 = vmul.f32 %v1425, 1.442695
        %v1467 = vpow.pop %v1466
        %v1468 = vmul.f32 %v1426, 1.442695
        %v1469 = vpow.pop %v1468
        %v1470 = vmul.f32 %v1427, 1.442695
        %v1471 = vpow.pop %v1470
        %v1472 = vmul.f32 %v1428, 1.442695
        %v1473 = vpow.pop %v1472
        %v1474 = vmul.f32 %v1429, 1.442695
        %v1475 = vpow.pop %v1474
        %v1476 = vmul.f32 %v1430, 1.442695
        %v1477 = vpow.pop %v1476
        %v1478 = vmul.f32 %v1431, 1.442695
        %v1479 = vpow.pop %v1478
        %v1480 = vmul.f32 %v1432, 1.442695
        %v1481 = vpow.pop %v1480
        %v1482 = vmul.f32 %v1433, 1.442695
        %v1483 = vpow.pop %v1482
        %v1484 = vmul.f32 %v1434, 1.442695
        %v1485 = vpow.pop %v1484
        %v1486 = vmul.f32 %v1435, 1.442695
        %v1487 = vpow.pop %v1486
        %v1488 = vmul.f32 %v1436, 1.442695
        %v1489 = vpow.pop %v1488
        %v1490 = vmul.f32 %v1437, 1.442695
        %v1491 = vpow.pop %v1490
        %v1492 = vmul.f32 %v1438, 1.442695
        %v1493 = vpow.pop %v1492
        %v1494 = vmul.f32 %v1439, 1.442695
        %v1495 = vpow.pop %v1494
        %v1496 = vmul.f32 %v1440, 1.442695
        %v1497 = vpow.pop %v1496
        %v1498 = vmul.f32 %v1441, 1.442695
        %v1499 = vpow.pop %v1498
        %v1500 = vmul.f32 %v1442, 1.442695
        %v1501 = vpow.pop %v1500
        %v1502 = vmul.f32 %v1443, 1.442695
        %v1503 = vpow.pop %v1502
        %v1504 = vmul.f32 %v1444, 1.442695
        %v1505 = vpow.pop %v1504
        %v1506 = vmul.f32 %v1445, 1.442695
        %v1507 = vpow.pop %v1506
        %v1508 = vmul.f32 %v1446, 1.442695
        %v1509 = vpow.pop %v1508
        %v1510 = vmul.f32 %v1447, 1.442695
        %v1511 = vpow.pop %v1510
        %v1512 = vlaneseq
        %v1513 = vshrl.u32 %v1512, 7
        %v1514 = vsub.s32 0, %v1513
        %v1515 = vrot.slane %v1153, %v1514
        %s1517 = sor.u32 256, 2
        %1518 = vbcast.lane.b32.xlu0 %v1515, %s1517
        %v1519 = vpop.permute.xlu0 %1518
        %s1521 = sor.u32 256, 10
        %1522 = vbcast.lane.b32.xlu0 %v1515, %s1521
        %v1523 = vpop.permute.xlu0 %1522
        %v1524 = vlaneseq
        %v1525 = vshrl.u32 %v1524, 7
        %v1526 = vsub.s32 1, %v1525
        %v1527 = vrot.slane %v1153, %v1526
        %s1529 = sor.u32 256, 2
        %1530 = vbcast.lane.b32.xlu0 %v1527, %s1529
        %v1531 = vpop.permute.xlu0 %1530
        %s1533 = sor.u32 256, 10
        %1534 = vbcast.lane.b32.xlu0 %v1527, %s1533
        %v1535 = vpop.permute.xlu0 %1534
        %v1536 = vlaneseq
        %v1537 = vshrl.u32 %v1536, 7
        %v1538 = vsub.s32 2, %v1537
        %v1539 = vrot.slane %v1153, %v1538
        %s1541 = sor.u32 256, 2
        %1542 = vbcast.lane.b32.xlu0 %v1539, %s1541
        %v1543 = vpop.permute.xlu0 %1542
        %s1545 = sor.u32 256, 10
        %1546 = vbcast.lane.b32.xlu0 %v1539, %s1545
        %v1547 = vpop.permute.xlu0 %1546
        %v1548 = vlaneseq
        %v1549 = vshrl.u32 %v1548, 7
        %v1550 = vsub.s32 3, %v1549
        %v1551 = vrot.slane %v1153, %v1550
        %s1553 = sor.u32 256, 2
        %1554 = vbcast.lane.b32.xlu0 %v1551, %s1553
        %v1555 = vpop.permute.xlu0 %1554
        %s1557 = sor.u32 256, 10
        %1558 = vbcast.lane.b32.xlu0 %v1551, %s1557
        %v1559 = vpop.permute.xlu0 %1558
        %v1560 = vlaneseq
        %v1561 = vshrl.u32 %v1560, 7
        %v1562 = vsub.s32 4, %v1561
        %v1563 = vrot.slane %v1153, %v1562
        %s1565 = sor.u32 256, 2
        %1566 = vbcast.lane.b32.xlu0 %v1563, %s1565
        %v1567 = vpop.permute.xlu0 %1566
        %s1569 = sor.u32 256, 10
        %1570 = vbcast.lane.b32.xlu0 %v1563, %s1569
        %v1571 = vpop.permute.xlu0 %1570
        %v1572 = vlaneseq
        %v1573 = vshrl.u32 %v1572, 7
        %v1574 = vsub.s32 5, %v1573
        %v1575 = vrot.slane %v1153, %v1574
        %s1577 = sor.u32 256, 2
        %1578 = vbcast.lane.b32.xlu0 %v1575, %s1577
        %v1579 = vpop.permute.xlu0 %1578
        %s1581 = sor.u32 256, 10
        %1582 = vbcast.lane.b32.xlu0 %v1575, %s1581
        %v1583 = vpop.permute.xlu0 %1582
        %v1584 = vlaneseq
        %v1585 = vshrl.u32 %v1584, 7
        %v1586 = vsub.s32 6, %v1585
        %v1587 = vrot.slane %v1153, %v1586
        %s1589 = sor.u32 256, 2
        %1590 = vbcast.lane.b32.xlu0 %v1587, %s1589
        %v1591 = vpop.permute.xlu0 %1590
        %s1593 = sor.u32 256, 10
        %1594 = vbcast.lane.b32.xlu0 %v1587, %s1593
        %v1595 = vpop.permute.xlu0 %1594
        %v1596 = vlaneseq
        %v1597 = vshrl.u32 %v1596, 7
        %v1598 = vsub.s32 7, %v1597
        %v1599 = vrot.slane %v1153, %v1598
        %s1601 = sor.u32 256, 2
        %1602 = vbcast.lane.b32.xlu0 %v1599, %s1601
        %v1603 = vpop.permute.xlu0 %1602
        %s1605 = sor.u32 256, 10
        %1606 = vbcast.lane.b32.xlu0 %v1599, %s1605
        %v1607 = vpop.permute.xlu0 %1606
        %v1608 = vlaneseq
        %v1609 = vshrl.u32 %v1608, 7
        %v1610 = vsub.s32 0, %v1609
        %v1611 = vrot.slane %v1154, %v1610
        %s1613 = sor.u32 256, 2
        %1614 = vbcast.lane.b32.xlu0 %v1611, %s1613
        %v1615 = vpop.permute.xlu0 %1614
        %s1617 = sor.u32 256, 10
        %1618 = vbcast.lane.b32.xlu0 %v1611, %s1617
        %v1619 = vpop.permute.xlu0 %1618
        %v1620 = vlaneseq
        %v1621 = vshrl.u32 %v1620, 7
        %v1622 = vsub.s32 1, %v1621
        %v1623 = vrot.slane %v1154, %v1622
        %s1625 = sor.u32 256, 2
        %1626 = vbcast.lane.b32.xlu0 %v1623, %s1625
        %v1627 = vpop.permute.xlu0 %1626
        %s1629 = sor.u32 256, 10
        %1630 = vbcast.lane.b32.xlu0 %v1623, %s1629
        %v1631 = vpop.permute.xlu0 %1630
        %v1632 = vlaneseq
        %v1633 = vshrl.u32 %v1632, 7
        %v1634 = vsub.s32 2, %v1633
        %v1635 = vrot.slane %v1154, %v1634
        %s1637 = sor.u32 256, 2
        %1638 = vbcast.lane.b32.xlu0 %v1635, %s1637
        %v1639 = vpop.permute.xlu0 %1638
        %s1641 = sor.u32 256, 10
        %1642 = vbcast.lane.b32.xlu0 %v1635, %s1641
        %v1643 = vpop.permute.xlu0 %1642
        %v1644 = vlaneseq
        %v1645 = vshrl.u32 %v1644, 7
        %v1646 = vsub.s32 3, %v1645
        %v1647 = vrot.slane %v1154, %v1646
        %s1649 = sor.u32 256, 2
        %1650 = vbcast.lane.b32.xlu0 %v1647, %s1649
        %v1651 = vpop.permute.xlu0 %1650
        %s1653 = sor.u32 256, 10
        %1654 = vbcast.lane.b32.xlu0 %v1647, %s1653
        %v1655 = vpop.permute.xlu0 %1654
        %v1656 = vlaneseq
        %v1657 = vshrl.u32 %v1656, 7
        %v1658 = vsub.s32 4, %v1657
        %v1659 = vrot.slane %v1154, %v1658
        %s1661 = sor.u32 256, 2
        %1662 = vbcast.lane.b32.xlu0 %v1659, %s1661
        %v1663 = vpop.permute.xlu0 %1662
        %s1665 = sor.u32 256, 10
        %1666 = vbcast.lane.b32.xlu0 %v1659, %s1665
        %v1667 = vpop.permute.xlu0 %1666
        %v1668 = vlaneseq
        %v1669 = vshrl.u32 %v1668, 7
        %v1670 = vsub.s32 5, %v1669
        %v1671 = vrot.slane %v1154, %v1670
        %s1673 = sor.u32 256, 2
        %1674 = vbcast.lane.b32.xlu0 %v1671, %s1673
        %v1675 = vpop.permute.xlu0 %1674
        %s1677 = sor.u32 256, 10
        %1678 = vbcast.lane.b32.xlu0 %v1671, %s1677
        %v1679 = vpop.permute.xlu0 %1678
        %v1680 = vlaneseq
        %v1681 = vshrl.u32 %v1680, 7
        %v1682 = vsub.s32 6, %v1681
        %v1683 = vrot.slane %v1154, %v1682
        %s1685 = sor.u32 256, 2
        %1686 = vbcast.lane.b32.xlu0 %v1683, %s1685
        %v1687 = vpop.permute.xlu0 %1686
        %s1689 = sor.u32 256, 10
        %1690 = vbcast.lane.b32.xlu0 %v1683, %s1689
        %v1691 = vpop.permute.xlu0 %1690
        %v1692 = vlaneseq
        %v1693 = vshrl.u32 %v1692, 7
        %v1694 = vsub.s32 7, %v1693
        %v1695 = vrot.slane %v1154, %v1694
        %s1697 = sor.u32 256, 2
        %1698 = vbcast.lane.b32.xlu0 %v1695, %s1697
        %v1699 = vpop.permute.xlu0 %1698
        %s1701 = sor.u32 256, 10
        %1702 = vbcast.lane.b32.xlu0 %v1695, %s1701
        %v1703 = vpop.permute.xlu0 %1702
        %v1704 = vmul.f32 %v1234, %v1155
        %v1705 = vmul.f32 %v1235, %v1156
        %v1708 = vcombine.high %v1704, %v1704
        %v1710 = vunpack.c.l.s4 1966171168
        %v1711 = vunpack.c.0.s8 %v1710
        %v1712 = vlaneseq
        %v1713 = vshrl.u32 %v1712, 7
        %v1714 = vsub.s32 %v1711, %v1713
        %v1715 = vrot.slane %v1704, %v1714
        %v1717 = vunpack.c.l.s4 1966171168
        %v1718 = vunpack.c.0.s8 %v1717
        %v1719 = vlaneseq
        %v1720 = vshrl.u32 %v1719, 7
        %v1721 = vsub.s32 %v1718, %v1720
        %v1722 = vrot.slane %v1708, %v1721
        %v1723 = vcombine.high %v1715, %v1715
        %v1724 = vcombine.high %v1722, %v1722
        %v1726 = vunpack.c.l.s4 1966171168
        %v1727 = vunpack.c.0.s8 %v1726
        %v1728 = vlaneseq
        %v1729 = vshrl.u32 %v1728, 7
        %v1730 = vsub.s32 %v1727, %v1729
        %v1731 = vrot.slane %v1715, %v1730
        %v1733 = vunpack.c.l.s4 1966171168
        %v1734 = vunpack.c.0.s8 %v1733
        %v1735 = vlaneseq
        %v1736 = vshrl.u32 %v1735, 7
        %v1737 = vsub.s32 %v1734, %v1736
        %v1738 = vrot.slane %v1722, %v1737
        %v1740 = vunpack.c.l.s4 1966171168
        %v1741 = vunpack.c.0.s8 %v1740
        %v1742 = vlaneseq
        %v1743 = vshrl.u32 %v1742, 7
        %v1744 = vsub.s32 %v1741, %v1743
        %v1745 = vrot.slane %v1723, %v1744
        %v1747 = vunpack.c.l.s4 1966171168
        %v1748 = vunpack.c.0.s8 %v1747
        %v1749 = vlaneseq
        %v1750 = vshrl.u32 %v1749, 7
        %v1751 = vsub.s32 %v1748, %v1750
        %v1752 = vrot.slane %v1724, %v1751
        %v1753 = vcombine.high %v1731, %v1731
        %v1754 = vcombine.high %v1738, %v1738
        %v1755 = vcombine.high %v1745, %v1745
        %v1756 = vcombine.high %v1752, %v1752
        %v1757 = vcombine.high %v1705, %v1705
        %v1759 = vunpack.c.l.s4 1966171168
        %v1760 = vunpack.c.0.s8 %v1759
        %v1761 = vlaneseq
        %v1762 = vshrl.u32 %v1761, 7
        %v1763 = vsub.s32 %v1760, %v1762
        %v1764 = vrot.slane %v1705, %v1763
        %v1766 = vunpack.c.l.s4 1966171168
        %v1767 = vunpack.c.0.s8 %v1766
        %v1768 = vlaneseq
        %v1769 = vshrl.u32 %v1768, 7
        %v1770 = vsub.s32 %v1767, %v1769
        %v1771 = vrot.slane %v1757, %v1770
        %v1772 = vcombine.high %v1764, %v1764
        %v1773 = vcombine.high %v1771, %v1771
        %v1775 = vunpack.c.l.s4 1966171168
        %v1776 = vunpack.c.0.s8 %v1775
        %v1777 = vlaneseq
        %v1778 = vshrl.u32 %v1777, 7
        %v1779 = vsub.s32 %v1776, %v1778
        %v1780 = vrot.slane %v1764, %v1779
        %v1782 = vunpack.c.l.s4 1966171168
        %v1783 = vunpack.c.0.s8 %v1782
        %v1784 = vlaneseq
        %v1785 = vshrl.u32 %v1784, 7
        %v1786 = vsub.s32 %v1783, %v1785
        %v1787 = vrot.slane %v1771, %v1786
        %v1789 = vunpack.c.l.s4 1966171168
        %v1790 = vunpack.c.0.s8 %v1789
        %v1791 = vlaneseq
        %v1792 = vshrl.u32 %v1791, 7
        %v1793 = vsub.s32 %v1790, %v1792
        %v1794 = vrot.slane %v1772, %v1793
        %v1796 = vunpack.c.l.s4 1966171168
        %v1797 = vunpack.c.0.s8 %v1796
        %v1798 = vlaneseq
        %v1799 = vshrl.u32 %v1798, 7
        %v1800 = vsub.s32 %v1797, %v1799
        %v1801 = vrot.slane %v1773, %v1800
        %v1802 = vcombine.high %v1780, %v1780
        %v1803 = vcombine.high %v1787, %v1787
        %v1804 = vcombine.high %v1794, %v1794
        %v1805 = vcombine.high %v1801, %v1801
        %v1806 = vlaneseq
        %v1807 = vshrl.u32 %v1806, 7
        %v1808 = vsub.s32 0, %v1807
        %v1809 = vrot.slane %v1731, %v1808
        %v1810 = vlaneseq
        %v1811 = vshrl.u32 %v1810, 7
        %v1812 = vsub.s32 0, %v1811
        %v1813 = vrot.slane %v1745, %v1812
        %v1814 = vlaneseq
        %v1815 = vshrl.u32 %v1814, 7
        %v1816 = vsub.s32 0, %v1815
        %v1817 = vrot.slane %v1753, %v1816
        %v1818 = vlaneseq
        %v1819 = vshrl.u32 %v1818, 7
        %v1820 = vsub.s32 0, %v1819
        %v1821 = vrot.slane %v1755, %v1820
        %v1822 = vlaneseq
        %v1823 = vshrl.u32 %v1822, 7
        %v1824 = vsub.s32 0, %v1823
        %v1825 = vrot.slane %v1738, %v1824
        %v1826 = vlaneseq
        %v1827 = vshrl.u32 %v1826, 7
        %v1828 = vsub.s32 0, %v1827
        %v1829 = vrot.slane %v1752, %v1828
        %v1830 = vlaneseq
        %v1831 = vshrl.u32 %v1830, 7
        %v1832 = vsub.s32 0, %v1831
        %v1833 = vrot.slane %v1754, %v1832
        %v1834 = vlaneseq
        %v1835 = vshrl.u32 %v1834, 7
        %v1836 = vsub.s32 0, %v1835
        %v1837 = vrot.slane %v1756, %v1836
        %v1838 = vlaneseq
        %v1839 = vshrl.u32 %v1838, 7
        %v1840 = vsub.s32 0, %v1839
        %v1841 = vrot.slane %v1780, %v1840
        %v1842 = vlaneseq
        %v1843 = vshrl.u32 %v1842, 7
        %v1844 = vsub.s32 0, %v1843
        %v1845 = vrot.slane %v1794, %v1844
        %v1846 = vlaneseq
        %v1847 = vshrl.u32 %v1846, 7
        %v1848 = vsub.s32 0, %v1847
        %v1849 = vrot.slane %v1802, %v1848
        %v1850 = vlaneseq
        %v1851 = vshrl.u32 %v1850, 7
        %v1852 = vsub.s32 0, %v1851
        %v1853 = vrot.slane %v1804, %v1852
        %v1854 = vlaneseq
        %v1855 = vshrl.u32 %v1854, 7
        %v1856 = vsub.s32 0, %v1855
        %v1857 = vrot.slane %v1787, %v1856
        %v1858 = vlaneseq
        %v1859 = vshrl.u32 %v1858, 7
        %v1860 = vsub.s32 0, %v1859
        %v1861 = vrot.slane %v1801, %v1860
        %v1862 = vlaneseq
        %v1863 = vshrl.u32 %v1862, 7
        %v1864 = vsub.s32 0, %v1863
        %v1865 = vrot.slane %v1803, %v1864
        %v1866 = vlaneseq
        %v1867 = vshrl.u32 %v1866, 7
        %v1868 = vsub.s32 0, %v1867
        %v1869 = vrot.slane %v1805, %v1868
        %v1886 = vmul.f32 %v1519, %v1809
        %v1887 = vmul.f32 %v1523, %v1809
        %v1888 = vmul.f32 %v1531, %v1813
        %v1889 = vmul.f32 %v1535, %v1813
        %v1890 = vmul.f32 %v1543, %v1817
        %v1891 = vmul.f32 %v1547, %v1817
        %v1892 = vmul.f32 %v1555, %v1821
        %v1893 = vmul.f32 %v1559, %v1821
        %v1894 = vmul.f32 %v1567, %v1825
        %v1895 = vmul.f32 %v1571, %v1825
        %v1896 = vmul.f32 %v1579, %v1829
        %v1897 = vmul.f32 %v1583, %v1829
        %v1898 = vmul.f32 %v1591, %v1833
        %v1899 = vmul.f32 %v1595, %v1833
        %v1900 = vmul.f32 %v1603, %v1837
        %v1901 = vmul.f32 %v1607, %v1837
        %v1902 = vmul.f32 %v1615, %v1841
        %v1903 = vmul.f32 %v1619, %v1841
        %v1904 = vmul.f32 %v1627, %v1845
        %v1905 = vmul.f32 %v1631, %v1845
        %v1906 = vmul.f32 %v1639, %v1849
        %v1907 = vmul.f32 %v1643, %v1849
        %v1908 = vmul.f32 %v1651, %v1853
        %v1909 = vmul.f32 %v1655, %v1853
        %v1910 = vmul.f32 %v1663, %v1857
        %v1911 = vmul.f32 %v1667, %v1857
        %v1912 = vmul.f32 %v1675, %v1861
        %v1913 = vmul.f32 %v1679, %v1861
        %v1914 = vmul.f32 %v1687, %v1865
        %v1915 = vmul.f32 %v1691, %v1865
        %v1916 = vmul.f32 %v1699, %v1869
        %v1917 = vmul.f32 %v1703, %v1869
        %v1918 = vmul.f32 %v1449, 0.0
        %v1919 = vmul.f32 %v1451, 0.0
        %v1920 = vmul.f32 %v1481, 0.0
        %v1921 = vmul.f32 %v1483, 0.0
        %v1922 = vadd.f32 %v1918, %v1886
        %v1923 = vadd.f32 %v1919, %v1887
        %v1924 = vadd.f32 %v1920, %v1902
        %v1925 = vadd.f32 %v1921, %v1903
        %v1926 = vmul.f32 %v1453, %v1922
        %v1927 = vmul.f32 %v1455, %v1923
        %v1928 = vmul.f32 %v1485, %v1924
        %v1929 = vmul.f32 %v1487, %v1925
        %v1930 = vadd.f32 %v1926, %v1888
        %v1931 = vadd.f32 %v1927, %v1889
        %v1932 = vadd.f32 %v1928, %v1904
        %v1933 = vadd.f32 %v1929, %v1905
        %v1934 = vmul.f32 %v1457, %v1930
        %v1935 = vmul.f32 %v1459, %v1931
        %v1936 = vmul.f32 %v1489, %v1932
        %v1937 = vmul.f32 %v1491, %v1933
        %v1938 = vadd.f32 %v1934, %v1890
        %v1939 = vadd.f32 %v1935, %v1891
        %v1940 = vadd.f32 %v1936, %v1906
        %v1941 = vadd.f32 %v1937, %v1907
        %v1942 = vmul.f32 %v1461, %v1938
        %v1943 = vmul.f32 %v1463, %v1939
        %v1944 = vmul.f32 %v1493, %v1940
        %v1945 = vmul.f32 %v1495, %v1941
        %v1946 = vadd.f32 %v1942, %v1892
        %v1947 = vadd.f32 %v1943, %v1893
        %v1948 = vadd.f32 %v1944, %v1908
        %v1949 = vadd.f32 %v1945, %v1909
        %v1950 = vmul.f32 %v1465, %v1946
        %v1951 = vmul.f32 %v1467, %v1947
        %v1952 = vmul.f32 %v1497, %v1948
        %v1953 = vmul.f32 %v1499, %v1949
        %v1954 = vadd.f32 %v1950, %v1894
        %v1955 = vadd.f32 %v1951, %v1895
        %v1956 = vadd.f32 %v1952, %v1910
        %v1957 = vadd.f32 %v1953, %v1911
        %v1958 = vmul.f32 %v1469, %v1954
        %v1959 = vmul.f32 %v1471, %v1955
        %v1960 = vmul.f32 %v1501, %v1956
        %v1961 = vmul.f32 %v1503, %v1957
        %v1962 = vadd.f32 %v1958, %v1896
        %v1963 = vadd.f32 %v1959, %v1897
        %v1964 = vadd.f32 %v1960, %v1912
        %v1965 = vadd.f32 %v1961, %v1913
        %v1966 = vmul.f32 %v1473, %v1962
        %v1967 = vmul.f32 %v1475, %v1963
        %v1968 = vmul.f32 %v1505, %v1964
        %v1969 = vmul.f32 %v1507, %v1965
        %v1970 = vadd.f32 %v1966, %v1898
        %v1971 = vadd.f32 %v1967, %v1899
        %v1972 = vadd.f32 %v1968, %v1914
        %v1973 = vadd.f32 %v1969, %v1915
        %v1974 = vmul.f32 %v1477, %v1970
        %v1975 = vmul.f32 %v1479, %v1971
        %v1976 = vmul.f32 %v1509, %v1972
        %v1977 = vmul.f32 %v1511, %v1973
        %v1978 = vadd.f32 %v1974, %v1900
        %v1979 = vadd.f32 %v1975, %v1901
        %v1980 = vadd.f32 %v1976, %v1916
        %v1981 = vadd.f32 %v1977, %v1917
        %s1983 = sor.u32 256, 18
        %1984 = vbcast.lane.b32.xlu0 %v1515, %s1983
        %v1985 = vpop.permute.xlu0 %1984
        %s1987 = sor.u32 256, 26
        %1988 = vbcast.lane.b32.xlu0 %v1515, %s1987
        %v1989 = vpop.permute.xlu0 %1988
        %s1991 = sor.u32 256, 18
        %1992 = vbcast.lane.b32.xlu0 %v1527, %s1991
        %v1993 = vpop.permute.xlu0 %1992
        %s1995 = sor.u32 256, 26
        %1996 = vbcast.lane.b32.xlu0 %v1527, %s1995
        %v1997 = vpop.permute.xlu0 %1996
        %s1999 = sor.u32 256, 18
        %2000 = vbcast.lane.b32.xlu0 %v1539, %s1999
        %v2001 = vpop.permute.xlu0 %2000
        %s2003 = sor.u32 256, 26
        %2004 = vbcast.lane.b32.xlu0 %v1539, %s2003
        %v2005 = vpop.permute.xlu0 %2004
        %s2007 = sor.u32 256, 18
        %2008 = vbcast.lane.b32.xlu0 %v1551, %s2007
        %v2009 = vpop.permute.xlu0 %2008
        %s2011 = sor.u32 256, 26
        %2012 = vbcast.lane.b32.xlu0 %v1551, %s2011
        %v2013 = vpop.permute.xlu0 %2012
        %s2015 = sor.u32 256, 18
        %2016 = vbcast.lane.b32.xlu0 %v1563, %s2015
        %v2017 = vpop.permute.xlu0 %2016
        %s2019 = sor.u32 256, 26
        %2020 = vbcast.lane.b32.xlu0 %v1563, %s2019
        %v2021 = vpop.permute.xlu0 %2020
        %s2023 = sor.u32 256, 18
        %2024 = vbcast.lane.b32.xlu0 %v1575, %s2023
        %v2025 = vpop.permute.xlu0 %2024
        %s2027 = sor.u32 256, 26
        %2028 = vbcast.lane.b32.xlu0 %v1575, %s2027
        %v2029 = vpop.permute.xlu0 %2028
        %s2031 = sor.u32 256, 18
        %2032 = vbcast.lane.b32.xlu0 %v1587, %s2031
        %v2033 = vpop.permute.xlu0 %2032
        %s2035 = sor.u32 256, 26
        %2036 = vbcast.lane.b32.xlu0 %v1587, %s2035
        %v2037 = vpop.permute.xlu0 %2036
        %s2039 = sor.u32 256, 18
        %2040 = vbcast.lane.b32.xlu0 %v1599, %s2039
        %v2041 = vpop.permute.xlu0 %2040
        %s2043 = sor.u32 256, 26
        %2044 = vbcast.lane.b32.xlu0 %v1599, %s2043
        %v2045 = vpop.permute.xlu0 %2044
        %s2047 = sor.u32 256, 18
        %2048 = vbcast.lane.b32.xlu0 %v1611, %s2047
        %v2049 = vpop.permute.xlu0 %2048
        %s2051 = sor.u32 256, 26
        %2052 = vbcast.lane.b32.xlu0 %v1611, %s2051
        %v2053 = vpop.permute.xlu0 %2052
        %s2055 = sor.u32 256, 18
        %2056 = vbcast.lane.b32.xlu0 %v1623, %s2055
        %v2057 = vpop.permute.xlu0 %2056
        %s2059 = sor.u32 256, 26
        %2060 = vbcast.lane.b32.xlu0 %v1623, %s2059
        %v2061 = vpop.permute.xlu0 %2060
        %s2063 = sor.u32 256, 18
        %2064 = vbcast.lane.b32.xlu0 %v1635, %s2063
        %v2065 = vpop.permute.xlu0 %2064
        %s2067 = sor.u32 256, 26
        %2068 = vbcast.lane.b32.xlu0 %v1635, %s2067
        %v2069 = vpop.permute.xlu0 %2068
        %s2071 = sor.u32 256, 18
        %2072 = vbcast.lane.b32.xlu0 %v1647, %s2071
        %v2073 = vpop.permute.xlu0 %2072
        %s2075 = sor.u32 256, 26
        %2076 = vbcast.lane.b32.xlu0 %v1647, %s2075
        %v2077 = vpop.permute.xlu0 %2076
        %s2079 = sor.u32 256, 18
        %2080 = vbcast.lane.b32.xlu0 %v1659, %s2079
        %v2081 = vpop.permute.xlu0 %2080
        %s2083 = sor.u32 256, 26
        %2084 = vbcast.lane.b32.xlu0 %v1659, %s2083
        %v2085 = vpop.permute.xlu0 %2084
        %s2087 = sor.u32 256, 18
        %2088 = vbcast.lane.b32.xlu0 %v1671, %s2087
        %v2089 = vpop.permute.xlu0 %2088
        %s2091 = sor.u32 256, 26
        %2092 = vbcast.lane.b32.xlu0 %v1671, %s2091
        %v2093 = vpop.permute.xlu0 %2092
        %s2095 = sor.u32 256, 18
        %2096 = vbcast.lane.b32.xlu0 %v1683, %s2095
        %v2097 = vpop.permute.xlu0 %2096
        %s2099 = sor.u32 256, 26
        %2100 = vbcast.lane.b32.xlu0 %v1683, %s2099
        %v2101 = vpop.permute.xlu0 %2100
        %s2103 = sor.u32 256, 18
        %2104 = vbcast.lane.b32.xlu0 %v1695, %s2103
        %v2105 = vpop.permute.xlu0 %2104
        %s2107 = sor.u32 256, 26
        %2108 = vbcast.lane.b32.xlu0 %v1695, %s2107
        %v2109 = vpop.permute.xlu0 %2108
        %v2110 = vmul.f32 %v1922, %v1985
        %v2111 = vmul.f32 %v1923, %v1989
        %v2112 = vmul.f32 %v1930, %v1993
        %v2113 = vmul.f32 %v1931, %v1997
        %v2114 = vmul.f32 %v1938, %v2001
        %v2115 = vmul.f32 %v1939, %v2005
        %v2116 = vmul.f32 %v1946, %v2009
        %v2117 = vmul.f32 %v1947, %v2013
        %v2118 = vmul.f32 %v1954, %v2017
        %v2119 = vmul.f32 %v1955, %v2021
        %v2120 = vmul.f32 %v1962, %v2025
        %v2121 = vmul.f32 %v1963, %v2029
        %v2122 = vmul.f32 %v1970, %v2033
        %v2123 = vmul.f32 %v1971, %v2037
        %v2124 = vmul.f32 %v1978, %v2041
        %v2125 = vmul.f32 %v1979, %v2045
        %v2126 = vmul.f32 %v1924, %v2049
        %v2127 = vmul.f32 %v1925, %v2053
        %v2128 = vmul.f32 %v1932, %v2057
        %v2129 = vmul.f32 %v1933, %v2061
        %v2130 = vmul.f32 %v1940, %v2065
        %v2131 = vmul.f32 %v1941, %v2069
        %v2132 = vmul.f32 %v1948, %v2073
        %v2133 = vmul.f32 %v1949, %v2077
        %v2134 = vmul.f32 %v1956, %v2081
        %v2135 = vmul.f32 %v1957, %v2085
        %v2136 = vmul.f32 %v1964, %v2089
        %v2137 = vmul.f32 %v1965, %v2093
        %v2138 = vmul.f32 %v1972, %v2097
        %v2139 = vmul.f32 %v1973, %v2101
        %v2140 = vmul.f32 %v1980, %v2105
        %v2141 = vmul.f32 %v1981, %v2109
        %v2142 = vadd.f32 %v2110, %v2111
        %v2143 = vrot.slane %v2142, 4
        %v2144 = vadd.f32 %v2142, %v2143
        %v2145 = vrot.slane %v2144, 2
        %v2146 = vadd.f32 %v2144, %v2145
        %v2147 = vrot.slane %v2146, 1
        %v2148 = vadd.f32 %v2146, %v2147
        %v2149 = vadd.f32 %v2112, %v2113
        %v2150 = vrot.slane %v2149, 4
        %v2151 = vadd.f32 %v2149, %v2150
        %v2152 = vrot.slane %v2151, 2
        %v2153 = vadd.f32 %v2151, %v2152
        %v2154 = vrot.slane %v2153, 1
        %v2155 = vadd.f32 %v2153, %v2154
        %v2156 = vadd.f32 %v2114, %v2115
        %v2157 = vrot.slane %v2156, 4
        %v2158 = vadd.f32 %v2156, %v2157
        %v2159 = vrot.slane %v2158, 2
        %v2160 = vadd.f32 %v2158, %v2159
        %v2161 = vrot.slane %v2160, 1
        %v2162 = vadd.f32 %v2160, %v2161
        %v2163 = vadd.f32 %v2116, %v2117
        %v2164 = vrot.slane %v2163, 4
        %v2165 = vadd.f32 %v2163, %v2164
        %v2166 = vrot.slane %v2165, 2
        %v2167 = vadd.f32 %v2165, %v2166
        %v2168 = vrot.slane %v2167, 1
        %v2169 = vadd.f32 %v2167, %v2168
        %v2170 = vadd.f32 %v2118, %v2119
        %v2171 = vrot.slane %v2170, 4
        %v2172 = vadd.f32 %v2170, %v2171
        %v2173 = vrot.slane %v2172, 2
        %v2174 = vadd.f32 %v2172, %v2173
        %v2175 = vrot.slane %v2174, 1
        %v2176 = vadd.f32 %v2174, %v2175
        %v2177 = vadd.f32 %v2120, %v2121
        %v2178 = vrot.slane %v2177, 4
        %v2179 = vadd.f32 %v2177, %v2178
        %v2180 = vrot.slane %v2179, 2
        %v2181 = vadd.f32 %v2179, %v2180
        %v2182 = vrot.slane %v2181, 1
        %v2183 = vadd.f32 %v2181, %v2182
        %v2184 = vadd.f32 %v2122, %v2123
        %v2185 = vrot.slane %v2184, 4
        %v2186 = vadd.f32 %v2184, %v2185
        %v2187 = vrot.slane %v2186, 2
        %v2188 = vadd.f32 %v2186, %v2187
        %v2189 = vrot.slane %v2188, 1
        %v2190 = vadd.f32 %v2188, %v2189
        %v2191 = vadd.f32 %v2124, %v2125
        %v2192 = vrot.slane %v2191, 4
        %v2193 = vadd.f32 %v2191, %v2192
        %v2194 = vrot.slane %v2193, 2
        %v2195 = vadd.f32 %v2193, %v2194
        %v2196 = vrot.slane %v2195, 1
        %v2197 = vadd.f32 %v2195, %v2196
        %v2198 = vadd.f32 %v2126, %v2127
        %v2199 = vrot.slane %v2198, 4
        %v2200 = vadd.f32 %v2198, %v2199
        %v2201 = vrot.slane %v2200, 2
        %v2202 = vadd.f32 %v2200, %v2201
        %v2203 = vrot.slane %v2202, 1
        %v2204 = vadd.f32 %v2202, %v2203
        %v2205 = vadd.f32 %v2128, %v2129
        %v2206 = vrot.slane %v2205, 4
        %v2207 = vadd.f32 %v2205, %v2206
        %v2208 = vrot.slane %v2207, 2
        %v2209 = vadd.f32 %v2207, %v2208
        %v2210 = vrot.slane %v2209, 1
        %v2211 = vadd.f32 %v2209, %v2210
        %v2212 = vadd.f32 %v2130, %v2131
        %v2213 = vrot.slane %v2212, 4
        %v2214 = vadd.f32 %v2212, %v2213
        %v2215 = vrot.slane %v2214, 2
        %v2216 = vadd.f32 %v2214, %v2215
        %v2217 = vrot.slane %v2216, 1
        %v2218 = vadd.f32 %v2216, %v2217
        %v2219 = vadd.f32 %v2132, %v2133
        %v2220 = vrot.slane %v2219, 4
        %v2221 = vadd.f32 %v2219, %v2220
        %v2222 = vrot.slane %v2221, 2
        %v2223 = vadd.f32 %v2221, %v2222
        %v2224 = vrot.slane %v2223, 1
        %v2225 = vadd.f32 %v2223, %v2224
        %v2226 = vadd.f32 %v2134, %v2135
        %v2227 = vrot.slane %v2226, 4
        %v2228 = vadd.f32 %v2226, %v2227
        %v2229 = vrot.slane %v2228, 2
        %v2230 = vadd.f32 %v2228, %v2229
        %v2231 = vrot.slane %v2230, 1
        %v2232 = vadd.f32 %v2230, %v2231
        %v2233 = vadd.f32 %v2136, %v2137
        %v2234 = vrot.slane %v2233, 4
        %v2235 = vadd.f32 %v2233, %v2234
        %v2236 = vrot.slane %v2235, 2
        %v2237 = vadd.f32 %v2235, %v2236
        %v2238 = vrot.slane %v2237, 1
        %v2239 = vadd.f32 %v2237, %v2238
        %v2240 = vadd.f32 %v2138, %v2139
        %v2241 = vrot.slane %v2240, 4
        %v2242 = vadd.f32 %v2240, %v2241
        %v2243 = vrot.slane %v2242, 2
        %v2244 = vadd.f32 %v2242, %v2243
        %v2245 = vrot.slane %v2244, 1
        %v2246 = vadd.f32 %v2244, %v2245
        %v2247 = vadd.f32 %v2140, %v2141
        %v2248 = vrot.slane %v2247, 4
        %v2249 = vadd.f32 %v2247, %v2248
        %v2250 = vrot.slane %v2249, 2
        %v2251 = vadd.f32 %v2249, %v2250
        %v2252 = vrot.slane %v2251, 1
        %v2253 = vadd.f32 %v2251, %v2252
        %v2255 = vlaneseq
        %v2256 = vshrl.u32 %v2255, 7
        %v2257 = vsub.s32 0, %v2256
        %v2258 = vrot.slane %v1152, %v2257
        %v2260 = vmul.f32 %v2258, %v1155
        %v2261 = vmul.f32 %v2258, %v1156
        %v2264 = vrot.slane %v2260, 1
        %v2265 = vrot.slane %v2260, 2
        %v2266 = vrot.slane %v2260, 3
        %v2267 = vrot.slane %v2260, 4
        %v2268 = vrot.slane %v2260, 5
        %v2269 = vrot.slane %v2260, 6
        %v2270 = vrot.slane %v2260, 7
        %v2271 = vrot.slane %v2261, 1
        %v2272 = vrot.slane %v2261, 2
        %v2273 = vrot.slane %v2261, 3
        %v2274 = vrot.slane %v2261, 4
        %v2275 = vrot.slane %v2261, 5
        %v2276 = vrot.slane %v2261, 6
        %v2277 = vrot.slane %v2261, 7
        %v2294 = vadd.f32 %v2148, %v2260
        %v2295 = vadd.f32 %v2155, %v2264
        %v2296 = vadd.f32 %v2162, %v2265
        %v2297 = vadd.f32 %v2169, %v2266
        %v2298 = vadd.f32 %v2176, %v2267
        %v2299 = vadd.f32 %v2183, %v2268
        %v2300 = vadd.f32 %v2190, %v2269
        %v2301 = vadd.f32 %v2197, %v2270
        %v2302 = vadd.f32 %v2204, %v2261
        %v2303 = vadd.f32 %v2211, %v2271
        %v2304 = vadd.f32 %v2218, %v2272
        %v2305 = vadd.f32 %v2225, %v2273
        %v2306 = vadd.f32 %v2232, %v2274
        %v2307 = vadd.f32 %v2239, %v2275
        %v2308 = vadd.f32 %v2246, %v2276
        %v2309 = vadd.f32 %v2253, %v2277
        %v2326 = vrot.slane %v2295, 7
        %vm2327 = vcmask 1041409
        %v2328 = vsel %vm2327, %v2326, %v2294
        %v2329 = vrot.slane %v2296, 6
        %vm2330 = vcmask 1042434
        %v2331 = vsel %vm2330, %v2329, %v2328
        %v2332 = vrot.slane %v2297, 5
        %vm2333 = vcmask 1043459
        %v2334 = vsel %vm2333, %v2332, %v2331
        %v2335 = vrot.slane %v2298, 4
        %vm2336 = vcmask 1044484
        %v2337 = vsel %vm2336, %v2335, %v2334
        %v2338 = vrot.slane %v2299, 3
        %vm2339 = vcmask 1045509
        %v2340 = vsel %vm2339, %v2338, %v2337
        %v2341 = vrot.slane %v2300, 2
        %vm2342 = vcmask 1046534
        %v2343 = vsel %vm2342, %v2341, %v2340
        %v2344 = vrot.slane %v2301, 1
        %vm2345 = vcmask 1047559
        %v2346 = vsel %vm2345, %v2344, %v2343
        %v2347 = vrot.slane %v2303, 7
        %v2348 = vsel %vm2327, %v2347, %v2302
        %v2349 = vrot.slane %v2304, 6
        %v2350 = vsel %vm2330, %v2349, %v2348
        %v2351 = vrot.slane %v2305, 5
        %v2352 = vsel %vm2333, %v2351, %v2350
        %v2353 = vrot.slane %v2306, 4
        %v2354 = vsel %vm2336, %v2353, %v2352
        %v2355 = vrot.slane %v2307, 3
        %v2356 = vsel %vm2339, %v2355, %v2354
        %v2357 = vrot.slane %v2308, 2
        %v2358 = vsel %vm2342, %v2357, %v2356
        %v2359 = vrot.slane %v2309, 1
        %v2360 = vsel %vm2345, %v2359, %v2358
        %2363 = vst [vmem:[#allocation6] sm:$0xff] %v2346
        %2364 = vst [vmem:[#allocation6 + $0x8] sm:$0xff] %v2360
        %v2365 = vld [vmem:[#allocation6] sm:$0xff]
        %v2366 = vld [vmem:[#allocation6 + $0x8] sm:$0xff]
        %v2367 = vxor.u32 %v970, 2147483648
        %v2368 = vxor.u32 %v974, 2147483648
        %v2369 = vmul.f32 %v2367, 1.442695
        %v2370 = vpow.pop %v2369
        %v2371 = vmul.f32 %v2368, 1.442695
        %v2372 = vpow.pop %v2371
        %v2373 = vadd.f32 %v2370, 1.0
        %v2374 = vadd.f32 %v2372, 1.0
        %v2375 = vrcp.pop %v2373
        %v2376 = vmul.f32 1.0, %v2375
        %v2377 = vrcp.pop %v2374
        %v2378 = vmul.f32 1.0, %v2377
        %v2379 = vmul.f32 %v970, %v2376
        %v2380 = vmul.f32 %v974, %v2378
        %v2381 = vmul.f32 %v2365, %v2379
        %v2382 = vmul.f32 %v2366, %v2380
        %v2383 = vpack.c.bf16 %v2382, %v2381
        %v2384 = vld [vmem:[%s672] sm:$0xf]
        %v2385 = vld [vmem:[%s672 + $0x4] sm:$0xf]
        %v2386 = vld [vmem:[%s672 + $0x8] sm:$0xf]
        %v2387 = vld [vmem:[%s672 + $0xc] sm:$0xf]
        %v2388 = vld [vmem:[%s672 + $0x10] sm:$0xf]
        %v2389 = vld [vmem:[%s672 + $0x14] sm:$0xf]
        %v2390 = vld [vmem:[%s672 + $0x18] sm:$0xf]
        %v2391 = vld [vmem:[%s672 + $0x1c] sm:$0xf]
        %v2392 = vld [vmem:[%s672 + $0x20] sm:$0xf]
        %v2393 = vld [vmem:[%s672 + $0x24] sm:$0xf]
        %v2394 = vld [vmem:[%s672 + $0x28] sm:$0xf]
        %v2395 = vld [vmem:[%s672 + $0x2c] sm:$0xf]
        %v2396 = vld [vmem:[%s672 + $0x30] sm:$0xf]
        %v2397 = vld [vmem:[%s672 + $0x34] sm:$0xf]
        %v2398 = vld [vmem:[%s672 + $0x38] sm:$0xf]
        %v2399 = vld [vmem:[%s672 + $0x3c] sm:$0xf]
        %v2416 = vunpack.c.l.b16 %v2384
        %v2417 = vunpack.c.l.b16 %v2385
        %v2418 = vunpack.c.l.b16 %v2386
        %v2419 = vunpack.c.l.b16 %v2387
        %v2420 = vunpack.c.l.b16 %v2388
        %v2421 = vunpack.c.l.b16 %v2389
        %v2422 = vunpack.c.l.b16 %v2390
        %v2423 = vunpack.c.l.b16 %v2391
        %v2424 = vunpack.c.l.b16 %v2392
        %v2425 = vunpack.c.l.b16 %v2393
        %v2426 = vunpack.c.l.b16 %v2394
        %v2427 = vunpack.c.l.b16 %v2395
        %v2428 = vunpack.c.l.b16 %v2396
        %v2429 = vunpack.c.l.b16 %v2397
        %v2430 = vunpack.c.l.b16 %v2398
        %v2431 = vunpack.c.l.b16 %v2399
        %v2432 = vpack.c.b16 %v2417, %v2416
        %v2433 = vpack.c.b16 %v2419, %v2418
        %v2434 = vpack.c.b16 %v2421, %v2420
        %v2435 = vpack.c.b16 %v2423, %v2422
        %v2436 = vpack.c.b16 %v2425, %v2424
        %v2437 = vpack.c.b16 %v2427, %v2426
        %v2438 = vpack.c.b16 %v2429, %v2428
        %v2439 = vpack.c.b16 %v2431, %v2430
        %2448 = vmatprep.subr.bf16.mxu0 0
        %2449 = vmatpush1.bf16.msra.mxu0 %v2439
        %2450 = vmatprep.subr.bf16.mxu0 0
        %2451 = vmatpush1.bf16.msra.mxu0 %v2438
        %2452 = vmatprep.subr.bf16.mxu0 0
        %2453 = vmatpush1.bf16.msra.mxu0 %v2437
        %2454 = vmatprep.subr.bf16.mxu0 0
        %2455 = vmatpush1.bf16.msra.mxu0 %v2436
        %2456 = vmatprep.subr.bf16.mxu0 0
        %2457 = vmatpush1.bf16.msra.mxu0 %v2435
        %2458 = vmatprep.subr.bf16.mxu0 0
        %2459 = vmatpush1.bf16.msra.mxu0 %v2434
        %2460 = vmatprep.subr.bf16.mxu0 0
        %2461 = vmatpush1.bf16.msra.mxu0 %v2433
        %2462 = vmatprep.subr.bf16.mxu0 0
        %2463 = vmatpush1.bf16.msra.mxu0 %v2432
        %2464 = vmatprep.subr.bf16.mxu0 0
        %2465 = vmatpush2.bf16.msra.mxu0 0
        %2466 = vmatprep.subr.bf16.mxu0 0
        %2467 = vmatpush2.bf16.msra.mxu0 0
        %2468 = vmatprep.subr.bf16.mxu0 0
        %2469 = vmatpush2.bf16.msra.mxu0 0
        %2470 = vmatprep.subr.bf16.mxu0 0
        %2471 = vmatpush2.bf16.msra.mxu0 0
        %2472 = vmatprep.subr.bf16.mxu0 0
        %2473 = vmatpush2.bf16.msra.mxu0 0
        %2474 = vmatprep.subr.bf16.mxu0 0
        %2475 = vmatpush2.bf16.msra.mxu0 0
        %2476 = vmatprep.subr.bf16.mxu0 0
        %2477 = vmatpush2.bf16.msra.mxu0 0
        %2478 = vmatprep.subr.bf16.mxu0 0
        %2479 = vmatpush2.bf16.msra.mxu0 0
        %2480 = vmatprep.mubr.bf16.mxu0 0
        %2481 = vmatmul.mubr.bf16.gmra.mxu0 %v2383
        %v2482 = vpop.f32.mrf.mxu0
        %v2483 = vadd.f32 0.0, %v2482
        %v2484 = vpop.f32.mrf.mxu0
        %v2485 = vpop.f32.mrf.mxu0
        %v2486 = vadd.f32 0.0, %v2485
        %v2487 = vpop.f32.mrf.mxu0
        %2488 = vdwg.mxu0
        %2489 = vst [vmem:[#allocation2] sm:$0xff] %v2483
        %2490 = vst [vmem:[#allocation2 + $0x8] sm:$0xff] %v2486
        %p2491 = scmp.eq.s32.totalorder %s41, 1
        // Predicated region
        $region109: #{tpu_custom_call.1} parent=75 // pred_check
          %p2492 = pneg %p2491
        $region110: #{tpu_custom_call.1} parent=75 // pred_check_branch
          %2494 = sbr.rel (%p2492) target = $region112
        $region111: #{tpu_custom_call.1} parent=75 // pred_region
          %v2495 = vadd.f32 %v2483, %v785
          %v2496 = vadd.f32 %v2486, %v786
          %v2497 = vld [vmem:[%s12] sm:$0x1]
          %v2498 = vld [vmem:[%s13] sm:$0x1]
          %2499 = vadd.xlane.f32.xlu0 %v2495
          %v2500 = vpop.xlane.xlu0 %2499
          %2501 = vadd.xlane.f32.xlu0 %v2496
          %v2502 = vpop.xlane.xlu0 %2501
          %v2503 = vmul.f32 %v2500, %v795
          %v2504 = vmul.f32 %v2502, %v795
          %v2505 = vmul.f32 %v2495, %v2495
          %v2506 = vmul.f32 %v2496, %v2496
          %2507 = vadd.xlane.f32.xlu0 %v2505
          %v2508 = vpop.xlane.xlu0 %2507
          %2509 = vadd.xlane.f32.xlu0 %v2506
          %v2510 = vpop.xlane.xlu0 %2509
          %v2511 = vmul.f32 %v2508, %v795
          %v2512 = vmul.f32 %v2510, %v795
          %v2513 = vmul.f32 %v2503, %v2503
          %v2514 = vmul.f32 %v2504, %v2504
          %v2515 = vsub.f32 %v2511, %v2513
          %v2516 = vsub.f32 %v2512, %v2514
          %v2517 = vmax.f32 %v2515, 0.0
          %v2518 = vmax.f32 %v2516, 0.0
          %v2519 = vsub.f32 %v2495, %v2503
          %v2520 = vsub.f32 %v2496, %v2504
          %v2521 = vadd.f32 %v2517, 1e-05
          %v2522 = vadd.f32 %v2518, 1e-05
          %v2523 = vrsqrt.pop %v2521
          %v2524 = vrsqrt.pop %v2522
          %v2525 = vmul.f32 %v2519, %v2523
          %v2526 = vmul.f32 %v2520, %v2524
          %v2528 = vlaneseq
          %v2529 = vshrl.u32 %v2528, 7
          %v2530 = vsub.s32 0, %v2529
          %v2531 = vrot.slane %v2497, %v2530
          %v2533 = vmul.f32 %v2525, %v2531
          %v2534 = vmul.f32 %v2526, %v2531
          %v2536 = vlaneseq
          %v2537 = vshrl.u32 %v2536, 7
          %v2538 = vsub.s32 0, %v2537
          %v2539 = vrot.slane %v2498, %v2538
          %v2541 = vadd.f32 %v2533, %v2539
          %v2542 = vadd.f32 %v2534, %v2539
          %2543 = vst [vmem:[#allocation19] sm:$0xff] %v2541
          %2544 = vst [vmem:[#allocation19 + $0x8] sm:$0xff] %v2542
        $region112: #{tpu_custom_call.1} parent=75 // pred_fallthru
          _
        // Predicated region
        $region113: #{tpu_custom_call.1} parent=75 // pred_check
          %p2545 = pneg %p420
        $region114: #{tpu_custom_call.1} parent=75 // pred_check_branch
          %2547 = sbr.rel (%p2545) target = $region116
        $region115: #{tpu_custom_call.1} parent=75 // pred_region
          %s2548 = smul.u32 2, %s40
          %s2550 = ssub.s32 256, 256
          %2551 = vsyncadd [#allocation9], %s2550
          %s2552 = smul.addr %s2548, 128
          %s2553 = scalar_lea.hbm %s14, %s2552
          %s2554 = sshll.u32 [#allocation19], 4
          %s2555 = int_to_ptr.vmem [resolvable:$true] %s2554
          %2560 = dma.vmem_to_hbm [thread:$0]  %s2555, 256, %s2553, [#allocation9], 128, 128, 8
        $region116: #{tpu_custom_call.1} parent=75 // pred_fallthru
          _
        // Predicated region
        $region117: #{tpu_custom_call.1} parent=75 // pred_check
          %p2561 = pneg %p420
        $region118: #{tpu_custom_call.1} parent=75 // pred_check_branch
          %2563 = sbr.rel (%p2561) target = $region120
        $region119: #{tpu_custom_call.1} parent=75 // pred_region
          %2564 = dma.done [#allocation9], 256
        $region120: #{tpu_custom_call.1} parent=75 // pred_fallthru
          _
      $region76: #{tpu_custom_call.1} parent=5 // pred_fallthru
        _
      %p2565 = scmp.le.s32.totalorder 2, %s31
      // Predicated region
      $region121: #{tpu_custom_call.1} parent=5 // pred_check
        %p2566 = pneg %p2565
      $region122: #{tpu_custom_call.1} parent=5 // pred_check_branch
        %2568 = sbr.rel (%p2566) target = $region124
      $region123: #{tpu_custom_call.1} parent=5 // pred_region
        %s2569 = ssub.s32 %s31, 2
      $region124: #{tpu_custom_call.1} parent=5 // pred_fallthru
        _
    $region6: #{tpu_custom_call.1} parent=1 // loop_footer
      %s35 = sadd.s32 1, %s31
    $region7: #{tpu_custom_call.1} parent=1 // loop_footer_branch
      %30 = sbr.rel target = $region3
    $region8: #{tpu_custom_call.1} parent=1 // loop_exit
      _
    %2570 = vsyncpa [#allocation8], 1
    %s2571 = scalar_lea.sflag [#allocation8], 1
    %2572 = vsyncpa %s2571, 1
    %2573 = vsyncpa [#allocation11], 1
    %s2574 = scalar_lea.sflag [#allocation11], 1
    %2575 = vsyncpa %s2574, 1
    %2576 = vsyncpa [#allocation14], 1
    %s2577 = scalar_lea.sflag [#allocation14], 1
    %2578 = vsyncpa %s2577, 1
    %2579 = vsyncpa [#allocation17], 1
    %s2580 = scalar_lea.sflag [#allocation17], 1
    %2581 = vsyncpa %s2580, 1
    %2582 = vsyncpa [#allocation9], 1
    %s2583 = scalar_lea.sflag [#allocation9], 1
    %2584 = vsyncpa %s2583, 1

</llo_original>
